<compile_context>
chip_gen: v5e
topology: v5e:2x2
jax: 0.10.0
libtpu: 0.0.40
codegen_flags: <defaults>
</compile_context>

<pallas_src>
import functools
import math

import jax
import jax.numpy as jnp
from jax.experimental import pallas as pl
from jax.experimental.pallas import tpu as pltpu


_VMEM_LIMIT = 32 * 1024 * 1024  # safe on v5e/v6e/v7x


# ----------------------------- in-kernel helpers -----------------------------

def _leaky_relu(x):
    return jnp.where(x >= 0, x, 0.01 * x)


def _gelu(x):  # exact erf GELU (matches torch F.gelu default)
    return 0.5 * x * (1.0 + jax.lax.erf(x * (1.0 / math.sqrt(2.0))))


def _layer_norm(x, g, b, eps=1e-5):
    mu = jnp.mean(x, axis=-1, keepdims=True)
    var = jnp.mean((x - mu) ** 2, axis=-1, keepdims=True)
    return (x - mu) * jax.lax.rsqrt(var + eps) * g + b


def _mm(a, b):
    """a @ b on the MXU: bf16 operands, f32 accumulation."""
    return jnp.dot(a.astype(jnp.bfloat16), b.astype(jnp.bfloat16),
                   preferred_element_type=jnp.float32)


def _mm_t(a, b):
    """a @ b.T (contract last dims of both), bf16 operands, f32 accumulation."""
    return jax.lax.dot_general(a.astype(jnp.bfloat16), b.astype(jnp.bfloat16),
                               (((1,), (1,)), ((), ())),
                               preferred_element_type=jnp.float32)


def _full_spec(arr):
    """Whole-array block (weights): constant index map, not re-fetched per step."""
    if arr.ndim == 2:
        return pl.BlockSpec(arr.shape, lambda i: (0, 0))
    return pl.BlockSpec(arr.shape, lambda i: (0, 0, 0))


# --------------------- fused masked-mean + BeamNet kernel ---------------------

def _beam_kernel(x_ref, m_ref, w0_ref, b0_ref, blkw_ref, blkb_ref, blkg_ref,
                 blkbeta_ref, wout_ref, bout_ref, wmean_ref, pred_ref,
                 *, depth, min_sigma):
    x = x_ref[...]                                   # (tn, 3, W) f32
    m = m_ref[...]                                   # (tn, 1, W) f32 (broadcast in-reg)
    num = jnp.sum(x * m, axis=2)                     # (tn, 3)
    den = jnp.sum(m, axis=2) + 0.001                 # (tn, 1)
    w = num / den                                    # weighted_input
    wmean_ref[...] = w

    # TODO(synk): BeamNetDirect source is not provided; implemented as a LeakyReLU +
    # LayerNorm residual MLP with a 5-column head applying the constructor flags
    # (no_sigmoid mean, linear |sigma| + min_sigma) as best effort.
    h = _leaky_relu(_mm(w, w0_ref[...]) + b0_ref[...])           # (tn, H)
    for i in range(depth - 1):                                   # residual blocks
        hn = _layer_norm(h, blkg_ref[i], blkbeta_ref[i])
        h = h + _leaky_relu(_mm(hn, blkw_ref[i]) + blkb_ref[i])
    raw = _mm(h, wout_ref[...]) + bout_ref[...]                  # (tn, 5)

    # head post-processing in-kernel: col 0 = theta (no_sigmoid), cols 1..2 = |sigma|+min.
    col = jax.lax.broadcasted_iota(jnp.int32, raw.shape, 1)
    pred_ref[...] = jnp.where((col >= 1) & (col <= 2), jnp.abs(raw) + min_sigma, raw)


def masked_mean_beam(bp, x, seg_mask, *, depth, min_sigma=1e-4, row_tile=256):
    N, C, W = x.shape
    n_out = bp["w_out"].shape[1]
    tn = N if N <= row_tile else row_tile
    in_specs = [pl.BlockSpec((tn, C, W), lambda i: (i, 0, 0)),
                pl.BlockSpec((tn, 1, W), lambda i: (i, 0, 0)),
                _full_spec(bp["w0"]), _full_spec(bp["b0"]),
                _full_spec(bp["blk_w"]), _full_spec(bp["blk_b"]),
                _full_spec(bp["blk_g"]), _full_spec(bp["blk_beta"]),
                _full_spec(bp["w_out"]), _full_spec(bp["b_out"])]
    out_shape = (jax.ShapeDtypeStruct((N, C), jnp.float32),
                 jax.ShapeDtypeStruct((N, n_out), jnp.float32))
    out_specs = (pl.BlockSpec((tn, C), lambda i: (i, 0)),
                 pl.BlockSpec((tn, n_out), lambda i: (i, 0)))
    return pl.pallas_call(
        functools.partial(_beam_kernel, depth=depth, min_sigma=min_sigma),
        out_shape=out_shape,
        grid=(pl.cdiv(N, tn),),
        in_specs=in_specs,
        out_specs=out_specs,
        compiler_params=pltpu.CompilerParams(
            dimension_semantics=("parallel",), vmem_limit_bytes=_VMEM_LIMIT),
    )(x, seg_mask.astype(jnp.float32), bp["w0"], bp["b0"], bp["blk_w"], bp["blk_b"],
      bp["blk_g"], bp["blk_beta"], bp["w_out"], bp["b_out"])


# ----------------------- fused transformer encoder layer -----------------------

def _encoder_layer_kernel(x_ref, wq_ref, wk_ref, wv_ref, bq_ref, bk_ref, bv_ref,
                          wo_ref, bo_ref, ln1g_ref, ln1b_ref,
                          wf1_ref, bf1_ref, wf2_ref, bf2_ref,
                          ln2g_ref, ln2b_ref, o_ref, *, n_heads, scale):
    x = x_ref[0]                                      # (S, D) f32
    xb = x.astype(jnp.bfloat16)

    # ---- multi-head self attention; out-projection folded per head (no concat) ----
    attn = jnp.zeros(x.shape, jnp.float32) + bo_ref[...]
    for h in range(n_heads):
        q = _mm(xb, wq_ref[h]) + bq_ref[h]            # (S, hd)
        k = _mm(xb, wk_ref[h]) + bk_ref[h]
        v = _mm(xb, wv_ref[h]) + bv_ref[h]
        s = _mm_t(q, k) * scale                       # (S, S)
        s = s - jnp.max(s, axis=-1, keepdims=True)
        p = jnp.exp(s)
        p = p * pl.reciprocal(jnp.sum(p, axis=-1, keepdims=True), approx=True)
        o_h = _mm(p, v)                               # (S, hd)
        attn = attn + _mm(o_h, wo_ref[h])             # (S, D)

    x1 = _layer_norm(x + attn, ln1g_ref[...], ln1b_ref[...])      # post-norm

    # ---- feed-forward ----
    ff = _gelu(_mm(x1, wf1_ref[...]) + bf1_ref[...])
    ff = _mm(ff, wf2_ref[...]) + bf2_ref[...]
    x2 = _layer_norm(x1 + ff, ln2g_ref[...], ln2b_ref[...])
    o_ref[0] = x2


def encoder_layer(h, lp, *, n_heads):
    B2, S, D = h.shape
    hd = D // n_heads
    seq_spec = pl.BlockSpec((1, S, D), lambda b: (b, 0, 0))
    operands = [h, lp["wq"], lp["wk"], lp["wv"], lp["bq"], lp["bk"], lp["bv"],
                lp["wo"], lp["bo"], lp["ln1_g"], lp["ln1_b"],
                lp["wf1"], lp["bf1"], lp["wf2"], lp["bf2"], lp["ln2_g"], lp["ln2_b"]]
    in_specs = [seq_spec] + [_full_spec(a) for a in operands[1:]]
    return pl.pallas_call(
        functools.partial(_encoder_layer_kernel, n_heads=n_heads,
                          scale=1.0 / math.sqrt(hd)),
        out_shape=jax.ShapeDtypeStruct((B2, S, D), jnp.float32),
        grid=(B2,),
        in_specs=in_specs,
        out_specs=seq_spec,
        compiler_params=pltpu.CompilerParams(
            dimension_semantics=("parallel",), vmem_limit_bytes=_VMEM_LIMIT),
    )(*operands)


# ----------------------- small tiled linear / layernorm -----------------------

def _linear_kernel(x_ref, w_ref, b_ref, o_ref):
    o_ref[...] = _mm(x_ref[...], w_ref[...]) + b_ref[...]


def linear(x, w, b, *, row_tile=512):
    M, K = x.shape
    N = w.shape[1]
    tm = M if M <= row_tile else row_tile
    return pl.pallas_call(
        _linear_kernel,
        out_shape=jax.ShapeDtypeStruct((M, N), jnp.float32),
        grid=(pl.cdiv(M, tm),),
        in_specs=[pl.BlockSpec((tm, K), lambda i: (i, 0)),
                  pl.BlockSpec((K, N), lambda i: (0, 0)),
                  pl.BlockSpec((1, N), lambda i: (0, 0))],
        out_specs=pl.BlockSpec((tm, N), lambda i: (i, 0)),
        compiler_params=pltpu.CompilerParams(
            dimension_semantics=("parallel",), vmem_limit_bytes=_VMEM_LIMIT),
    )(x, w, b)


def _layernorm_kernel(x_ref, g_ref, b_ref, o_ref, *, eps):
    o_ref[...] = _layer_norm(x_ref[...], g_ref[...], b_ref[...], eps)


def layernorm(x, g, b, *, eps=1e-5, row_tile=512):
    M, D = x.shape
    tm = M if M <= row_tile else row_tile
    return pl.pallas_call(
        functools.partial(_layernorm_kernel, eps=eps),
        out_shape=jax.ShapeDtypeStruct((M, D), jnp.float32),
        grid=(pl.cdiv(M, tm),),
        in_specs=[pl.BlockSpec((tm, D), lambda i: (i, 0)),
                  pl.BlockSpec((1, D), lambda i: (0, 0)),
                  pl.BlockSpec((1, D), lambda i: (0, 0))],
        out_specs=pl.BlockSpec((tm, D), lambda i: (i, 0)),
        compiler_params=pltpu.CompilerParams(
            dimension_semantics=("parallel",), vmem_limit_bytes=_VMEM_LIMIT),
    )(x, g, b)


# ----------------------------- parameter init -----------------------------

def _uniform(key, shape, fan_in):
    bound = 1.0 / math.sqrt(fan_in)
    return jax.random.uniform(key, shape, jnp.float32, -bound, bound)


def init_params(key, *, d_model, d_hid, n_layers, n_heads, beam_hidden, beam_depth,
                beam_inputs=3, beam_outputs=5, input_feat=21):
    hd = d_model // n_heads
    bf = jnp.bfloat16
    keys = iter(jax.random.split(key, 8 + 2 * beam_depth + 10 * n_layers))
    nxt = lambda: next(keys)
    p = {}

    # BeamNetDirect(nthetas=65, depth=6, hidden=128, inputs=3, outputs=5, ...)
    blk_w, blk_b = [], []
    for _ in range(beam_depth - 1):
        blk_w.append(_uniform(nxt(), (beam_hidden, beam_hidden), beam_hidden))
        blk_b.append(_uniform(nxt(), (1, beam_hidden), beam_hidden))
    p["beam"] = {
        "w0": _uniform(nxt(), (beam_inputs, beam_hidden), beam_inputs).astype(bf),
        "b0": _uniform(nxt(), (1, beam_hidden), beam_inputs),
        "blk_w": jnp.stack(blk_w).astype(bf),                       # (depth-1, H, H)
        "blk_b": jnp.stack(blk_b),                                  # (depth-1, 1, H)
        "blk_g": jnp.ones((beam_depth - 1, 1, beam_hidden), jnp.float32),
        "blk_beta": jnp.zeros((beam_depth - 1, 1, beam_hidden), jnp.float32),
        "w_out": _uniform(nxt(), (beam_hidden, beam_outputs), beam_hidden).astype(bf),
        "b_out": _uniform(nxt(), (1, beam_outputs), beam_hidden),
    }

    # input_net: Linear(input_dim + 5*2 + 1 = 21, d_model)
    p["in_net_w"] = _uniform(nxt(), (input_feat, d_model), input_feat).astype(bf)
    p["in_net_b"] = _uniform(nxt(), (1, d_model), input_feat)

    # TransformerEncoder layers (post-norm, exact-erf gelu, batch_first), weights stored
    # per-head so the head split/merge happens inside the fused layer kernel.
    def heads_cols(wm):   # (D, D) -> (H, D, hd): columns grouped per head
        return wm.reshape(d_model, n_heads, hd).transpose(1, 0, 2)

    layers = []
    for _ in range(n_layers):
        in_w = _uniform(nxt(), (d_model, 3 * d_model), d_model)
        in_b = _uniform(nxt(), (1, 3 * d_model), d_model)
        out_w = _uniform(nxt(), (d_model, d_model), d_model)
        out_b = _uniform(nxt(), (1, d_model), d_model)
        ff1_w = _uniform(nxt(), (d_model, d_hid), d_model)
        ff1_b = _uniform(nxt(), (1, d_hid), d_model)
        ff2_w = _uniform(nxt(), (d_hid, d_model), d_hid)
        ff2_b = _uniform(nxt(), (1, d_model), d_hid)
        layers.append({
            "wq": heads_cols(in_w[:, :d_model]).astype(bf),
            "wk": heads_cols(in_w[:, d_model:2 * d_model]).astype(bf),
            "wv": heads_cols(in_w[:, 2 * d_model:]).astype(bf),
            "bq": in_b[0, :d_model].reshape(n_heads, 1, hd),
            "bk": in_b[0, d_model:2 * d_model].reshape(n_heads, 1, hd),
            "bv": in_b[0, 2 * d_model:].reshape(n_heads, 1, hd),
            "wo": out_w.reshape(n_heads, hd, d_model).astype(bf),   # rows grouped per head
            "bo": out_b,
            "ln1_g": jnp.ones((1, d_model), jnp.float32),
            "ln1_b": jnp.zeros((1, d_model), jnp.float32),
            "wf1": ff1_w.astype(bf), "bf1": ff1_b,
            "wf2": ff2_w.astype(bf), "bf2": ff2_b,
            "ln2_g": jnp.ones((1, d_model), jnp.float32),
            "ln2_b": jnp.zeros((1, d_model), jnp.float32),
        })
    p["layers"] = layers
    p["final_g"] = jnp.ones((1, d_model), jnp.float32)
    p["final_b"] = jnp.zeros((1, d_model), jnp.float32)
    return p


# ----------------------------- model forward -----------------------------

def funky_forward(params, x, seg_mask, rx_spacing, y_rad, windowed_beam_former,
                  rx_pos, *, n_heads, d_model, beam_depth, output_dim=1):
    del rx_spacing, windowed_beam_former   # unused by the reference forward
    rx_pos = rx_pos / 4000.0
    batch_size, snapshots = y_rad.shape

    # fused masked-mean + BeamNet MLP (one pallas_call)
    weighted_input, pred_theta = masked_mean_beam(params["beam"], x, seg_mask,
                                                  depth=beam_depth)

    # latent == 0 -> the whole prediction is detached before entering the transformer
    detached = jax.lax.stop_gradient(pred_theta).reshape(batch_size, snapshots, -1)
    wie = weighted_input.reshape(batch_size, snapshots, 3)
    rpe = rx_pos.reshape(batch_size, snapshots, 2)
    # NOTE: reference hardcodes linspace(-1, 0, 500) assuming snapshots_per_sessions == 500;
    # we use `snapshots` so the expand is well defined at small shapes (identical at 500).
    lin = jnp.broadcast_to(
        jnp.linspace(-1.0, 0.0, snapshots, dtype=jnp.float32).reshape(1, snapshots, 1),
        (batch_size // 2, snapshots, 1))

    inp = jnp.concatenate([wie[::2], wie[1::2], rpe[::2], rpe[1::2],
                           detached[::2], detached[1::2], lin], axis=2)   # (B/2, S, 21)

    B2 = batch_size // 2
    h = linear(inp.reshape(B2 * snapshots, inp.shape[-1]),
               params["in_net_w"], params["in_net_b"]).reshape(B2, snapshots, d_model)
    for lp in params["layers"]:
        h = encoder_layer(h, lp, n_heads=n_heads)      # one fused pallas_call per layer

    # final LayerNorm is row-wise: apply it only to the token we actually return.
    h0 = h[:, 0, :]                                                   # (B/2, d_model)
    hf = layernorm(h0, params["final_g"], params["final_b"])
    transformer_output = hf[:, :output_dim]
    return {"transformer_output": transformer_output, "pred_theta": pred_theta}


# ----------------------------- driver -----------------------------

if __name__ == "__main__":
    # Small config consistent with the forward (d_model / n_layers scaled down).
    batch_size, snapshots, W = 4, 8, 64
    d_model, n_heads, d_hid, n_layers = 128, 4, 64, 2
    beam_hidden, beam_depth = 128, 6

    key = jax.random.PRNGKey(0)
    kp, kx, km, ks, ky, kw, kr = jax.random.split(key, 7)
    params = init_params(kp, d_model=d_model, d_hid=d_hid, n_layers=n_layers,
                         n_heads=n_heads, beam_hidden=beam_hidden, beam_depth=beam_depth)

    N = batch_size * snapshots
    x = jax.random.normal(kx, (N, 3, W), jnp.float32)
    seg_mask = (jax.random.uniform(km, (N, 1, W)) > 0.5).astype(jnp.float32)
    rx_spacing = jax.random.normal(ks, (N,), jnp.float32)
    y_rad = jax.random.uniform(ky, (batch_size, snapshots), jnp.float32, -math.pi, math.pi)
    windowed_beam_former = jax.random.normal(kw, (N, 65), jnp.float32)
    rx_pos = jax.random.uniform(kr, (N, 2), jnp.float32, -2000.0, 2000.0)

    fwd = jax.jit(functools.partial(funky_forward, n_heads=n_heads, d_model=d_model,
                                    beam_depth=beam_depth))
    out = fwd(params, x, seg_mask, rx_spacing, y_rad, windowed_beam_former, rx_pos)
    jax.block_until_ready(out)

    assert out["transformer_output"].shape == (batch_size // 2, 1)
    assert out["pred_theta"].shape == (N, 5)
    print("KERNEL_OK")
</pallas_src>

<mosaic_0001>
module attributes {stable_mosaic.version = 11 : i64} {
  func.func @_beam_kernel(%arg0: i32, %arg1: memref<32x3x64xf32, #tpu.memory_space<vmem>>, %arg2: memref<32x1x64xf32, #tpu.memory_space<vmem>>, %arg3: memref<3x128xbf16, #tpu.memory_space<vmem>>, %arg4: memref<1x128xf32, #tpu.memory_space<vmem>>, %arg5: memref<5x128x128xbf16, #tpu.memory_space<vmem>>, %arg6: memref<5x1x128xf32, #tpu.memory_space<vmem>>, %arg7: memref<5x1x128xf32, #tpu.memory_space<vmem>>, %arg8: memref<5x1x128xf32, #tpu.memory_space<vmem>>, %arg9: memref<128x5xbf16, #tpu.memory_space<vmem>>, %arg10: memref<1x5xf32, #tpu.memory_space<vmem>>, %arg11: memref<32x3xf32, #tpu.memory_space<vmem>>, %arg12: memref<32x5xf32, #tpu.memory_space<vmem>>) attributes {dimension_semantics = [#tpu.dimension_semantics<parallel>], iteration_bounds = array<i64: 1>, scalar_prefetch = 0 : i64, scratch_operands = 0 : i64, tpu.core_type = #tpu.core_type<tc>, window_params = [{transform_indices = @transform_0, window_bounds = array<i64: 32, 3, 64>}, {transform_indices = @transform_1, window_bounds = array<i64: 32, 1, 64>}, {pipeline_mode = #tpu.pipeline_mode<synchronous>, transform_indices = @transform_2, window_bounds = array<i64: 3, 128>}, {pipeline_mode = #tpu.pipeline_mode<synchronous>, transform_indices = @transform_3, window_bounds = array<i64: 1, 128>}, {pipeline_mode = #tpu.pipeline_mode<synchronous>, transform_indices = @transform_4, window_bounds = array<i64: 5, 128, 128>}, {pipeline_mode = #tpu.pipeline_mode<synchronous>, transform_indices = @transform_5, window_bounds = array<i64: 5, 1, 128>}, {pipeline_mode = #tpu.pipeline_mode<synchronous>, transform_indices = @transform_6, window_bounds = array<i64: 5, 1, 128>}, {pipeline_mode = #tpu.pipeline_mode<synchronous>, transform_indices = @transform_7, window_bounds = array<i64: 5, 1, 128>}, {pipeline_mode = #tpu.pipeline_mode<synchronous>, transform_indices = @transform_8, window_bounds = array<i64: 128, 5>}, {pipeline_mode = #tpu.pipeline_mode<synchronous>, transform_indices = @transform_9, window_bounds = array<i64: 1, 5>}, {transform_indices = @transform_10, window_bounds = array<i64: 32, 3>}, {transform_indices = @transform_11, window_bounds = array<i64: 32, 5>}]} {
    %c0 = arith.constant 0 : index
    %c0_0 = arith.constant 0 : index
    %c0_1 = arith.constant 0 : index
    %0 = vector.load %arg1[%c0, %c0_0, %c0_1] : memref<32x3x64xf32, #tpu.memory_space<vmem>>, vector<32x3x64xf32>
    %c0_2 = arith.constant 0 : index
    %c0_3 = arith.constant 0 : index
    %c0_4 = arith.constant 0 : index
    %1 = vector.load %arg2[%c0_2, %c0_3, %c0_4] : memref<32x1x64xf32, #tpu.memory_space<vmem>>, vector<32x1x64xf32>
    %2 = vector.broadcast %1 : vector<32x1x64xf32> to vector<32x3x64xf32>
    %3 = arith.mulf %0, %2 : vector<32x3x64xf32>
    %cst = arith.constant dense<0.000000e+00> : vector<32x3xf32>
    %4 = vector.multi_reduction <add>, %3, %cst [2] : vector<32x3x64xf32> to vector<32x3xf32>
    %cst_5 = arith.constant dense<0.000000e+00> : vector<32x1xf32>
    %5 = vector.multi_reduction <add>, %1, %cst_5 [2] : vector<32x1x64xf32> to vector<32x1xf32>
    %cst_6 = arith.constant 1.000000e-03 : f32
    %6 = vector.broadcast %cst_6 : f32 to vector<32x1xf32>
    %7 = arith.addf %5, %6 : vector<32x1xf32>
    %8 = vector.broadcast %7 : vector<32x1xf32> to vector<32x3xf32>
    %9 = arith.divf %4, %8 : vector<32x3xf32>
    %c0_7 = arith.constant 0 : index
    %c0_8 = arith.constant 0 : index
    %10 = vector.load %arg11[%c0_7, %c0_8] : memref<32x3xf32, #tpu.memory_space<vmem>>, vector<32x3xf32>
    tpu.vector_store %arg11[%c0_7, %c0_8], %9 {strides = array<i32>} : memref<32x3xf32, #tpu.memory_space<vmem>>, vector<32x3xf32>,
    %c0_9 = arith.constant 0 : index
    %c0_10 = arith.constant 0 : index
    %11 = vector.load %arg3[%c0_9, %c0_10] : memref<3x128xbf16, #tpu.memory_space<vmem>>, vector<3x128xbf16>
    %12 = arith.truncf %9 : vector<32x3xf32> to vector<32x3xbf16>
    %cst_11 = arith.constant dense<0.000000e+00> : vector<32x128xf32>
    %13 = tpu.matmul %12, %11, %cst_11 {dimension_numbers = #tpu.dot_dimension_numbers<[1], [0], [0], [1], [0, 0, 1, 1], [], []>} : vector<32x3xbf16>, vector<3x128xbf16>, vector<32x128xf32> -> vector<32x128xf32>
    %c0_12 = arith.constant 0 : index
    %c0_13 = arith.constant 0 : index
    %14 = vector.load %arg4[%c0_12, %c0_13] : memref<1x128xf32, #tpu.memory_space<vmem>>, vector<1x128xf32>
    %15 = vector.broadcast %14 : vector<1x128xf32> to vector<32x128xf32>
    %16 = arith.addf %13, %15 : vector<32x128xf32>
    %cst_14 = arith.constant 0.000000e+00 : f32
    %17 = vector.broadcast %cst_14 : f32 to vector<32x128xf32>
    %18 = arith.cmpf oge, %16, %17 : vector<32x128xf32>
    %cst_15 = arith.constant 0.00999999977 : f32
    %19 = vector.broadcast %cst_15 : f32 to vector<32x128xf32>
    %20 = arith.mulf %19, %16 : vector<32x128xf32>
    %21 = arith.select %18, %16, %20 : vector<32x128xi1>, vector<32x128xf32>
    %c0_16 = arith.constant 0 : index
    %c0_17 = arith.constant 0 : index
    %c0_18 = arith.constant 0 : index
    %22 = vector.load %arg7[%c0_16, %c0_17, %c0_18] : memref<5x1x128xf32, #tpu.memory_space<vmem>>, vector<1x1x128xf32>
    %23 = vector.shape_cast %22 : vector<1x1x128xf32> to vector<1x128xf32>
    %c0_19 = arith.constant 0 : index
    %c0_20 = arith.constant 0 : index
    %c0_21 = arith.constant 0 : index
    %24 = vector.load %arg8[%c0_19, %c0_20, %c0_21] : memref<5x1x128xf32, #tpu.memory_space<vmem>>, vector<1x1x128xf32>
    %25 = vector.shape_cast %24 : vector<1x1x128xf32> to vector<1x128xf32>
    %cst_22 = arith.constant dense<0.000000e+00> : vector<32xf32>
    %26 = vector.multi_reduction <add>, %21, %cst_22 [1] : vector<32x128xf32> to vector<32xf32>
    %27 = vector.shape_cast %26 : vector<32xf32> to vector<32x1xf32>
    %cst_23 = arith.constant 1.280000e+02 : f32
    %28 = vector.broadcast %cst_23 : f32 to vector<32x1xf32>
    %29 = arith.divf %27, %28 : vector<32x1xf32>
    %30 = vector.broadcast %29 : vector<32x1xf32> to vector<32x128xf32>
    %31 = arith.subf %21, %30 : vector<32x128xf32>
    %32 = arith.mulf %31, %31 : vector<32x128xf32>
    %cst_24 = arith.constant dense<0.000000e+00> : vector<32xf32>
    %33 = vector.multi_reduction <add>, %32, %cst_24 [1] : vector<32x128xf32> to vector<32xf32>
    %34 = vector.shape_cast %33 : vector<32xf32> to vector<32x1xf32>
    %cst_25 = arith.constant 1.280000e+02 : f32
    %35 = vector.broadcast %cst_25 : f32 to vector<32x1xf32>
    %36 = arith.divf %34, %35 : vector<32x1xf32>
    %37 = vector.broadcast %29 : vector<32x1xf32> to vector<32x128xf32>
    %38 = arith.subf %21, %37 : vector<32x128xf32>
    %cst_26 = arith.constant 9.99999974E-6 : f32
    %39 = vector.broadcast %cst_26 : f32 to vector<32x1xf32>
    %40 = arith.addf %36, %39 : vector<32x1xf32>
    %41 = math.rsqrt %40 : vector<32x1xf32>
    %42 = vector.broadcast %41 : vector<32x1xf32> to vector<32x128xf32>
    %43 = arith.mulf %38, %42 : vector<32x128xf32>
    %44 = vector.broadcast %23 : vector<1x128xf32> to vector<32x128xf32>
    %45 = arith.mulf %43, %44 : vector<32x128xf32>
    %46 = vector.broadcast %25 : vector<1x128xf32> to vector<32x128xf32>
    %47 = arith.addf %45, %46 : vector<32x128xf32>
    %c0_27 = arith.constant 0 : index
    %c0_28 = arith.constant 0 : index
    %c0_29 = arith.constant 0 : index
    %48 = vector.load %arg5[%c0_27, %c0_28, %c0_29] : memref<5x128x128xbf16, #tpu.memory_space<vmem>>, vector<1x128x128xbf16>
    %49 = vector.shape_cast %48 : vector<1x128x128xbf16> to vector<128x128xbf16>
    %50 = arith.truncf %47 : vector<32x128xf32> to vector<32x128xbf16>
    %cst_30 = arith.constant dense<0.000000e+00> : vector<32x128xf32>
    %51 = tpu.matmul %50, %49, %cst_30 {dimension_numbers = #tpu.dot_dimension_numbers<[1], [0], [0], [1], [0, 0, 1, 1], [], []>} : vector<32x128xbf16>, vector<128x128xbf16>, vector<32x128xf32> -> vector<32x128xf32>
    %c0_31 = arith.constant 0 : index
    %c0_32 = arith.constant 0 : index
    %c0_33 = arith.constant 0 : index
    %52 = vector.load %arg6[%c0_31, %c0_32, %c0_33] : memref<5x1x128xf32, #tpu.memory_space<vmem>>, vector<1x1x128xf32>
    %53 = vector.shape_cast %52 : vector<1x1x128xf32> to vector<1x128xf32>
    %54 = vector.broadcast %53 : vector<1x128xf32> to vector<32x128xf32>
    %55 = arith.addf %51, %54 : vector<32x128xf32>
    %cst_34 = arith.constant 0.000000e+00 : f32
    %56 = vector.broadcast %cst_34 : f32 to vector<32x128xf32>
    %57 = arith.cmpf oge, %55, %56 : vector<32x128xf32>
    %cst_35 = arith.constant 0.00999999977 : f32
    %58 = vector.broadcast %cst_35 : f32 to vector<32x128xf32>
    %59 = arith.mulf %58, %55 : vector<32x128xf32>
    %60 = arith.select %57, %55, %59 : vector<32x128xi1>, vector<32x128xf32>
    %61 = arith.addf %21, %60 : vector<32x128xf32>
    %c1 = arith.constant 1 : index
    %c0_36 = arith.constant 0 : index
    %c0_37 = arith.constant 0 : index
    %62 = vector.load %arg7[%c1, %c0_36, %c0_37] : memref<5x1x128xf32, #tpu.memory_space<vmem>>, vector<1x1x128xf32>
    %63 = vector.shape_cast %62 : vector<1x1x128xf32> to vector<1x128xf32>
    %c1_38 = arith.constant 1 : index
    %c0_39 = arith.constant 0 : index
    %c0_40 = arith.constant 0 : index
    %64 = vector.load %arg8[%c1_38, %c0_39, %c0_40] : memref<5x1x128xf32, #tpu.memory_space<vmem>>, vector<1x1x128xf32>
    %65 = vector.shape_cast %64 : vector<1x1x128xf32> to vector<1x128xf32>
    %cst_41 = arith.constant dense<0.000000e+00> : vector<32xf32>
    %66 = vector.multi_reduction <add>, %61, %cst_41 [1] : vector<32x128xf32> to vector<32xf32>
    %67 = vector.shape_cast %66 : vector<32xf32> to vector<32x1xf32>
    %cst_42 = arith.constant 1.280000e+02 : f32
    %68 = vector.broadcast %cst_42 : f32 to vector<32x1xf32>
    %69 = arith.divf %67, %68 : vector<32x1xf32>
    %70 = vector.broadcast %69 : vector<32x1xf32> to vector<32x128xf32>
    %71 = arith.subf %61, %70 : vector<32x128xf32>
    %72 = arith.mulf %71, %71 : vector<32x128xf32>
    %cst_43 = arith.constant dense<0.000000e+00> : vector<32xf32>
    %73 = vector.multi_reduction <add>, %72, %cst_43 [1] : vector<32x128xf32> to vector<32xf32>
    %74 = vector.shape_cast %73 : vector<32xf32> to vector<32x1xf32>
    %cst_44 = arith.constant 1.280000e+02 : f32
    %75 = vector.broadcast %cst_44 : f32 to vector<32x1xf32>
    %76 = arith.divf %74, %75 : vector<32x1xf32>
    %77 = vector.broadcast %69 : vector<32x1xf32> to vector<32x128xf32>
    %78 = arith.subf %61, %77 : vector<32x128xf32>
    %cst_45 = arith.constant 9.99999974E-6 : f32
    %79 = vector.broadcast %cst_45 : f32 to vector<32x1xf32>
    %80 = arith.addf %76, %79 : vector<32x1xf32>
    %81 = math.rsqrt %80 : vector<32x1xf32>
    %82 = vector.broadcast %81 : vector<32x1xf32> to vector<32x128xf32>
    %83 = arith.mulf %78, %82 : vector<32x128xf32>
    %84 = vector.broadcast %63 : vector<1x128xf32> to vector<32x128xf32>
    %85 = arith.mulf %83, %84 : vector<32x128xf32>
    %86 = vector.broadcast %65 : vector<1x128xf32> to vector<32x128xf32>
    %87 = arith.addf %85, %86 : vector<32x128xf32>
    %c1_46 = arith.constant 1 : index
    %c0_47 = arith.constant 0 : index
    %c0_48 = arith.constant 0 : index
    %88 = vector.load %arg5[%c1_46, %c0_47, %c0_48] : memref<5x128x128xbf16, #tpu.memory_space<vmem>>, vector<1x128x128xbf16>
    %89 = vector.shape_cast %88 : vector<1x128x128xbf16> to vector<128x128xbf16>
    %90 = arith.truncf %87 : vector<32x128xf32> to vector<32x128xbf16>
    %cst_49 = arith.constant dense<0.000000e+00> : vector<32x128xf32>
    %91 = tpu.matmul %90, %89, %cst_49 {dimension_numbers = #tpu.dot_dimension_numbers<[1], [0], [0], [1], [0, 0, 1, 1], [], []>} : vector<32x128xbf16>, vector<128x128xbf16>, vector<32x128xf32> -> vector<32x128xf32>
    %c1_50 = arith.constant 1 : index
    %c0_51 = arith.constant 0 : index
    %c0_52 = arith.constant 0 : index
    %92 = vector.load %arg6[%c1_50, %c0_51, %c0_52] : memref<5x1x128xf32, #tpu.memory_space<vmem>>, vector<1x1x128xf32>
    %93 = vector.shape_cast %92 : vector<1x1x128xf32> to vector<1x128xf32>
    %94 = vector.broadcast %93 : vector<1x128xf32> to vector<32x128xf32>
    %95 = arith.addf %91, %94 : vector<32x128xf32>
    %cst_53 = arith.constant 0.000000e+00 : f32
    %96 = vector.broadcast %cst_53 : f32 to vector<32x128xf32>
    %97 = arith.cmpf oge, %95, %96 : vector<32x128xf32>
    %cst_54 = arith.constant 0.00999999977 : f32
    %98 = vector.broadcast %cst_54 : f32 to vector<32x128xf32>
    %99 = arith.mulf %98, %95 : vector<32x128xf32>
    %100 = arith.select %97, %95, %99 : vector<32x128xi1>, vector<32x128xf32>
    %101 = arith.addf %61, %100 : vector<32x128xf32>
    %c2 = arith.constant 2 : index
    %c0_55 = arith.constant 0 : index
    %c0_56 = arith.constant 0 : index
    %102 = vector.load %arg7[%c2, %c0_55, %c0_56] : memref<5x1x128xf32, #tpu.memory_space<vmem>>, vector<1x1x128xf32>
    %103 = vector.shape_cast %102 : vector<1x1x128xf32> to vector<1x128xf32>
    %c2_57 = arith.constant 2 : index
    %c0_58 = arith.constant 0 : index
    %c0_59 = arith.constant 0 : index
    %104 = vector.load %arg8[%c2_57, %c0_58, %c0_59] : memref<5x1x128xf32, #tpu.memory_space<vmem>>, vector<1x1x128xf32>
    %105 = vector.shape_cast %104 : vector<1x1x128xf32> to vector<1x128xf32>
    %cst_60 = arith.constant dense<0.000000e+00> : vector<32xf32>
    %106 = vector.multi_reduction <add>, %101, %cst_60 [1] : vector<32x128xf32> to vector<32xf32>
    %107 = vector.shape_cast %106 : vector<32xf32> to vector<32x1xf32>
    %cst_61 = arith.constant 1.280000e+02 : f32
    %108 = vector.broadcast %cst_61 : f32 to vector<32x1xf32>
    %109 = arith.divf %107, %108 : vector<32x1xf32>
    %110 = vector.broadcast %109 : vector<32x1xf32> to vector<32x128xf32>
    %111 = arith.subf %101, %110 : vector<32x128xf32>
    %112 = arith.mulf %111, %111 : vector<32x128xf32>
    %cst_62 = arith.constant dense<0.000000e+00> : vector<32xf32>
    %113 = vector.multi_reduction <add>, %112, %cst_62 [1] : vector<32x128xf32> to vector<32xf32>
    %114 = vector.shape_cast %113 : vector<32xf32> to vector<32x1xf32>
    %cst_63 = arith.constant 1.280000e+02 : f32
    %115 = vector.broadcast %cst_63 : f32 to vector<32x1xf32>
    %116 = arith.divf %114, %115 : vector<32x1xf32>
    %117 = vector.broadcast %109 : vector<32x1xf32> to vector<32x128xf32>
    %118 = arith.subf %101, %117 : vector<32x128xf32>
    %cst_64 = arith.constant 9.99999974E-6 : f32
    %119 = vector.broadcast %cst_64 : f32 to vector<32x1xf32>
    %120 = arith.addf %116, %119 : vector<32x1xf32>
    %121 = math.rsqrt %120 : vector<32x1xf32>
    %122 = vector.broadcast %121 : vector<32x1xf32> to vector<32x128xf32>
    %123 = arith.mulf %118, %122 : vector<32x128xf32>
    %124 = vector.broadcast %103 : vector<1x128xf32> to vector<32x128xf32>
    %125 = arith.mulf %123, %124 : vector<32x128xf32>
    %126 = vector.broadcast %105 : vector<1x128xf32> to vector<32x128xf32>
    %127 = arith.addf %125, %126 : vector<32x128xf32>
    %c2_65 = arith.constant 2 : index
    %c0_66 = arith.constant 0 : index
    %c0_67 = arith.constant 0 : index
    %128 = vector.load %arg5[%c2_65, %c0_66, %c0_67] : memref<5x128x128xbf16, #tpu.memory_space<vmem>>, vector<1x128x128xbf16>
    %129 = vector.shape_cast %128 : vector<1x128x128xbf16> to vector<128x128xbf16>
    %130 = arith.truncf %127 : vector<32x128xf32> to vector<32x128xbf16>
    %cst_68 = arith.constant dense<0.000000e+00> : vector<32x128xf32>
    %131 = tpu.matmul %130, %129, %cst_68 {dimension_numbers = #tpu.dot_dimension_numbers<[1], [0], [0], [1], [0, 0, 1, 1], [], []>} : vector<32x128xbf16>, vector<128x128xbf16>, vector<32x128xf32> -> vector<32x128xf32>
    %c2_69 = arith.constant 2 : index
    %c0_70 = arith.constant 0 : index
    %c0_71 = arith.constant 0 : index
    %132 = vector.load %arg6[%c2_69, %c0_70, %c0_71] : memref<5x1x128xf32, #tpu.memory_space<vmem>>, vector<1x1x128xf32>
    %133 = vector.shape_cast %132 : vector<1x1x128xf32> to vector<1x128xf32>
    %134 = vector.broadcast %133 : vector<1x128xf32> to vector<32x128xf32>
    %135 = arith.addf %131, %134 : vector<32x128xf32>
    %cst_72 = arith.constant 0.000000e+00 : f32
    %136 = vector.broadcast %cst_72 : f32 to vector<32x128xf32>
    %137 = arith.cmpf oge, %135, %136 : vector<32x128xf32>
    %cst_73 = arith.constant 0.00999999977 : f32
    %138 = vector.broadcast %cst_73 : f32 to vector<32x128xf32>
    %139 = arith.mulf %138, %135 : vector<32x128xf32>
    %140 = arith.select %137, %135, %139 : vector<32x128xi1>, vector<32x128xf32>
    %141 = arith.addf %101, %140 : vector<32x128xf32>
    %c3 = arith.constant 3 : index
    %c0_74 = arith.constant 0 : index
    %c0_75 = arith.constant 0 : index
    %142 = vector.load %arg7[%c3, %c0_74, %c0_75] : memref<5x1x128xf32, #tpu.memory_space<vmem>>, vector<1x1x128xf32>
    %143 = vector.shape_cast %142 : vector<1x1x128xf32> to vector<1x128xf32>
    %c3_76 = arith.constant 3 : index
    %c0_77 = arith.constant 0 : index
    %c0_78 = arith.constant 0 : index
    %144 = vector.load %arg8[%c3_76, %c0_77, %c0_78] : memref<5x1x128xf32, #tpu.memory_space<vmem>>, vector<1x1x128xf32>
    %145 = vector.shape_cast %144 : vector<1x1x128xf32> to vector<1x128xf32>
    %cst_79 = arith.constant dense<0.000000e+00> : vector<32xf32>
    %146 = vector.multi_reduction <add>, %141, %cst_79 [1] : vector<32x128xf32> to vector<32xf32>
    %147 = vector.shape_cast %146 : vector<32xf32> to vector<32x1xf32>
    %cst_80 = arith.constant 1.280000e+02 : f32
    %148 = vector.broadcast %cst_80 : f32 to vector<32x1xf32>
    %149 = arith.divf %147, %148 : vector<32x1xf32>
    %150 = vector.broadcast %149 : vector<32x1xf32> to vector<32x128xf32>
    %151 = arith.subf %141, %150 : vector<32x128xf32>
    %152 = arith.mulf %151, %151 : vector<32x128xf32>
    %cst_81 = arith.constant dense<0.000000e+00> : vector<32xf32>
    %153 = vector.multi_reduction <add>, %152, %cst_81 [1] : vector<32x128xf32> to vector<32xf32>
    %154 = vector.shape_cast %153 : vector<32xf32> to vector<32x1xf32>
    %cst_82 = arith.constant 1.280000e+02 : f32
    %155 = vector.broadcast %cst_82 : f32 to vector<32x1xf32>
    %156 = arith.divf %154, %155 : vector<32x1xf32>
    %157 = vector.broadcast %149 : vector<32x1xf32> to vector<32x128xf32>
    %158 = arith.subf %141, %157 : vector<32x128xf32>
    %cst_83 = arith.constant 9.99999974E-6 : f32
    %159 = vector.broadcast %cst_83 : f32 to vector<32x1xf32>
    %160 = arith.addf %156, %159 : vector<32x1xf32>
    %161 = math.rsqrt %160 : vector<32x1xf32>
    %162 = vector.broadcast %161 : vector<32x1xf32> to vector<32x128xf32>
    %163 = arith.mulf %158, %162 : vector<32x128xf32>
    %164 = vector.broadcast %143 : vector<1x128xf32> to vector<32x128xf32>
    %165 = arith.mulf %163, %164 : vector<32x128xf32>
    %166 = vector.broadcast %145 : vector<1x128xf32> to vector<32x128xf32>
    %167 = arith.addf %165, %166 : vector<32x128xf32>
    %c3_84 = arith.constant 3 : index
    %c0_85 = arith.constant 0 : index
    %c0_86 = arith.constant 0 : index
    %168 = vector.load %arg5[%c3_84, %c0_85, %c0_86] : memref<5x128x128xbf16, #tpu.memory_space<vmem>>, vector<1x128x128xbf16>
    %169 = vector.shape_cast %168 : vector<1x128x128xbf16> to vector<128x128xbf16>
    %170 = arith.truncf %167 : vector<32x128xf32> to vector<32x128xbf16>
    %cst_87 = arith.constant dense<0.000000e+00> : vector<32x128xf32>
    %171 = tpu.matmul %170, %169, %cst_87 {dimension_numbers = #tpu.dot_dimension_numbers<[1], [0], [0], [1], [0, 0, 1, 1], [], []>} : vector<32x128xbf16>, vector<128x128xbf16>, vector<32x128xf32> -> vector<32x128xf32>
    %c3_88 = arith.constant 3 : index
    %c0_89 = arith.constant 0 : index
    %c0_90 = arith.constant 0 : index
    %172 = vector.load %arg6[%c3_88, %c0_89, %c0_90] : memref<5x1x128xf32, #tpu.memory_space<vmem>>, vector<1x1x128xf32>
    %173 = vector.shape_cast %172 : vector<1x1x128xf32> to vector<1x128xf32>
    %174 = vector.broadcast %173 : vector<1x128xf32> to vector<32x128xf32>
    %175 = arith.addf %171, %174 : vector<32x128xf32>
    %cst_91 = arith.constant 0.000000e+00 : f32
    %176 = vector.broadcast %cst_91 : f32 to vector<32x128xf32>
    %177 = arith.cmpf oge, %175, %176 : vector<32x128xf32>
    %cst_92 = arith.constant 0.00999999977 : f32
    %178 = vector.broadcast %cst_92 : f32 to vector<32x128xf32>
    %179 = arith.mulf %178, %175 : vector<32x128xf32>
    %180 = arith.select %177, %175, %179 : vector<32x128xi1>, vector<32x128xf32>
    %181 = arith.addf %141, %180 : vector<32x128xf32>
    %c4 = arith.constant 4 : index
    %c0_93 = arith.constant 0 : index
    %c0_94 = arith.constant 0 : index
    %182 = vector.load %arg7[%c4, %c0_93, %c0_94] : memref<5x1x128xf32, #tpu.memory_space<vmem>>, vector<1x1x128xf32>
    %183 = vector.shape_cast %182 : vector<1x1x128xf32> to vector<1x128xf32>
    %c4_95 = arith.constant 4 : index
    %c0_96 = arith.constant 0 : index
    %c0_97 = arith.constant 0 : index
    %184 = vector.load %arg8[%c4_95, %c0_96, %c0_97] : memref<5x1x128xf32, #tpu.memory_space<vmem>>, vector<1x1x128xf32>
    %185 = vector.shape_cast %184 : vector<1x1x128xf32> to vector<1x128xf32>
    %cst_98 = arith.constant dense<0.000000e+00> : vector<32xf32>
    %186 = vector.multi_reduction <add>, %181, %cst_98 [1] : vector<32x128xf32> to vector<32xf32>
    %187 = vector.shape_cast %186 : vector<32xf32> to vector<32x1xf32>
    %cst_99 = arith.constant 1.280000e+02 : f32
    %188 = vector.broadcast %cst_99 : f32 to vector<32x1xf32>
    %189 = arith.divf %187, %188 : vector<32x1xf32>
    %190 = vector.broadcast %189 : vector<32x1xf32> to vector<32x128xf32>
    %191 = arith.subf %181, %190 : vector<32x128xf32>
    %192 = arith.mulf %191, %191 : vector<32x128xf32>
    %cst_100 = arith.constant dense<0.000000e+00> : vector<32xf32>
    %193 = vector.multi_reduction <add>, %192, %cst_100 [1] : vector<32x128xf32> to vector<32xf32>
    %194 = vector.shape_cast %193 : vector<32xf32> to vector<32x1xf32>
    %cst_101 = arith.constant 1.280000e+02 : f32
    %195 = vector.broadcast %cst_101 : f32 to vector<32x1xf32>
    %196 = arith.divf %194, %195 : vector<32x1xf32>
    %197 = vector.broadcast %189 : vector<32x1xf32> to vector<32x128xf32>
    %198 = arith.subf %181, %197 : vector<32x128xf32>
    %cst_102 = arith.constant 9.99999974E-6 : f32
    %199 = vector.broadcast %cst_102 : f32 to vector<32x1xf32>
    %200 = arith.addf %196, %199 : vector<32x1xf32>
    %201 = math.rsqrt %200 : vector<32x1xf32>
    %202 = vector.broadcast %201 : vector<32x1xf32> to vector<32x128xf32>
    %203 = arith.mulf %198, %202 : vector<32x128xf32>
    %204 = vector.broadcast %183 : vector<1x128xf32> to vector<32x128xf32>
    %205 = arith.mulf %203, %204 : vector<32x128xf32>
    %206 = vector.broadcast %185 : vector<1x128xf32> to vector<32x128xf32>
    %207 = arith.addf %205, %206 : vector<32x128xf32>
    %c4_103 = arith.constant 4 : index
    %c0_104 = arith.constant 0 : index
    %c0_105 = arith.constant 0 : index
    %208 = vector.load %arg5[%c4_103, %c0_104, %c0_105] : memref<5x128x128xbf16, #tpu.memory_space<vmem>>, vector<1x128x128xbf16>
    %209 = vector.shape_cast %208 : vector<1x128x128xbf16> to vector<128x128xbf16>
    %210 = arith.truncf %207 : vector<32x128xf32> to vector<32x128xbf16>
    %cst_106 = arith.constant dense<0.000000e+00> : vector<32x128xf32>
    %211 = tpu.matmul %210, %209, %cst_106 {dimension_numbers = #tpu.dot_dimension_numbers<[1], [0], [0], [1], [0, 0, 1, 1], [], []>} : vector<32x128xbf16>, vector<128x128xbf16>, vector<32x128xf32> -> vector<32x128xf32>
    %c4_107 = arith.constant 4 : index
    %c0_108 = arith.constant 0 : index
    %c0_109 = arith.constant 0 : index
    %212 = vector.load %arg6[%c4_107, %c0_108, %c0_109] : memref<5x1x128xf32, #tpu.memory_space<vmem>>, vector<1x1x128xf32>
    %213 = vector.shape_cast %212 : vector<1x1x128xf32> to vector<1x128xf32>
    %214 = vector.broadcast %213 : vector<1x128xf32> to vector<32x128xf32>
    %215 = arith.addf %211, %214 : vector<32x128xf32>
    %cst_110 = arith.constant 0.000000e+00 : f32
    %216 = vector.broadcast %cst_110 : f32 to vector<32x128xf32>
    %217 = arith.cmpf oge, %215, %216 : vector<32x128xf32>
    %cst_111 = arith.constant 0.00999999977 : f32
    %218 = vector.broadcast %cst_111 : f32 to vector<32x128xf32>
    %219 = arith.mulf %218, %215 : vector<32x128xf32>
    %220 = arith.select %217, %215, %219 : vector<32x128xi1>, vector<32x128xf32>
    %221 = arith.addf %181, %220 : vector<32x128xf32>
    %c0_112 = arith.constant 0 : index
    %c0_113 = arith.constant 0 : index
    %222 = vector.load %arg9[%c0_112, %c0_113] : memref<128x5xbf16, #tpu.memory_space<vmem>>, vector<128x5xbf16>
    %223 = arith.truncf %221 : vector<32x128xf32> to vector<32x128xbf16>
    %cst_114 = arith.constant dense<0.000000e+00> : vector<32x5xf32>
    %224 = tpu.matmul %223, %222, %cst_114 {dimension_numbers = #tpu.dot_dimension_numbers<[1], [0], [0], [1], [0, 0, 1, 1], [], []>} : vector<32x128xbf16>, vector<128x5xbf16>, vector<32x5xf32> -> vector<32x5xf32>
    %c0_115 = arith.constant 0 : index
    %c0_116 = arith.constant 0 : index
    %225 = vector.load %arg10[%c0_115, %c0_116] : memref<1x5xf32, #tpu.memory_space<vmem>>, vector<1x5xf32>
    %226 = vector.broadcast %225 : vector<1x5xf32> to vector<32x5xf32>
    %227 = arith.addf %224, %226 : vector<32x5xf32>
    %228 = tpu.iota {dimensions = array<i32: 1>} : vector<32x5xi32>
    %c1_i32 = arith.constant 1 : i32
    %229 = vector.broadcast %c1_i32 : i32 to vector<32x5xi32>
    %230 = arith.cmpi sge, %228, %229 : vector<32x5xi32>
    %c2_i32 = arith.constant 2 : i32
    %231 = vector.broadcast %c2_i32 : i32 to vector<32x5xi32>
    %232 = arith.cmpi sle, %228, %231 : vector<32x5xi32>
    %233 = arith.andi %230, %232 : vector<32x5xi1>
    %234 = math.absf %227 : vector<32x5xf32>
    %cst_117 = arith.constant 9.99999974E-5 : f32
    %235 = vector.broadcast %cst_117 : f32 to vector<32x5xf32>
    %236 = arith.addf %234, %235 : vector<32x5xf32>
    %237 = arith.select %233, %236, %227 : vector<32x5xi1>, vector<32x5xf32>
    %c0_118 = arith.constant 0 : index
    %c0_119 = arith.constant 0 : index
    %238 = vector.load %arg12[%c0_118, %c0_119] : memref<32x5xf32, #tpu.memory_space<vmem>>, vector<32x5xf32>
    tpu.vector_store %arg12[%c0_118, %c0_119], %237 {strides = array<i32>} : memref<32x5xf32, #tpu.memory_space<vmem>>, vector<32x5xf32>,
    return
  }
  func.func @transform_0(%arg0: i32) -> (i32, i32, i32) {
    %c0_i32 = arith.constant 0 : i32
    %c0_i32_0 = arith.constant 0 : i32
    %c0_i32_1 = arith.constant 0 : i32
    return %arg0, %c0_i32, %c0_i32_0 : i32, i32, i32
  }
  func.func @transform_1(%arg0: i32) -> (i32, i32, i32) {
    %c0_i32 = arith.constant 0 : i32
    %c0_i32_0 = arith.constant 0 : i32
    %c0_i32_1 = arith.constant 0 : i32
    return %arg0, %c0_i32, %c0_i32_0 : i32, i32, i32
  }
  func.func @transform_2(%arg0: i32) -> (i32, i32) {
    %c0_i32 = arith.constant 0 : i32
    %c0_i32_0 = arith.constant 0 : i32
    %c0_i32_1 = arith.constant 0 : i32
    return %c0_i32, %c0_i32_0 : i32, i32
  }
  func.func @transform_3(%arg0: i32) -> (i32, i32) {
    %c0_i32 = arith.constant 0 : i32
    %c0_i32_0 = arith.constant 0 : i32
    %c0_i32_1 = arith.constant 0 : i32
    return %c0_i32, %c0_i32_0 : i32, i32
  }
  func.func @transform_4(%arg0: i32) -> (i32, i32, i32) {
    %c0_i32 = arith.constant 0 : i32
    %c0_i32_0 = arith.constant 0 : i32
    %c0_i32_1 = arith.constant 0 : i32
    %c0_i32_2 = arith.constant 0 : i32
    return %c0_i32, %c0_i32_0, %c0_i32_1 : i32, i32, i32
  }
  func.func @transform_5(%arg0: i32) -> (i32, i32, i32) {
    %c0_i32 = arith.constant 0 : i32
    %c0_i32_0 = arith.constant 0 : i32
    %c0_i32_1 = arith.constant 0 : i32
    %c0_i32_2 = arith.constant 0 : i32
    return %c0_i32, %c0_i32_0, %c0_i32_1 : i32, i32, i32
  }
  func.func @transform_6(%arg0: i32) -> (i32, i32, i32) {
    %c0_i32 = arith.constant 0 : i32
    %c0_i32_0 = arith.constant 0 : i32
    %c0_i32_1 = arith.constant 0 : i32
    %c0_i32_2 = arith.constant 0 : i32
    return %c0_i32, %c0_i32_0, %c0_i32_1 : i32, i32, i32
  }
  func.func @transform_7(%arg0: i32) -> (i32, i32, i32) {
    %c0_i32 = arith.constant 0 : i32
    %c0_i32_0 = arith.constant 0 : i32
    %c0_i32_1 = arith.constant 0 : i32
    %c0_i32_2 = arith.constant 0 : i32
    return %c0_i32, %c0_i32_0, %c0_i32_1 : i32, i32, i32
  }
  func.func @transform_8(%arg0: i32) -> (i32, i32) {
    %c0_i32 = arith.constant 0 : i32
    %c0_i32_0 = arith.constant 0 : i32
    %c0_i32_1 = arith.constant 0 : i32
    return %c0_i32, %c0_i32_0 : i32, i32
  }
  func.func @transform_9(%arg0: i32) -> (i32, i32) {
    %c0_i32 = arith.constant 0 : i32
    %c0_i32_0 = arith.constant 0 : i32
    %c0_i32_1 = arith.constant 0 : i32
    return %c0_i32, %c0_i32_0 : i32, i32
  }
  func.func @transform_10(%arg0: i32) -> (i32, i32) {
    %c0_i32 = arith.constant 0 : i32
    %c0_i32_0 = arith.constant 0 : i32
    return %arg0, %c0_i32 : i32, i32
  }
  func.func @transform_11(%arg0: i32) -> (i32, i32) {
    %c0_i32 = arith.constant 0 : i32
    %c0_i32_0 = arith.constant 0 : i32
    return %arg0, %c0_i32 : i32, i32
  }
}

module attributes {stable_mosaic.version = 11 : i64} {
  func.func @_linear_kernel(%arg0: i32, %arg1: memref<16x21xf32, #tpu.memory_space<vmem>>, %arg2: memref<21x128xbf16, #tpu.memory_space<vmem>>, %arg3: memref<1x128xf32, #tpu.memory_space<vmem>>, %arg4: memref<16x128xf32, #tpu.memory_space<vmem>>) attributes {dimension_semantics = [#tpu.dimension_semantics<parallel>], iteration_bounds = array<i64: 1>, scalar_prefetch = 0 : i64, scratch_operands = 0 : i64, tpu.core_type = #tpu.core_type<tc>, window_params = [{transform_indices = @transform_0, window_bounds = array<i64: 16, 21>}, {pipeline_mode = #tpu.pipeline_mode<synchronous>, transform_indices = @transform_1, window_bounds = array<i64: 21, 128>}, {pipeline_mode = #tpu.pipeline_mode<synchronous>, transform_indices = @transform_2, window_bounds = array<i64: 1, 128>}, {transform_indices = @transform_3, window_bounds = array<i64: 16, 128>}]} {
    %c0 = arith.constant 0 : index
    %c0_0 = arith.constant 0 : index
    %0 = vector.load %arg1[%c0, %c0_0] : memref<16x21xf32, #tpu.memory_space<vmem>>, vector<16x21xf32>
    %c0_1 = arith.constant 0 : index
    %c0_2 = arith.constant 0 : index
    %1 = vector.load %arg2[%c0_1, %c0_2] : memref<21x128xbf16, #tpu.memory_space<vmem>>, vector<21x128xbf16>
    %2 = arith.truncf %0 : vector<16x21xf32> to vector<16x21xbf16>
    %cst = arith.constant dense<0.000000e+00> : vector<16x128xf32>
    %3 = tpu.matmul %2, %1, %cst {dimension_numbers = #tpu.dot_dimension_numbers<[1], [0], [0], [1], [0, 0, 1, 1], [], []>} : vector<16x21xbf16>, vector<21x128xbf16>, vector<16x128xf32> -> vector<16x128xf32>
    %c0_3 = arith.constant 0 : index
    %c0_4 = arith.constant 0 : index
    %4 = vector.load %arg3[%c0_3, %c0_4] : memref<1x128xf32, #tpu.memory_space<vmem>>, vector<1x128xf32>
    %5 = vector.broadcast %4 : vector<1x128xf32> to vector<16x128xf32>
    %6 = arith.addf %3, %5 : vector<16x128xf32>
    %c0_5 = arith.constant 0 : index
    %c0_6 = arith.constant 0 : index
    %7 = vector.load %arg4[%c0_5, %c0_6] : memref<16x128xf32, #tpu.memory_space<vmem>>, vector<16x128xf32>
    tpu.vector_store %arg4[%c0_5, %c0_6], %6 {strides = array<i32>} : memref<16x128xf32, #tpu.memory_space<vmem>>, vector<16x128xf32>,
    return
  }
  func.func @transform_0(%arg0: i32) -> (i32, i32) {
    %c0_i32 = arith.constant 0 : i32
    %c0_i32_0 = arith.constant 0 : i32
    return %arg0, %c0_i32 : i32, i32
  }
  func.func @transform_1(%arg0: i32) -> (i32, i32) {
    %c0_i32 = arith.constant 0 : i32
    %c0_i32_0 = arith.constant 0 : i32
    %c0_i32_1 = arith.constant 0 : i32
    return %c0_i32, %c0_i32_0 : i32, i32
  }
  func.func @transform_2(%arg0: i32) -> (i32, i32) {
    %c0_i32 = arith.constant 0 : i32
    %c0_i32_0 = arith.constant 0 : i32
    %c0_i32_1 = arith.constant 0 : i32
    return %c0_i32, %c0_i32_0 : i32, i32
  }
  func.func @transform_3(%arg0: i32) -> (i32, i32) {
    %c0_i32 = arith.constant 0 : i32
    %c0_i32_0 = arith.constant 0 : i32
    return %arg0, %c0_i32 : i32, i32
  }
}

module attributes {stable_mosaic.version = 11 : i64} {
  func.func @_encoder_layer_kernel(%arg0: i32, %arg1: memref<1x8x128xf32, #tpu.memory_space<vmem>>, %arg2: memref<4x128x32xbf16, #tpu.memory_space<vmem>>, %arg3: memref<4x128x32xbf16, #tpu.memory_space<vmem>>, %arg4: memref<4x128x32xbf16, #tpu.memory_space<vmem>>, %arg5: memref<4x1x32xf32, #tpu.memory_space<vmem>>, %arg6: memref<4x1x32xf32, #tpu.memory_space<vmem>>, %arg7: memref<4x1x32xf32, #tpu.memory_space<vmem>>, %arg8: memref<4x32x128xbf16, #tpu.memory_space<vmem>>, %arg9: memref<1x128xf32, #tpu.memory_space<vmem>>, %arg10: memref<1x128xf32, #tpu.memory_space<vmem>>, %arg11: memref<1x128xf32, #tpu.memory_space<vmem>>, %arg12: memref<128x64xbf16, #tpu.memory_space<vmem>>, %arg13: memref<1x64xf32, #tpu.memory_space<vmem>>, %arg14: memref<64x128xbf16, #tpu.memory_space<vmem>>, %arg15: memref<1x128xf32, #tpu.memory_space<vmem>>, %arg16: memref<1x128xf32, #tpu.memory_space<vmem>>, %arg17: memref<1x128xf32, #tpu.memory_space<vmem>>, %arg18: memref<1x8x128xf32, #tpu.memory_space<vmem>>) attributes {dimension_semantics = [#tpu.dimension_semantics<parallel>], iteration_bounds = array<i64: 2>, scalar_prefetch = 0 : i64, scratch_operands = 0 : i64, tpu.core_type = #tpu.core_type<tc>, window_params = [{transform_indices = @transform_0, window_bounds = array<i64: 1, 8, 128>}, {pipeline_mode = #tpu.pipeline_mode<synchronous>, transform_indices = @transform_1, window_bounds = array<i64: 4, 128, 32>}, {pipeline_mode = #tpu.pipeline_mode<synchronous>, transform_indices = @transform_2, window_bounds = array<i64: 4, 128, 32>}, {pipeline_mode = #tpu.pipeline_mode<synchronous>, transform_indices = @transform_3, window_bounds = array<i64: 4, 128, 32>}, {pipeline_mode = #tpu.pipeline_mode<synchronous>, transform_indices = @transform_4, window_bounds = array<i64: 4, 1, 32>}, {pipeline_mode = #tpu.pipeline_mode<synchronous>, transform_indices = @transform_5, window_bounds = array<i64: 4, 1, 32>}, {pipeline_mode = #tpu.pipeline_mode<synchronous>, transform_indices = @transform_6, window_bounds = array<i64: 4, 1, 32>}, {pipeline_mode = #tpu.pipeline_mode<synchronous>, transform_indices = @transform_7, window_bounds = array<i64: 4, 32, 128>}, {pipeline_mode = #tpu.pipeline_mode<synchronous>, transform_indices = @transform_8, window_bounds = array<i64: 1, 128>}, {pipeline_mode = #tpu.pipeline_mode<synchronous>, transform_indices = @transform_9, window_bounds = array<i64: 1, 128>}, {pipeline_mode = #tpu.pipeline_mode<synchronous>, transform_indices = @transform_10, window_bounds = array<i64: 1, 128>}, {pipeline_mode = #tpu.pipeline_mode<synchronous>, transform_indices = @transform_11, window_bounds = array<i64: 128, 64>}, {pipeline_mode = #tpu.pipeline_mode<synchronous>, transform_indices = @transform_12, window_bounds = array<i64: 1, 64>}, {pipeline_mode = #tpu.pipeline_mode<synchronous>, transform_indices = @transform_13, window_bounds = array<i64: 64, 128>}, {pipeline_mode = #tpu.pipeline_mode<synchronous>, transform_indices = @transform_14, window_bounds = array<i64: 1, 128>}, {pipeline_mode = #tpu.pipeline_mode<synchronous>, transform_indices = @transform_15, window_bounds = array<i64: 1, 128>}, {pipeline_mode = #tpu.pipeline_mode<synchronous>, transform_indices = @transform_16, window_bounds = array<i64: 1, 128>}, {transform_indices = @transform_17, window_bounds = array<i64: 1, 8, 128>}]} {
    %c0 = arith.constant 0 : index
    %c0_0 = arith.constant 0 : index
    %c0_1 = arith.constant 0 : index
    %0 = vector.load %arg1[%c0, %c0_0, %c0_1] : memref<1x8x128xf32, #tpu.memory_space<vmem>>, vector<1x8x128xf32>
    %1 = vector.shape_cast %0 : vector<1x8x128xf32> to vector<8x128xf32>
    %2 = arith.truncf %1 : vector<8x128xf32> to vector<8x128xbf16>
    %cst = arith.constant 0.000000e+00 : f32
    %3 = vector.broadcast %cst : f32 to vector<8x128xf32>
    %c0_2 = arith.constant 0 : index
    %c0_3 = arith.constant 0 : index
    %4 = vector.load %arg9[%c0_2, %c0_3] : memref<1x128xf32, #tpu.memory_space<vmem>>, vector<1x128xf32>
    %5 = vector.broadcast %4 : vector<1x128xf32> to vector<8x128xf32>
    %6 = arith.addf %3, %5 : vector<8x128xf32>
    %c0_4 = arith.constant 0 : index
    %c0_5 = arith.constant 0 : index
    %c0_6 = arith.constant 0 : index
    %7 = vector.load %arg2[%c0_4, %c0_5, %c0_6] : memref<4x128x32xbf16, #tpu.memory_space<vmem>>, vector<1x128x32xbf16>
    %8 = vector.shape_cast %7 : vector<1x128x32xbf16> to vector<128x32xbf16>
    %cst_7 = arith.constant dense<0.000000e+00> : vector<8x32xf32>
    %9 = tpu.matmul %2, %8, %cst_7 {dimension_numbers = #tpu.dot_dimension_numbers<[1], [0], [0], [1], [0, 0, 1, 1], [], []>} : vector<8x128xbf16>, vector<128x32xbf16>, vector<8x32xf32> -> vector<8x32xf32>
    %c0_8 = arith.constant 0 : index
    %c0_9 = arith.constant 0 : index
    %c0_10 = arith.constant 0 : index
    %10 = vector.load %arg5[%c0_8, %c0_9, %c0_10] : memref<4x1x32xf32, #tpu.memory_space<vmem>>, vector<1x1x32xf32>
    %11 = vector.shape_cast %10 : vector<1x1x32xf32> to vector<1x32xf32>
    %12 = vector.broadcast %11 : vector<1x32xf32> to vector<8x32xf32>
    %13 = arith.addf %9, %12 : vector<8x32xf32>
    %c0_11 = arith.constant 0 : index
    %c0_12 = arith.constant 0 : index
    %c0_13 = arith.constant 0 : index
    %14 = vector.load %arg3[%c0_11, %c0_12, %c0_13] : memref<4x128x32xbf16, #tpu.memory_space<vmem>>, vector<1x128x32xbf16>
    %15 = vector.shape_cast %14 : vector<1x128x32xbf16> to vector<128x32xbf16>
    %cst_14 = arith.constant dense<0.000000e+00> : vector<8x32xf32>
    %16 = tpu.matmul %2, %15, %cst_14 {dimension_numbers = #tpu.dot_dimension_numbers<[1], [0], [0], [1], [0, 0, 1, 1], [], []>} : vector<8x128xbf16>, vector<128x32xbf16>, vector<8x32xf32> -> vector<8x32xf32>
    %c0_15 = arith.constant 0 : index
    %c0_16 = arith.constant 0 : index
    %c0_17 = arith.constant 0 : index
    %17 = vector.load %arg6[%c0_15, %c0_16, %c0_17] : memref<4x1x32xf32, #tpu.memory_space<vmem>>, vector<1x1x32xf32>
    %18 = vector.shape_cast %17 : vector<1x1x32xf32> to vector<1x32xf32>
    %19 = vector.broadcast %18 : vector<1x32xf32> to vector<8x32xf32>
    %20 = arith.addf %16, %19 : vector<8x32xf32>
    %c0_18 = arith.constant 0 : index
    %c0_19 = arith.constant 0 : index
    %c0_20 = arith.constant 0 : index
    %21 = vector.load %arg4[%c0_18, %c0_19, %c0_20] : memref<4x128x32xbf16, #tpu.memory_space<vmem>>, vector<1x128x32xbf16>
    %22 = vector.shape_cast %21 : vector<1x128x32xbf16> to vector<128x32xbf16>
    %cst_21 = arith.constant dense<0.000000e+00> : vector<8x32xf32>
    %23 = tpu.matmul %2, %22, %cst_21 {dimension_numbers = #tpu.dot_dimension_numbers<[1], [0], [0], [1], [0, 0, 1, 1], [], []>} : vector<8x128xbf16>, vector<128x32xbf16>, vector<8x32xf32> -> vector<8x32xf32>
    %c0_22 = arith.constant 0 : index
    %c0_23 = arith.constant 0 : index
    %c0_24 = arith.constant 0 : index
    %24 = vector.load %arg7[%c0_22, %c0_23, %c0_24] : memref<4x1x32xf32, #tpu.memory_space<vmem>>, vector<1x1x32xf32>
    %25 = vector.shape_cast %24 : vector<1x1x32xf32> to vector<1x32xf32>
    %26 = vector.broadcast %25 : vector<1x32xf32> to vector<8x32xf32>
    %27 = arith.addf %23, %26 : vector<8x32xf32>
    %28 = arith.truncf %13 : vector<8x32xf32> to vector<8x32xbf16>
    %29 = arith.truncf %20 : vector<8x32xf32> to vector<8x32xbf16>
    %cst_25 = arith.constant dense<0.000000e+00> : vector<8x8xf32>
    %30 = tpu.matmul %28, %29, %cst_25 {dimension_numbers = #tpu.dot_dimension_numbers<[1], [1], [0], [0], [0, 0, 1, 0], [], []>} : vector<8x32xbf16>, vector<8x32xbf16>, vector<8x8xf32> -> vector<8x8xf32>
    %cst_26 = arith.constant 0.176776692 : f32
    %31 = vector.broadcast %cst_26 : f32 to vector<8x8xf32>
    %32 = arith.mulf %30, %31 : vector<8x8xf32>
    %cst_27 = arith.constant dense<0xFF800000> : vector<8xf32>
    %33 = vector.multi_reduction <maximumf>, %32, %cst_27 [1] : vector<8x8xf32> to vector<8xf32>
    %34 = vector.shape_cast %33 : vector<8xf32> to vector<8x1xf32>
    %35 = vector.broadcast %34 : vector<8x1xf32> to vector<8x8xf32>
    %36 = arith.subf %32, %35 : vector<8x8xf32>
    %37 = math.exp %36 : vector<8x8xf32>
    %cst_28 = arith.constant dense<0.000000e+00> : vector<8xf32>
    %38 = vector.multi_reduction <add>, %37, %cst_28 [1] : vector<8x8xf32> to vector<8xf32>
    %39 = vector.shape_cast %38 : vector<8xf32> to vector<8x1xf32>
    %40 = tpu.reciprocal %39 {approx = true} : vector<8x1xf32> -> vector<8x1xf32>
    %41 = vector.broadcast %40 : vector<8x1xf32> to vector<8x8xf32>
    %42 = arith.mulf %37, %41 : vector<8x8xf32>
    %43 = arith.truncf %42 : vector<8x8xf32> to vector<8x8xbf16>
    %44 = arith.truncf %27 : vector<8x32xf32> to vector<8x32xbf16>
    %cst_29 = arith.constant dense<0.000000e+00> : vector<8x32xf32>
    %45 = tpu.matmul %43, %44, %cst_29 {dimension_numbers = #tpu.dot_dimension_numbers<[1], [0], [0], [1], [0, 0, 1, 1], [], []>} : vector<8x8xbf16>, vector<8x32xbf16>, vector<8x32xf32> -> vector<8x32xf32>
    %c0_30 = arith.constant 0 : index
    %c0_31 = arith.constant 0 : index
    %c0_32 = arith.constant 0 : index
    %46 = vector.load %arg8[%c0_30, %c0_31, %c0_32] : memref<4x32x128xbf16, #tpu.memory_space<vmem>>, vector<1x32x128xbf16>
    %47 = vector.shape_cast %46 : vector<1x32x128xbf16> to vector<32x128xbf16>
    %48 = arith.truncf %45 : vector<8x32xf32> to vector<8x32xbf16>
    %cst_33 = arith.constant dense<0.000000e+00> : vector<8x128xf32>
    %49 = tpu.matmul %48, %47, %cst_33 {dimension_numbers = #tpu.dot_dimension_numbers<[1], [0], [0], [1], [0, 0, 1, 1], [], []>} : vector<8x32xbf16>, vector<32x128xbf16>, vector<8x128xf32> -> vector<8x128xf32>
    %50 = arith.addf %6, %49 : vector<8x128xf32>
    %c1 = arith.constant 1 : index
    %c0_34 = arith.constant 0 : index
    %c0_35 = arith.constant 0 : index
    %51 = vector.load %arg2[%c1, %c0_34, %c0_35] : memref<4x128x32xbf16, #tpu.memory_space<vmem>>, vector<1x128x32xbf16>
    %52 = vector.shape_cast %51 : vector<1x128x32xbf16> to vector<128x32xbf16>
    %cst_36 = arith.constant dense<0.000000e+00> : vector<8x32xf32>
    %53 = tpu.matmul %2, %52, %cst_36 {dimension_numbers = #tpu.dot_dimension_numbers<[1], [0], [0], [1], [0, 0, 1, 1], [], []>} : vector<8x128xbf16>, vector<128x32xbf16>, vector<8x32xf32> -> vector<8x32xf32>
    %c1_37 = arith.constant 1 : index
    %c0_38 = arith.constant 0 : index
    %c0_39 = arith.constant 0 : index
    %54 = vector.load %arg5[%c1_37, %c0_38, %c0_39] : memref<4x1x32xf32, #tpu.memory_space<vmem>>, vector<1x1x32xf32>
    %55 = vector.shape_cast %54 : vector<1x1x32xf32> to vector<1x32xf32>
    %56 = vector.broadcast %55 : vector<1x32xf32> to vector<8x32xf32>
    %57 = arith.addf %53, %56 : vector<8x32xf32>
    %c1_40 = arith.constant 1 : index
    %c0_41 = arith.constant 0 : index
    %c0_42 = arith.constant 0 : index
    %58 = vector.load %arg3[%c1_40, %c0_41, %c0_42] : memref<4x128x32xbf16, #tpu.memory_space<vmem>>, vector<1x128x32xbf16>
    %59 = vector.shape_cast %58 : vector<1x128x32xbf16> to vector<128x32xbf16>
    %cst_43 = arith.constant dense<0.000000e+00> : vector<8x32xf32>
    %60 = tpu.matmul %2, %59, %cst_43 {dimension_numbers = #tpu.dot_dimension_numbers<[1], [0], [0], [1], [0, 0, 1, 1], [], []>} : vector<8x128xbf16>, vector<128x32xbf16>, vector<8x32xf32> -> vector<8x32xf32>
    %c1_44 = arith.constant 1 : index
    %c0_45 = arith.constant 0 : index
    %c0_46 = arith.constant 0 : index
    %61 = vector.load %arg6[%c1_44, %c0_45, %c0_46] : memref<4x1x32xf32, #tpu.memory_space<vmem>>, vector<1x1x32xf32>
    %62 = vector.shape_cast %61 : vector<1x1x32xf32> to vector<1x32xf32>
    %63 = vector.broadcast %62 : vector<1x32xf32> to vector<8x32xf32>
    %64 = arith.addf %60, %63 : vector<8x32xf32>
    %c1_47 = arith.constant 1 : index
    %c0_48 = arith.constant 0 : index
    %c0_49 = arith.constant 0 : index
    %65 = vector.load %arg4[%c1_47, %c0_48, %c0_49] : memref<4x128x32xbf16, #tpu.memory_space<vmem>>, vector<1x128x32xbf16>
    %66 = vector.shape_cast %65 : vector<1x128x32xbf16> to vector<128x32xbf16>
    %cst_50 = arith.constant dense<0.000000e+00> : vector<8x32xf32>
    %67 = tpu.matmul %2, %66, %cst_50 {dimension_numbers = #tpu.dot_dimension_numbers<[1], [0], [0], [1], [0, 0, 1, 1], [], []>} : vector<8x128xbf16>, vector<128x32xbf16>, vector<8x32xf32> -> vector<8x32xf32>
    %c1_51 = arith.constant 1 : index
    %c0_52 = arith.constant 0 : index
    %c0_53 = arith.constant 0 : index
    %68 = vector.load %arg7[%c1_51, %c0_52, %c0_53] : memref<4x1x32xf32, #tpu.memory_space<vmem>>, vector<1x1x32xf32>
    %69 = vector.shape_cast %68 : vector<1x1x32xf32> to vector<1x32xf32>
    %70 = vector.broadcast %69 : vector<1x32xf32> to vector<8x32xf32>
    %71 = arith.addf %67, %70 : vector<8x32xf32>
    %72 = arith.truncf %57 : vector<8x32xf32> to vector<8x32xbf16>
    %73 = arith.truncf %64 : vector<8x32xf32> to vector<8x32xbf16>
    %cst_54 = arith.constant dense<0.000000e+00> : vector<8x8xf32>
    %74 = tpu.matmul %72, %73, %cst_54 {dimension_numbers = #tpu.dot_dimension_numbers<[1], [1], [0], [0], [0, 0, 1, 0], [], []>} : vector<8x32xbf16>, vector<8x32xbf16>, vector<8x8xf32> -> vector<8x8xf32>
    %cst_55 = arith.constant 0.176776692 : f32
    %75 = vector.broadcast %cst_55 : f32 to vector<8x8xf32>
    %76 = arith.mulf %74, %75 : vector<8x8xf32>
    %cst_56 = arith.constant dense<0xFF800000> : vector<8xf32>
    %77 = vector.multi_reduction <maximumf>, %76, %cst_56 [1] : vector<8x8xf32> to vector<8xf32>
    %78 = vector.shape_cast %77 : vector<8xf32> to vector<8x1xf32>
    %79 = vector.broadcast %78 : vector<8x1xf32> to vector<8x8xf32>
    %80 = arith.subf %76, %79 : vector<8x8xf32>
    %81 = math.exp %80 : vector<8x8xf32>
    %cst_57 = arith.constant dense<0.000000e+00> : vector<8xf32>
    %82 = vector.multi_reduction <add>, %81, %cst_57 [1] : vector<8x8xf32> to vector<8xf32>
    %83 = vector.shape_cast %82 : vector<8xf32> to vector<8x1xf32>
    %84 = tpu.reciprocal %83 {approx = true} : vector<8x1xf32> -> vector<8x1xf32>
    %85 = vector.broadcast %84 : vector<8x1xf32> to vector<8x8xf32>
    %86 = arith.mulf %81, %85 : vector<8x8xf32>
    %87 = arith.truncf %86 : vector<8x8xf32> to vector<8x8xbf16>
    %88 = arith.truncf %71 : vector<8x32xf32> to vector<8x32xbf16>
    %cst_58 = arith.constant dense<0.000000e+00> : vector<8x32xf32>
    %89 = tpu.matmul %87, %88, %cst_58 {dimension_numbers = #tpu.dot_dimension_numbers<[1], [0], [0], [1], [0, 0, 1, 1], [], []>} : vector<8x8xbf16>, vector<8x32xbf16>, vector<8x32xf32> -> vector<8x32xf32>
    %c1_59 = arith.constant 1 : index
    %c0_60 = arith.constant 0 : index
    %c0_61 = arith.constant 0 : index
    %90 = vector.load %arg8[%c1_59, %c0_60, %c0_61] : memref<4x32x128xbf16, #tpu.memory_space<vmem>>, vector<1x32x128xbf16>
    %91 = vector.shape_cast %90 : vector<1x32x128xbf16> to vector<32x128xbf16>
    %92 = arith.truncf %89 : vector<8x32xf32> to vector<8x32xbf16>
    %cst_62 = arith.constant dense<0.000000e+00> : vector<8x128xf32>
    %93 = tpu.matmul %92, %91, %cst_62 {dimension_numbers = #tpu.dot_dimension_numbers<[1], [0], [0], [1], [0, 0, 1, 1], [], []>} : vector<8x32xbf16>, vector<32x128xbf16>, vector<8x128xf32> -> vector<8x128xf32>
    %94 = arith.addf %50, %93 : vector<8x128xf32>
    %c2 = arith.constant 2 : index
    %c0_63 = arith.constant 0 : index
    %c0_64 = arith.constant 0 : index
    %95 = vector.load %arg2[%c2, %c0_63, %c0_64] : memref<4x128x32xbf16, #tpu.memory_space<vmem>>, vector<1x128x32xbf16>
    %96 = vector.shape_cast %95 : vector<1x128x32xbf16> to vector<128x32xbf16>
    %cst_65 = arith.constant dense<0.000000e+00> : vector<8x32xf32>
    %97 = tpu.matmul %2, %96, %cst_65 {dimension_numbers = #tpu.dot_dimension_numbers<[1], [0], [0], [1], [0, 0, 1, 1], [], []>} : vector<8x128xbf16>, vector<128x32xbf16>, vector<8x32xf32> -> vector<8x32xf32>
    %c2_66 = arith.constant 2 : index
    %c0_67 = arith.constant 0 : index
    %c0_68 = arith.constant 0 : index
    %98 = vector.load %arg5[%c2_66, %c0_67, %c0_68] : memref<4x1x32xf32, #tpu.memory_space<vmem>>, vector<1x1x32xf32>
    %99 = vector.shape_cast %98 : vector<1x1x32xf32> to vector<1x32xf32>
    %100 = vector.broadcast %99 : vector<1x32xf32> to vector<8x32xf32>
    %101 = arith.addf %97, %100 : vector<8x32xf32>
    %c2_69 = arith.constant 2 : index
    %c0_70 = arith.constant 0 : index
    %c0_71 = arith.constant 0 : index
    %102 = vector.load %arg3[%c2_69, %c0_70, %c0_71] : memref<4x128x32xbf16, #tpu.memory_space<vmem>>, vector<1x128x32xbf16>
    %103 = vector.shape_cast %102 : vector<1x128x32xbf16> to vector<128x32xbf16>
    %cst_72 = arith.constant dense<0.000000e+00> : vector<8x32xf32>
    %104 = tpu.matmul %2, %103, %cst_72 {dimension_numbers = #tpu.dot_dimension_numbers<[1], [0], [0], [1], [0, 0, 1, 1], [], []>} : vector<8x128xbf16>, vector<128x32xbf16>, vector<8x32xf32> -> vector<8x32xf32>
    %c2_73 = arith.constant 2 : index
    %c0_74 = arith.constant 0 : index
    %c0_75 = arith.constant 0 : index
    %105 = vector.load %arg6[%c2_73, %c0_74, %c0_75] : memref<4x1x32xf32, #tpu.memory_space<vmem>>, vector<1x1x32xf32>
    %106 = vector.shape_cast %105 : vector<1x1x32xf32> to vector<1x32xf32>
    %107 = vector.broadcast %106 : vector<1x32xf32> to vector<8x32xf32>
    %108 = arith.addf %104, %107 : vector<8x32xf32>
    %c2_76 = arith.constant 2 : index
    %c0_77 = arith.constant 0 : index
    %c0_78 = arith.constant 0 : index
    %109 = vector.load %arg4[%c2_76, %c0_77, %c0_78] : memref<4x128x32xbf16, #tpu.memory_space<vmem>>, vector<1x128x32xbf16>
    %110 = vector.shape_cast %109 : vector<1x128x32xbf16> to vector<128x32xbf16>
    %cst_79 = arith.constant dense<0.000000e+00> : vector<8x32xf32>
    %111 = tpu.matmul %2, %110, %cst_79 {dimension_numbers = #tpu.dot_dimension_numbers<[1], [0], [0], [1], [0, 0, 1, 1], [], []>} : vector<8x128xbf16>, vector<128x32xbf16>, vector<8x32xf32> -> vector<8x32xf32>
    %c2_80 = arith.constant 2 : index
    %c0_81 = arith.constant 0 : index
    %c0_82 = arith.constant 0 : index
    %112 = vector.load %arg7[%c2_80, %c0_81, %c0_82] : memref<4x1x32xf32, #tpu.memory_space<vmem>>, vector<1x1x32xf32>
    %113 = vector.shape_cast %112 : vector<1x1x32xf32> to vector<1x32xf32>
    %114 = vector.broadcast %113 : vector<1x32xf32> to vector<8x32xf32>
    %115 = arith.addf %111, %114 : vector<8x32xf32>
    %116 = arith.truncf %101 : vector<8x32xf32> to vector<8x32xbf16>
    %117 = arith.truncf %108 : vector<8x32xf32> to vector<8x32xbf16>
    %cst_83 = arith.constant dense<0.000000e+00> : vector<8x8xf32>
    %118 = tpu.matmul %116, %117, %cst_83 {dimension_numbers = #tpu.dot_dimension_numbers<[1], [1], [0], [0], [0, 0, 1, 0], [], []>} : vector<8x32xbf16>, vector<8x32xbf16>, vector<8x8xf32> -> vector<8x8xf32>
    %cst_84 = arith.constant 0.176776692 : f32
    %119 = vector.broadcast %cst_84 : f32 to vector<8x8xf32>
    %120 = arith.mulf %118, %119 : vector<8x8xf32>
    %cst_85 = arith.constant dense<0xFF800000> : vector<8xf32>
    %121 = vector.multi_reduction <maximumf>, %120, %cst_85 [1] : vector<8x8xf32> to vector<8xf32>
    %122 = vector.shape_cast %121 : vector<8xf32> to vector<8x1xf32>
    %123 = vector.broadcast %122 : vector<8x1xf32> to vector<8x8xf32>
    %124 = arith.subf %120, %123 : vector<8x8xf32>
    %125 = math.exp %124 : vector<8x8xf32>
    %cst_86 = arith.constant dense<0.000000e+00> : vector<8xf32>
    %126 = vector.multi_reduction <add>, %125, %cst_86 [1] : vector<8x8xf32> to vector<8xf32>
    %127 = vector.shape_cast %126 : vector<8xf32> to vector<8x1xf32>
    %128 = tpu.reciprocal %127 {approx = true} : vector<8x1xf32> -> vector<8x1xf32>
    %129 = vector.broadcast %128 : vector<8x1xf32> to vector<8x8xf32>
    %130 = arith.mulf %125, %129 : vector<8x8xf32>
    %131 = arith.truncf %130 : vector<8x8xf32> to vector<8x8xbf16>
    %132 = arith.truncf %115 : vector<8x32xf32> to vector<8x32xbf16>
    %cst_87 = arith.constant dense<0.000000e+00> : vector<8x32xf32>
    %133 = tpu.matmul %131, %132, %cst_87 {dimension_numbers = #tpu.dot_dimension_numbers<[1], [0], [0], [1], [0, 0, 1, 1], [], []>} : vector<8x8xbf16>, vector<8x32xbf16>, vector<8x32xf32> -> vector<8x32xf32>
    %c2_88 = arith.constant 2 : index
    %c0_89 = arith.constant 0 : index
    %c0_90 = arith.constant 0 : index
    %134 = vector.load %arg8[%c2_88, %c0_89, %c0_90] : memref<4x32x128xbf16, #tpu.memory_space<vmem>>, vector<1x32x128xbf16>
    %135 = vector.shape_cast %134 : vector<1x32x128xbf16> to vector<32x128xbf16>
    %136 = arith.truncf %133 : vector<8x32xf32> to vector<8x32xbf16>
    %cst_91 = arith.constant dense<0.000000e+00> : vector<8x128xf32>
    %137 = tpu.matmul %136, %135, %cst_91 {dimension_numbers = #tpu.dot_dimension_numbers<[1], [0], [0], [1], [0, 0, 1, 1], [], []>} : vector<8x32xbf16>, vector<32x128xbf16>, vector<8x128xf32> -> vector<8x128xf32>
    %138 = arith.addf %94, %137 : vector<8x128xf32>
    %c3 = arith.constant 3 : index
    %c0_92 = arith.constant 0 : index
    %c0_93 = arith.constant 0 : index
    %139 = vector.load %arg2[%c3, %c0_92, %c0_93] : memref<4x128x32xbf16, #tpu.memory_space<vmem>>, vector<1x128x32xbf16>
    %140 = vector.shape_cast %139 : vector<1x128x32xbf16> to vector<128x32xbf16>
    %cst_94 = arith.constant dense<0.000000e+00> : vector<8x32xf32>
    %141 = tpu.matmul %2, %140, %cst_94 {dimension_numbers = #tpu.dot_dimension_numbers<[1], [0], [0], [1], [0, 0, 1, 1], [], []>} : vector<8x128xbf16>, vector<128x32xbf16>, vector<8x32xf32> -> vector<8x32xf32>
    %c3_95 = arith.constant 3 : index
    %c0_96 = arith.constant 0 : index
    %c0_97 = arith.constant 0 : index
    %142 = vector.load %arg5[%c3_95, %c0_96, %c0_97] : memref<4x1x32xf32, #tpu.memory_space<vmem>>, vector<1x1x32xf32>
    %143 = vector.shape_cast %142 : vector<1x1x32xf32> to vector<1x32xf32>
    %144 = vector.broadcast %143 : vector<1x32xf32> to vector<8x32xf32>
    %145 = arith.addf %141, %144 : vector<8x32xf32>
    %c3_98 = arith.constant 3 : index
    %c0_99 = arith.constant 0 : index
    %c0_100 = arith.constant 0 : index
    %146 = vector.load %arg3[%c3_98, %c0_99, %c0_100] : memref<4x128x32xbf16, #tpu.memory_space<vmem>>, vector<1x128x32xbf16>
    %147 = vector.shape_cast %146 : vector<1x128x32xbf16> to vector<128x32xbf16>
    %cst_101 = arith.constant dense<0.000000e+00> : vector<8x32xf32>
    %148 = tpu.matmul %2, %147, %cst_101 {dimension_numbers = #tpu.dot_dimension_numbers<[1], [0], [0], [1], [0, 0, 1, 1], [], []>} : vector<8x128xbf16>, vector<128x32xbf16>, vector<8x32xf32> -> vector<8x32xf32>
    %c3_102 = arith.constant 3 : index
    %c0_103 = arith.constant 0 : index
    %c0_104 = arith.constant 0 : index
    %149 = vector.load %arg6[%c3_102, %c0_103, %c0_104] : memref<4x1x32xf32, #tpu.memory_space<vmem>>, vector<1x1x32xf32>
    %150 = vector.shape_cast %149 : vector<1x1x32xf32> to vector<1x32xf32>
    %151 = vector.broadcast %150 : vector<1x32xf32> to vector<8x32xf32>
    %152 = arith.addf %148, %151 : vector<8x32xf32>
    %c3_105 = arith.constant 3 : index
    %c0_106 = arith.constant 0 : index
    %c0_107 = arith.constant 0 : index
    %153 = vector.load %arg4[%c3_105, %c0_106, %c0_107] : memref<4x128x32xbf16, #tpu.memory_space<vmem>>, vector<1x128x32xbf16>
    %154 = vector.shape_cast %153 : vector<1x128x32xbf16> to vector<128x32xbf16>
    %cst_108 = arith.constant dense<0.000000e+00> : vector<8x32xf32>
    %155 = tpu.matmul %2, %154, %cst_108 {dimension_numbers = #tpu.dot_dimension_numbers<[1], [0], [0], [1], [0, 0, 1, 1], [], []>} : vector<8x128xbf16>, vector<128x32xbf16>, vector<8x32xf32> -> vector<8x32xf32>
    %c3_109 = arith.constant 3 : index
    %c0_110 = arith.constant 0 : index
    %c0_111 = arith.constant 0 : index
    %156 = vector.load %arg7[%c3_109, %c0_110, %c0_111] : memref<4x1x32xf32, #tpu.memory_space<vmem>>, vector<1x1x32xf32>
    %157 = vector.shape_cast %156 : vector<1x1x32xf32> to vector<1x32xf32>
    %158 = vector.broadcast %157 : vector<1x32xf32> to vector<8x32xf32>
    %159 = arith.addf %155, %158 : vector<8x32xf32>
    %160 = arith.truncf %145 : vector<8x32xf32> to vector<8x32xbf16>
    %161 = arith.truncf %152 : vector<8x32xf32> to vector<8x32xbf16>
    %cst_112 = arith.constant dense<0.000000e+00> : vector<8x8xf32>
    %162 = tpu.matmul %160, %161, %cst_112 {dimension_numbers = #tpu.dot_dimension_numbers<[1], [1], [0], [0], [0, 0, 1, 0], [], []>} : vector<8x32xbf16>, vector<8x32xbf16>, vector<8x8xf32> -> vector<8x8xf32>
    %cst_113 = arith.constant 0.176776692 : f32
    %163 = vector.broadcast %cst_113 : f32 to vector<8x8xf32>
    %164 = arith.mulf %162, %163 : vector<8x8xf32>
    %cst_114 = arith.constant dense<0xFF800000> : vector<8xf32>
    %165 = vector.multi_reduction <maximumf>, %164, %cst_114 [1] : vector<8x8xf32> to vector<8xf32>
    %166 = vector.shape_cast %165 : vector<8xf32> to vector<8x1xf32>
    %167 = vector.broadcast %166 : vector<8x1xf32> to vector<8x8xf32>
    %168 = arith.subf %164, %167 : vector<8x8xf32>
    %169 = math.exp %168 : vector<8x8xf32>
    %cst_115 = arith.constant dense<0.000000e+00> : vector<8xf32>
    %170 = vector.multi_reduction <add>, %169, %cst_115 [1] : vector<8x8xf32> to vector<8xf32>
    %171 = vector.shape_cast %170 : vector<8xf32> to vector<8x1xf32>
    %172 = tpu.reciprocal %171 {approx = true} : vector<8x1xf32> -> vector<8x1xf32>
    %173 = vector.broadcast %172 : vector<8x1xf32> to vector<8x8xf32>
    %174 = arith.mulf %169, %173 : vector<8x8xf32>
    %175 = arith.truncf %174 : vector<8x8xf32> to vector<8x8xbf16>
    %176 = arith.truncf %159 : vector<8x32xf32> to vector<8x32xbf16>
    %cst_116 = arith.constant dense<0.000000e+00> : vector<8x32xf32>
    %177 = tpu.matmul %175, %176, %cst_116 {dimension_numbers = #tpu.dot_dimension_numbers<[1], [0], [0], [1], [0, 0, 1, 1], [], []>} : vector<8x8xbf16>, vector<8x32xbf16>, vector<8x32xf32> -> vector<8x32xf32>
    %c3_117 = arith.constant 3 : index
    %c0_118 = arith.constant 0 : index
    %c0_119 = arith.constant 0 : index
    %178 = vector.load %arg8[%c3_117, %c0_118, %c0_119] : memref<4x32x128xbf16, #tpu.memory_space<vmem>>, vector<1x32x128xbf16>
    %179 = vector.shape_cast %178 : vector<1x32x128xbf16> to vector<32x128xbf16>
    %180 = arith.truncf %177 : vector<8x32xf32> to vector<8x32xbf16>
    %cst_120 = arith.constant dense<0.000000e+00> : vector<8x128xf32>
    %181 = tpu.matmul %180, %179, %cst_120 {dimension_numbers = #tpu.dot_dimension_numbers<[1], [0], [0], [1], [0, 0, 1, 1], [], []>} : vector<8x32xbf16>, vector<32x128xbf16>, vector<8x128xf32> -> vector<8x128xf32>
    %182 = arith.addf %138, %181 : vector<8x128xf32>
    %183 = arith.addf %1, %182 : vector<8x128xf32>
    %c0_121 = arith.constant 0 : index
    %c0_122 = arith.constant 0 : index
    %184 = vector.load %arg10[%c0_121, %c0_122] : memref<1x128xf32, #tpu.memory_space<vmem>>, vector<1x128xf32>
    %c0_123 = arith.constant 0 : index
    %c0_124 = arith.constant 0 : index
    %185 = vector.load %arg11[%c0_123, %c0_124] : memref<1x128xf32, #tpu.memory_space<vmem>>, vector<1x128xf32>
    %cst_125 = arith.constant dense<0.000000e+00> : vector<8xf32>
    %186 = vector.multi_reduction <add>, %183, %cst_125 [1] : vector<8x128xf32> to vector<8xf32>
    %187 = vector.shape_cast %186 : vector<8xf32> to vector<8x1xf32>
    %cst_126 = arith.constant 1.280000e+02 : f32
    %188 = vector.broadcast %cst_126 : f32 to vector<8x1xf32>
    %189 = arith.divf %187, %188 : vector<8x1xf32>
    %190 = vector.broadcast %189 : vector<8x1xf32> to vector<8x128xf32>
    %191 = arith.subf %183, %190 : vector<8x128xf32>
    %192 = arith.mulf %191, %191 : vector<8x128xf32>
    %cst_127 = arith.constant dense<0.000000e+00> : vector<8xf32>
    %193 = vector.multi_reduction <add>, %192, %cst_127 [1] : vector<8x128xf32> to vector<8xf32>
    %194 = vector.shape_cast %193 : vector<8xf32> to vector<8x1xf32>
    %cst_128 = arith.constant 1.280000e+02 : f32
    %195 = vector.broadcast %cst_128 : f32 to vector<8x1xf32>
    %196 = arith.divf %194, %195 : vector<8x1xf32>
    %197 = vector.broadcast %189 : vector<8x1xf32> to vector<8x128xf32>
    %198 = arith.subf %183, %197 : vector<8x128xf32>
    %cst_129 = arith.constant 9.99999974E-6 : f32
    %199 = vector.broadcast %cst_129 : f32 to vector<8x1xf32>
    %200 = arith.addf %196, %199 : vector<8x1xf32>
    %201 = math.rsqrt %200 : vector<8x1xf32>
    %202 = vector.broadcast %201 : vector<8x1xf32> to vector<8x128xf32>
    %203 = arith.mulf %198, %202 : vector<8x128xf32>
    %204 = vector.broadcast %184 : vector<1x128xf32> to vector<8x128xf32>
    %205 = arith.mulf %203, %204 : vector<8x128xf32>
    %206 = vector.broadcast %185 : vector<1x128xf32> to vector<8x128xf32>
    %207 = arith.addf %205, %206 : vector<8x128xf32>
    %c0_130 = arith.constant 0 : index
    %c0_131 = arith.constant 0 : index
    %208 = vector.load %arg12[%c0_130, %c0_131] : memref<128x64xbf16, #tpu.memory_space<vmem>>, vector<128x64xbf16>
    %209 = arith.truncf %207 : vector<8x128xf32> to vector<8x128xbf16>
    %cst_132 = arith.constant dense<0.000000e+00> : vector<8x64xf32>
    %210 = tpu.matmul %209, %208, %cst_132 {dimension_numbers = #tpu.dot_dimension_numbers<[1], [0], [0], [1], [0, 0, 1, 1], [], []>} : vector<8x128xbf16>, vector<128x64xbf16>, vector<8x64xf32> -> vector<8x64xf32>
    %c0_133 = arith.constant 0 : index
    %c0_134 = arith.constant 0 : index
    %211 = vector.load %arg13[%c0_133, %c0_134] : memref<1x64xf32, #tpu.memory_space<vmem>>, vector<1x64xf32>
    %212 = vector.broadcast %211 : vector<1x64xf32> to vector<8x64xf32>
    %213 = arith.addf %210, %212 : vector<8x64xf32>
    %cst_135 = arith.constant 5.000000e-01 : f32
    %214 = vector.broadcast %cst_135 : f32 to vector<8x64xf32>
    %215 = arith.mulf %214, %213 : vector<8x64xf32>
    %cst_136 = arith.constant 0.707106769 : f32
    %216 = vector.broadcast %cst_136 : f32 to vector<8x64xf32>
    %217 = arith.mulf %213, %216 : vector<8x64xf32>
    %218 = math.erf %217 : vector<8x64xf32>
    %cst_137 = arith.constant 1.000000e+00 : f32
    %219 = vector.broadcast %cst_137 : f32 to vector<8x64xf32>
    %220 = arith.addf %219, %218 : vector<8x64xf32>
    %221 = arith.mulf %215, %220 : vector<8x64xf32>
    %c0_138 = arith.constant 0 : index
    %c0_139 = arith.constant 0 : index
    %222 = vector.load %arg14[%c0_138, %c0_139] : memref<64x128xbf16, #tpu.memory_space<vmem>>, vector<64x128xbf16>
    %223 = arith.truncf %221 : vector<8x64xf32> to vector<8x64xbf16>
    %cst_140 = arith.constant dense<0.000000e+00> : vector<8x128xf32>
    %224 = tpu.matmul %223, %222, %cst_140 {dimension_numbers = #tpu.dot_dimension_numbers<[1], [0], [0], [1], [0, 0, 1, 1], [], []>} : vector<8x64xbf16>, vector<64x128xbf16>, vector<8x128xf32> -> vector<8x128xf32>
    %c0_141 = arith.constant 0 : index
    %c0_142 = arith.constant 0 : index
    %225 = vector.load %arg15[%c0_141, %c0_142] : memref<1x128xf32, #tpu.memory_space<vmem>>, vector<1x128xf32>
    %226 = vector.broadcast %225 : vector<1x128xf32> to vector<8x128xf32>
    %227 = arith.addf %224, %226 : vector<8x128xf32>
    %228 = arith.addf %207, %227 : vector<8x128xf32>
    %c0_143 = arith.constant 0 : index
    %c0_144 = arith.constant 0 : index
    %229 = vector.load %arg16[%c0_143, %c0_144] : memref<1x128xf32, #tpu.memory_space<vmem>>, vector<1x128xf32>
    %c0_145 = arith.constant 0 : index
    %c0_146 = arith.constant 0 : index
    %230 = vector.load %arg17[%c0_145, %c0_146] : memref<1x128xf32, #tpu.memory_space<vmem>>, vector<1x128xf32>
    %cst_147 = arith.constant dense<0.000000e+00> : vector<8xf32>
    %231 = vector.multi_reduction <add>, %228, %cst_147 [1] : vector<8x128xf32> to vector<8xf32>
    %232 = vector.shape_cast %231 : vector<8xf32> to vector<8x1xf32>
    %cst_148 = arith.constant 1.280000e+02 : f32
    %233 = vector.broadcast %cst_148 : f32 to vector<8x1xf32>
    %234 = arith.divf %232, %233 : vector<8x1xf32>
    %235 = vector.broadcast %234 : vector<8x1xf32> to vector<8x128xf32>
    %236 = arith.subf %228, %235 : vector<8x128xf32>
    %237 = arith.mulf %236, %236 : vector<8x128xf32>
    %cst_149 = arith.constant dense<0.000000e+00> : vector<8xf32>
    %238 = vector.multi_reduction <add>, %237, %cst_149 [1] : vector<8x128xf32> to vector<8xf32>
    %239 = vector.shape_cast %238 : vector<8xf32> to vector<8x1xf32>
    %cst_150 = arith.constant 1.280000e+02 : f32
    %240 = vector.broadcast %cst_150 : f32 to vector<8x1xf32>
    %241 = arith.divf %239, %240 : vector<8x1xf32>
    %242 = vector.broadcast %234 : vector<8x1xf32> to vector<8x128xf32>
    %243 = arith.subf %228, %242 : vector<8x128xf32>
    %cst_151 = arith.constant 9.99999974E-6 : f32
    %244 = vector.broadcast %cst_151 : f32 to vector<8x1xf32>
    %245 = arith.addf %241, %244 : vector<8x1xf32>
    %246 = math.rsqrt %245 : vector<8x1xf32>
    %247 = vector.broadcast %246 : vector<8x1xf32> to vector<8x128xf32>
    %248 = arith.mulf %243, %247 : vector<8x128xf32>
    %249 = vector.broadcast %229 : vector<1x128xf32> to vector<8x128xf32>
    %250 = arith.mulf %248, %249 : vector<8x128xf32>
    %251 = vector.broadcast %230 : vector<1x128xf32> to vector<8x128xf32>
    %252 = arith.addf %250, %251 : vector<8x128xf32>
    %c0_152 = arith.constant 0 : index
    %c0_153 = arith.constant 0 : index
    %c0_154 = arith.constant 0 : index
    %253 = vector.load %arg18[%c0_152, %c0_153, %c0_154] : memref<1x8x128xf32, #tpu.memory_space<vmem>>, vector<1x8x128xf32>
    %254 = vector.shape_cast %253 : vector<1x8x128xf32> to vector<8x128xf32>
    %255 = vector.shape_cast %252 : vector<8x128xf32> to vector<1x8x128xf32>
    tpu.vector_store %arg18[%c0_152, %c0_153, %c0_154], %255 {strides = array<i32>} : memref<1x8x128xf32, #tpu.memory_space<vmem>>, vector<1x8x128xf32>,
    return
  }
  func.func @transform_0(%arg0: i32) -> (i32, i32, i32) {
    %c0_i32 = arith.constant 0 : i32
    %c0_i32_0 = arith.constant 0 : i32
    %c0_i32_1 = arith.constant 0 : i32
    return %arg0, %c0_i32, %c0_i32_0 : i32, i32, i32
  }
  func.func @transform_1(%arg0: i32) -> (i32, i32, i32) {
    %c0_i32 = arith.constant 0 : i32
    %c0_i32_0 = arith.constant 0 : i32
    %c0_i32_1 = arith.constant 0 : i32
    %c0_i32_2 = arith.constant 0 : i32
    return %c0_i32, %c0_i32_0, %c0_i32_1 : i32, i32, i32
  }
  func.func @transform_2(%arg0: i32) -> (i32, i32, i32) {
    %c0_i32 = arith.constant 0 : i32
    %c0_i32_0 = arith.constant 0 : i32
    %c0_i32_1 = arith.constant 0 : i32
    %c0_i32_2 = arith.constant 0 : i32
    return %c0_i32, %c0_i32_0, %c0_i32_1 : i32, i32, i32
  }
  func.func @transform_3(%arg0: i32) -> (i32, i32, i32) {
    %c0_i32 = arith.constant 0 : i32
    %c0_i32_0 = arith.constant 0 : i32
    %c0_i32_1 = arith.constant 0 : i32
    %c0_i32_2 = arith.constant 0 : i32
    return %c0_i32, %c0_i32_0, %c0_i32_1 : i32, i32, i32
  }
  func.func @transform_4(%arg0: i32) -> (i32, i32, i32) {
    %c0_i32 = arith.constant 0 : i32
    %c0_i32_0 = arith.constant 0 : i32
    %c0_i32_1 = arith.constant 0 : i32
    %c0_i32_2 = arith.constant 0 : i32
    return %c0_i32, %c0_i32_0, %c0_i32_1 : i32, i32, i32
  }
  func.func @transform_5(%arg0: i32) -> (i32, i32, i32) {
    %c0_i32 = arith.constant 0 : i32
    %c0_i32_0 = arith.constant 0 : i32
    %c0_i32_1 = arith.constant 0 : i32
    %c0_i32_2 = arith.constant 0 : i32
    return %c0_i32, %c0_i32_0, %c0_i32_1 : i32, i32, i32
  }
  func.func @transform_6(%arg0: i32) -> (i32, i32, i32) {
    %c0_i32 = arith.constant 0 : i32
    %c0_i32_0 = arith.constant 0 : i32
    %c0_i32_1 = arith.constant 0 : i32
    %c0_i32_2 = arith.constant 0 : i32
    return %c0_i32, %c0_i32_0, %c0_i32_1 : i32, i32, i32
  }
  func.func @transform_7(%arg0: i32) -> (i32, i32, i32) {
    %c0_i32 = arith.constant 0 : i32
    %c0_i32_0 = arith.constant 0 : i32
    %c0_i32_1 = arith.constant 0 : i32
    %c0_i32_2 = arith.constant 0 : i32
    return %c0_i32, %c0_i32_0, %c0_i32_1 : i32, i32, i32
  }
  func.func @transform_8(%arg0: i32) -> (i32, i32) {
    %c0_i32 = arith.constant 0 : i32
    %c0_i32_0 = arith.constant 0 : i32
    %c0_i32_1 = arith.constant 0 : i32
    return %c0_i32, %c0_i32_0 : i32, i32
  }
  func.func @transform_9(%arg0: i32) -> (i32, i32) {
    %c0_i32 = arith.constant 0 : i32
    %c0_i32_0 = arith.constant 0 : i32
    %c0_i32_1 = arith.constant 0 : i32
    return %c0_i32, %c0_i32_0 : i32, i32
  }
  func.func @transform_10(%arg0: i32) -> (i32, i32) {
    %c0_i32 = arith.constant 0 : i32
    %c0_i32_0 = arith.constant 0 : i32
    %c0_i32_1 = arith.constant 0 : i32
    return %c0_i32, %c0_i32_0 : i32, i32
  }
  func.func @transform_11(%arg0: i32) -> (i32, i32) {
    %c0_i32 = arith.constant 0 : i32
    %c0_i32_0 = arith.constant 0 : i32
    %c0_i32_1 = arith.constant 0 : i32
    return %c0_i32, %c0_i32_0 : i32, i32
  }
  func.func @transform_12(%arg0: i32) -> (i32, i32) {
    %c0_i32 = arith.constant 0 : i32
    %c0_i32_0 = arith.constant 0 : i32
    %c0_i32_1 = arith.constant 0 : i32
    return %c0_i32, %c0_i32_0 : i32, i32
  }
  func.func @transform_13(%arg0: i32) -> (i32, i32) {
    %c0_i32 = arith.constant 0 : i32
    %c0_i32_0 = arith.constant 0 : i32
    %c0_i32_1 = arith.constant 0 : i32
    return %c0_i32, %c0_i32_0 : i32, i32
  }
  func.func @transform_14(%arg0: i32) -> (i32, i32) {
    %c0_i32 = arith.constant 0 : i32
    %c0_i32_0 = arith.constant 0 : i32
    %c0_i32_1 = arith.constant 0 : i32
    return %c0_i32, %c0_i32_0 : i32, i32
  }
  func.func @transform_15(%arg0: i32) -> (i32, i32) {
    %c0_i32 = arith.constant 0 : i32
    %c0_i32_0 = arith.constant 0 : i32
    %c0_i32_1 = arith.constant 0 : i32
    return %c0_i32, %c0_i32_0 : i32, i32
  }
  func.func @transform_16(%arg0: i32) -> (i32, i32) {
    %c0_i32 = arith.constant 0 : i32
    %c0_i32_0 = arith.constant 0 : i32
    %c0_i32_1 = arith.constant 0 : i32
    return %c0_i32, %c0_i32_0 : i32, i32
  }
  func.func @transform_17(%arg0: i32) -> (i32, i32, i32) {
    %c0_i32 = arith.constant 0 : i32
    %c0_i32_0 = arith.constant 0 : i32
    %c0_i32_1 = arith.constant 0 : i32
    return %arg0, %c0_i32, %c0_i32_0 : i32, i32, i32
  }
}

module attributes {stable_mosaic.version = 11 : i64} {
  func.func @_layernorm_kernel(%arg0: i32, %arg1: memref<2x128xf32, #tpu.memory_space<vmem>>, %arg2: memref<1x128xf32, #tpu.memory_space<vmem>>, %arg3: memref<1x128xf32, #tpu.memory_space<vmem>>, %arg4: memref<2x128xf32, #tpu.memory_space<vmem>>) attributes {dimension_semantics = [#tpu.dimension_semantics<parallel>], iteration_bounds = array<i64: 1>, scalar_prefetch = 0 : i64, scratch_operands = 0 : i64, tpu.core_type = #tpu.core_type<tc>, window_params = [{transform_indices = @transform_0, window_bounds = array<i64: 2, 128>}, {pipeline_mode = #tpu.pipeline_mode<synchronous>, transform_indices = @transform_1, window_bounds = array<i64: 1, 128>}, {pipeline_mode = #tpu.pipeline_mode<synchronous>, transform_indices = @transform_2, window_bounds = array<i64: 1, 128>}, {transform_indices = @transform_3, window_bounds = array<i64: 2, 128>}]} {
    %c0 = arith.constant 0 : index
    %c0_0 = arith.constant 0 : index
    %0 = vector.load %arg1[%c0, %c0_0] : memref<2x128xf32, #tpu.memory_space<vmem>>, vector<2x128xf32>
    %c0_1 = arith.constant 0 : index
    %c0_2 = arith.constant 0 : index
    %1 = vector.load %arg2[%c0_1, %c0_2] : memref<1x128xf32, #tpu.memory_space<vmem>>, vector<1x128xf32>
    %c0_3 = arith.constant 0 : index
    %c0_4 = arith.constant 0 : index
    %2 = vector.load %arg3[%c0_3, %c0_4] : memref<1x128xf32, #tpu.memory_space<vmem>>, vector<1x128xf32>
    %cst = arith.constant dense<0.000000e+00> : vector<2xf32>
    %3 = vector.multi_reduction <add>, %0, %cst [1] : vector<2x128xf32> to vector<2xf32>
    %4 = vector.shape_cast %3 : vector<2xf32> to vector<2x1xf32>
    %cst_5 = arith.constant 1.280000e+02 : f32
    %5 = vector.broadcast %cst_5 : f32 to vector<2x1xf32>
    %6 = arith.divf %4, %5 : vector<2x1xf32>
    %7 = vector.broadcast %6 : vector<2x1xf32> to vector<2x128xf32>
    %8 = arith.subf %0, %7 : vector<2x128xf32>
    %9 = arith.mulf %8, %8 : vector<2x128xf32>
    %cst_6 = arith.constant dense<0.000000e+00> : vector<2xf32>
    %10 = vector.multi_reduction <add>, %9, %cst_6 [1] : vector<2x128xf32> to vector<2xf32>
    %11 = vector.shape_cast %10 : vector<2xf32> to vector<2x1xf32>
    %cst_7 = arith.constant 1.280000e+02 : f32
    %12 = vector.broadcast %cst_7 : f32 to vector<2x1xf32>
    %13 = arith.divf %11, %12 : vector<2x1xf32>
    %14 = vector.broadcast %6 : vector<2x1xf32> to vector<2x128xf32>
    %15 = arith.subf %0, %14 : vector<2x128xf32>
    %cst_8 = arith.constant 9.99999974E-6 : f32
    %16 = vector.broadcast %cst_8 : f32 to vector<2x1xf32>
    %17 = arith.addf %13, %16 : vector<2x1xf32>
    %18 = math.rsqrt %17 : vector<2x1xf32>
    %19 = vector.broadcast %18 : vector<2x1xf32> to vector<2x128xf32>
    %20 = arith.mulf %15, %19 : vector<2x128xf32>
    %21 = vector.broadcast %1 : vector<1x128xf32> to vector<2x128xf32>
    %22 = arith.mulf %20, %21 : vector<2x128xf32>
    %23 = vector.broadcast %2 : vector<1x128xf32> to vector<2x128xf32>
    %24 = arith.addf %22, %23 : vector<2x128xf32>
    %c0_9 = arith.constant 0 : index
    %c0_10 = arith.constant 0 : index
    %25 = vector.load %arg4[%c0_9, %c0_10] : memref<2x128xf32, #tpu.memory_space<vmem>>, vector<2x128xf32>
    tpu.vector_store %arg4[%c0_9, %c0_10], %24 {strides = array<i32>} : memref<2x128xf32, #tpu.memory_space<vmem>>, vector<2x128xf32>,
    return
  }
  func.func @transform_0(%arg0: i32) -> (i32, i32) {
    %c0_i32 = arith.constant 0 : i32
    %c0_i32_0 = arith.constant 0 : i32
    return %arg0, %c0_i32 : i32, i32
  }
  func.func @transform_1(%arg0: i32) -> (i32, i32) {
    %c0_i32 = arith.constant 0 : i32
    %c0_i32_0 = arith.constant 0 : i32
    %c0_i32_1 = arith.constant 0 : i32
    return %c0_i32, %c0_i32_0 : i32, i32
  }
  func.func @transform_2(%arg0: i32) -> (i32, i32) {
    %c0_i32 = arith.constant 0 : i32
    %c0_i32_0 = arith.constant 0 : i32
    %c0_i32_1 = arith.constant 0 : i32
    return %c0_i32, %c0_i32_0 : i32, i32
  }
  func.func @transform_3(%arg0: i32) -> (i32, i32) {
    %c0_i32 = arith.constant 0 : i32
    %c0_i32_0 = arith.constant 0 : i32
    return %arg0, %c0_i32 : i32, i32
  }
}

</mosaic_0001>

<llo_original>
// kernel: funky_forward.6
$region0: #{funky_forward.6}
  #allocation0 [shape = 'u32[]', space=smem, size = 0x4, offset = 0x4, fixed_abs, tag = 'smem constant byte address 0x4 - core index']
  #allocation1 [shape = 'u32[72,128]{1,0:T(1,128)}', space=vmem, size = 0x9000, scoped, tag = 'internal scratch']
  %s0 = inlined_call_operand.vmem [shape: f32[16,21], index: 0, kind: input, shape index: {}]
  %s1 = inlined_call_operand.vmem [shape: bf16[21,128], index: 1, kind: input, shape index: {}]
  %s2 = inlined_call_operand.vmem [shape: f32[1,128], index: 2, kind: input, shape index: {}]
  %s3 = inlined_call_operand.vmem [shape: f32[16,128], index: 3, kind: output, shape index: {}]
  %s4 = sld [smem:[#allocation0]]
  $region22: #{funky_forward.6} parent=0
    _
  %s6 = ssub.s32 1, %s4
  %s7 = scalar_select 0, %s6, %s4
  // Predicated region
  $region2: #{funky_forward.6} parent=0 // pred_check
    _
  $region3: #{funky_forward.6} parent=0 // pred_check_branch
    %9 = sbr.rel (0) target = $region5
  $region4: #{funky_forward.6} parent=0 // pred_region
    _
  $region5: #{funky_forward.6} parent=0 // pred_fallthru
    _
  // Predicated region
  $region6: #{funky_forward.6} parent=0 // pred_check
    _
  $region7: #{funky_forward.6} parent=0 // pred_check_branch
    %11 = sbr.rel (0) target = $region9
  $region8: #{funky_forward.6} parent=0 // pred_region
    _
  $region9: #{funky_forward.6} parent=0 // pred_fallthru
    _
  // Predicated region
  $region10: #{funky_forward.6} parent=0 // pred_check
    _
  $region11: #{funky_forward.6} parent=0 // pred_check_branch
    %13 = sbr.rel (0) target = $region13
  $region12: #{funky_forward.6} parent=0 // pred_region
    _
  $region13: #{funky_forward.6} parent=0 // pred_fallthru
    _
  %v15 = vld [vmem:[%s0] sm:$0xff]
  %v16 = vld [vmem:[%s0 + $0x8] sm:$0xff]
  %v17 = vld [vmem:[%s1] sm:$0xf]
  %v18 = vld [vmem:[%s1 + $0x4] sm:$0xf]
  %v19 = vld [vmem:[%s1 + $0x8] sm:$0x7]
  %v20 = vpack.c.bf16 %v16, %v15
  %v21 = vld [vmem:[%s2] sm:$0x1]
  %v23 = vperm.slane %v21, 0
  %v28 = vunpack.c.l.b16 %v17
  %v29 = vunpack.c.l.b16 %v18
  %v30 = vunpack.c.l.b16 %v19
  %v31 = vpack.c.b16 %v29, %v28
  %v32 = vpack.c.b16 %v30, %v30
  %vm34 = vcmask 171008
  %v36 = vsel %vm34, %v20, 0
  %vm38 = vcmask 1041408
  %vm39 = vcmask 1042432
  %v40 = vsel %vm38, 4294967295, 65535
  %v41 = vsel %vm39, %v40, 0
  %v43 = vand.u32 %v32, %v41
  %45 = vmatpush.bf16.msra.mxu0 0
  %46 = vmatpush.bf16.msra.mxu0 0
  %47 = vmatpush.bf16.msra.mxu0 0
  %48 = vmatpush.bf16.msra.mxu0 0
  %49 = vmatpush.bf16.msra.mxu0 0
  %50 = vmatpush.bf16.msra.mxu0 0
  %51 = vmatpush.bf16.msra.mxu0 %v43
  %52 = vmatpush.bf16.msra.mxu0 %v31
  %53 = vmatmul.bf16.gmra.mxu0 %v36
  %v54 = vpop.f32.mrf.mxu0
  %v55 = vadd.f32 %v23, %v54
  %v56 = vpop.f32.mrf.mxu0
  %v57 = vadd.f32 %v23, %v56
  %58 = vdwg.mxu0
  %59 = vst [vmem:[%s3] sm:$0xff] %v55
  %60 = vst [vmem:[%s3 + $0x8] sm:$0xff] %v57
  // Predicated region
  $region14: #{funky_forward.6} parent=0 // pred_check
    _
  $region15: #{funky_forward.6} parent=0 // pred_check_branch
    %62 = sbr.rel (0) target = $region17
  $region16: #{funky_forward.6} parent=0 // pred_region
    _
  $region17: #{funky_forward.6} parent=0 // pred_fallthru
    _
  // Predicated region
  $region18: #{funky_forward.6} parent=0 // pred_check
    _
  $region19: #{funky_forward.6} parent=0 // pred_check_branch
    %64 = sbr.rel (0) target = $region21
  $region20: #{funky_forward.6} parent=0 // pred_region
    _
  $region21: #{funky_forward.6} parent=0 // pred_fallthru
    _

// kernel: funky_forward.9
$region0: #{funky_forward.9}
  #allocation0 [shape = 'u32[]', space=smem, size = 0x4, offset = 0x4, fixed_abs, tag = 'smem constant byte address 0x4 - core index']
  #allocation1 [shape = 'u32[72,128]{1,0:T(1,128)}', space=vmem, size = 0x9000, scoped, tag = 'internal scratch']
  %s0 = inlined_call_operand.vmem [shape: f32[2,128], index: 0, kind: input, shape index: {}]
  %s1 = inlined_call_operand.vmem [shape: f32[1,128], index: 1, kind: input, shape index: {}]
  %s2 = inlined_call_operand.vmem [shape: f32[1,128], index: 2, kind: input, shape index: {}]
  %s3 = inlined_call_operand.vmem [shape: f32[2,128], index: 3, kind: output, shape index: {}]
  %s4 = sld [smem:[#allocation0]]
  $region22: #{funky_forward.9} parent=0
    _
  %s6 = ssub.s32 1, %s4
  %s7 = scalar_select 0, %s6, %s4
  // Predicated region
  $region2: #{funky_forward.9} parent=0 // pred_check
    _
  $region3: #{funky_forward.9} parent=0 // pred_check_branch
    %9 = sbr.rel (0) target = $region5
  $region4: #{funky_forward.9} parent=0 // pred_region
    _
  $region5: #{funky_forward.9} parent=0 // pred_fallthru
    _
  // Predicated region
  $region6: #{funky_forward.9} parent=0 // pred_check
    _
  $region7: #{funky_forward.9} parent=0 // pred_check_branch
    %11 = sbr.rel (0) target = $region9
  $region8: #{funky_forward.9} parent=0 // pred_region
    _
  $region9: #{funky_forward.9} parent=0 // pred_fallthru
    _
  // Predicated region
  $region10: #{funky_forward.9} parent=0 // pred_check
    _
  $region11: #{funky_forward.9} parent=0 // pred_check_branch
    %13 = sbr.rel (0) target = $region13
  $region12: #{funky_forward.9} parent=0 // pred_region
    _
  $region13: #{funky_forward.9} parent=0 // pred_fallthru
    _
  %v14 = vld [vmem:[%s0] sm:$0x3]
  %v15 = vld [vmem:[%s1] sm:$0x1]
  %v16 = vld [vmem:[%s2] sm:$0x1]
  %vm17 = vcmask 1041408
  %v18 = vsel %vm17, %v14, 0.0
  %19 = vadd.xlane.f32.xlu0 %v18
  %v20 = vpop.xlane.xlu0 %19
  %v21 = vrcp.pop 128.0
  %v22 = vmul.f32 128.0, %v21
  %v23 = vsub.f32 1.0, %v22
  %v24 = vmul.f32 %v21, %v23
  %v25 = vadd.f32 %v21, %v24
  %vm26 = vweird.f32 %v21
  %v27 = vsel %vm26, %v21, %v25
  %v28 = vmul.f32 %v20, %v27
  %v29 = vsub.f32 %v14, %v28
  %v30 = vmul.f32 %v29, %v29
  %v31 = vsel %vm17, %v30, 0.0
  %32 = vadd.xlane.f32.xlu0 %v31
  %v33 = vpop.xlane.xlu0 %32
  %v34 = vmul.f32 %v33, %v27
  %v35 = vadd.f32 %v34, 1e-05
  %v36 = vrsqrt.pop %v35
  %v37 = vmul.f32 %v36, %v35
  %v38 = vmul.f32 %v37, %v36
  %v39 = vmul.f32 0.5, %v38
  %v40 = vsub.f32 1.5, %v39
  %v41 = vmul.f32 %v36, %v40
  %vm42 = vweird.f32 %v35
  %vm43 = vweird.f32 %v36
  %vm44 = vmor %vm42, %vm43
  %v45 = vsel %vm44, %v36, %v41
  %v46 = vmul.f32 %v29, %v45
  %v48 = vperm.slane %v15, 0
  %v50 = vmul.f32 %v46, %v48
  %v52 = vperm.slane %v16, 0
  %v54 = vadd.f32 %v50, %v52
  %55 = vst [vmem:[%s3] sm:$0x3] %v54
  // Predicated region
  $region14: #{funky_forward.9} parent=0 // pred_check
    _
  $region15: #{funky_forward.9} parent=0 // pred_check_branch
    %57 = sbr.rel (0) target = $region17
  $region16: #{funky_forward.9} parent=0 // pred_region
    _
  $region17: #{funky_forward.9} parent=0 // pred_fallthru
    _
  // Predicated region
  $region18: #{funky_forward.9} parent=0 // pred_check
    _
  $region19: #{funky_forward.9} parent=0 // pred_check_branch
    %59 = sbr.rel (0) target = $region21
  $region20: #{funky_forward.9} parent=0 // pred_region
    _
  $region21: #{funky_forward.9} parent=0 // pred_fallthru
    _

// kernel: funky_forward.5
$region0: #{funky_forward.5}
  #allocation0 [shape = 'u32[]', space=smem, size = 0x4, offset = 0x4, fixed_abs, tag = 'smem constant byte address 0x4 - core index']
  #allocation1 [shape = 'u32[72,128]{1,0:T(1,128)}', space=vmem, size = 0x9000, scoped, tag = 'internal scratch']
  %s0 = inlined_call_operand.vmem [shape: f32[32,3,64], index: 0, kind: input, shape index: {}]
  %s1 = inlined_call_operand.vmem [shape: f32[32,1,64], index: 1, kind: input, shape index: {}]
  %s2 = inlined_call_operand.vmem [shape: bf16[3,128], index: 2, kind: input, shape index: {}]
  %s3 = inlined_call_operand.vmem [shape: f32[1,128], index: 3, kind: input, shape index: {}]
  %s4 = inlined_call_operand.hbm [shape: bf16[5,128,128], index: 4, kind: input, shape index: {}]
  %s5 = inlined_call_operand.vmem [shape: f32[5,1,128], index: 5, kind: input, shape index: {}]
  %s6 = inlined_call_operand.vmem [shape: f32[5,1,128], index: 6, kind: input, shape index: {}]
  %s7 = inlined_call_operand.vmem [shape: f32[5,1,128], index: 7, kind: input, shape index: {}]
  %s8 = inlined_call_operand.vmem [shape: bf16[128,5], index: 8, kind: input, shape index: {}]
  %s9 = inlined_call_operand.vmem [shape: f32[1,5], index: 9, kind: input, shape index: {}]
  %s10 = inlined_call_operand.vmem [shape: f32[32,3], index: 10, kind: output, shape index: {0}]
  %s11 = inlined_call_operand.vmem [shape: f32[32,5], index: 11, kind: output, shape index: {1}]
  %12 = xla_tuple %s10, %s11
  %s13 = sld [smem:[#allocation0]]
  $region62: #{funky_forward.5} parent=0
    _
  %s15 = ssub.s32 1, %s13
  %s16 = scalar_select 0, %s15, %s13
  $region1: #{funky_forward.5} parent=0
    #allocation2 [shape = 'u8[163840]{0}', space=vmem, size = 0x28000, scoped, tag = 'input window, operand 4, single buffered']
    #allocation3 [shape = 's32[1]{0}', space=sflag, size = 0x4, scoped, tag = 'scoped memory for funky_forward.5']
    %17 = vsyncpa [#allocation3], 0
    // Predicated region
    $region2: #{funky_forward.5} parent=1 // pred_check
      _
    $region3: #{funky_forward.5} parent=1 // pred_check_branch
      %19 = sbr.rel (0) target = $region5
    $region4: #{funky_forward.5} parent=1 // pred_region
      _
    $region5: #{funky_forward.5} parent=1 // pred_fallthru
      _
    // Predicated region
    $region6: #{funky_forward.5} parent=1 // pred_check
      _
    $region7: #{funky_forward.5} parent=1 // pred_check_branch
      %21 = sbr.rel (0) target = $region9
    $region8: #{funky_forward.5} parent=1 // pred_region
      _
    $region9: #{funky_forward.5} parent=1 // pred_fallthru
      _
    // Predicated region
    $region10: #{funky_forward.5} parent=1 // pred_check
      _
    $region11: #{funky_forward.5} parent=1 // pred_check_branch
      %23 = sbr.rel (0) target = $region13
    $region12: #{funky_forward.5} parent=1 // pred_region
      _
    $region13: #{funky_forward.5} parent=1 // pred_fallthru
      _
    // Predicated region
    $region14: #{funky_forward.5} parent=1 // pred_check
      _
    $region15: #{funky_forward.5} parent=1 // pred_check_branch
      %25 = sbr.rel (0) target = $region17
    $region16: #{funky_forward.5} parent=1 // pred_region
      _
    $region17: #{funky_forward.5} parent=1 // pred_fallthru
      _
    // Predicated region
    $region18: #{funky_forward.5} parent=1 // pred_check
      _
    $region19: #{funky_forward.5} parent=1 // pred_check_branch
      %27 = sbr.rel (0) target = $region21
    $region20: #{funky_forward.5} parent=1 // pred_region
      %29 = vsyncadd [#allocation3], 0
      %s30 = sshll.u32 %s4, 4
      %s31 = int_to_ptr.hbm [resolvable:$true] %s30
      %s32 = sshll.u32 [#allocation2], 4
      %s33 = int_to_ptr.vmem [resolvable:$true] %s32
      %38 = dma.hbm_to_vmem [thread:$0]  %s31, 5120, %s33, [#allocation3], 64, 64, 4
    $region21: #{funky_forward.5} parent=1 // pred_fallthru
      _
    // Predicated region
    $region22: #{funky_forward.5} parent=1 // pred_check
      _
    $region23: #{funky_forward.5} parent=1 // pred_check_branch
      %40 = sbr.rel (0) target = $region25
    $region24: #{funky_forward.5} parent=1 // pred_region
      _
    $region25: #{funky_forward.5} parent=1 // pred_fallthru
      _
    // Predicated region
    $region26: #{funky_forward.5} parent=1 // pred_check
      _
    $region27: #{funky_forward.5} parent=1 // pred_check_branch
      %42 = sbr.rel (0) target = $region29
    $region28: #{funky_forward.5} parent=1 // pred_region
      _
    $region29: #{funky_forward.5} parent=1 // pred_fallthru
      _
    // Predicated region
    $region30: #{funky_forward.5} parent=1 // pred_check
      _
    $region31: #{funky_forward.5} parent=1 // pred_check_branch
      %44 = sbr.rel (0) target = $region33
    $region32: #{funky_forward.5} parent=1 // pred_region
      _
    $region33: #{funky_forward.5} parent=1 // pred_fallthru
      _
    // Predicated region
    $region34: #{funky_forward.5} parent=1 // pred_check
      _
    $region35: #{funky_forward.5} parent=1 // pred_check_branch
      %46 = sbr.rel (0) target = $region37
    $region36: #{funky_forward.5} parent=1 // pred_region
      _
    $region37: #{funky_forward.5} parent=1 // pred_fallthru
      _
    // Predicated region
    $region38: #{funky_forward.5} parent=1 // pred_check
      _
    $region39: #{funky_forward.5} parent=1 // pred_check_branch
      %48 = sbr.rel (0) target = $region41
    $region40: #{funky_forward.5} parent=1 // pred_region
      _
    $region41: #{funky_forward.5} parent=1 // pred_fallthru
      _
    // Predicated region
    $region42: #{funky_forward.5} parent=1 // pred_check
      _
    $region43: #{funky_forward.5} parent=1 // pred_check_branch
      %50 = sbr.rel (0) target = $region45
    $region44: #{funky_forward.5} parent=1 // pred_region
      %52 = dma.done [#allocation3], 5120
    $region45: #{funky_forward.5} parent=1 // pred_fallthru
      _
    %v54 = vld [vmem:[%s0] sm:$0x7]
    %v55 = vld [vmem:[%s0 + $0x4] sm:$0x7]
    %v56 = vld [vmem:[%s0 + $0x8] sm:$0x7]
    %v57 = vld [vmem:[%s0 + $0xc] sm:$0x7]
    %v58 = vld [vmem:[%s0 + $0x10] sm:$0x7]
    %v59 = vld [vmem:[%s0 + $0x14] sm:$0x7]
    %v60 = vld [vmem:[%s0 + $0x18] sm:$0x7]
    %v61 = vld [vmem:[%s0 + $0x1c] sm:$0x7]
    %v62 = vld [vmem:[%s0 + $0x20] sm:$0x7]
    %v63 = vld [vmem:[%s0 + $0x24] sm:$0x7]
    %v64 = vld [vmem:[%s0 + $0x28] sm:$0x7]
    %v65 = vld [vmem:[%s0 + $0x2c] sm:$0x7]
    %v66 = vld [vmem:[%s0 + $0x30] sm:$0x7]
    %v67 = vld [vmem:[%s0 + $0x34] sm:$0x7]
    %v68 = vld [vmem:[%s0 + $0x38] sm:$0x7]
    %v69 = vld [vmem:[%s0 + $0x3c] sm:$0x7]
    %v70 = vld [vmem:[%s0 + $0x40] sm:$0x7]
    %v71 = vld [vmem:[%s0 + $0x44] sm:$0x7]
    %v72 = vld [vmem:[%s0 + $0x48] sm:$0x7]
    %v73 = vld [vmem:[%s0 + $0x4c] sm:$0x7]
    %v74 = vld [vmem:[%s0 + $0x50] sm:$0x7]
    %v75 = vld [vmem:[%s0 + $0x54] sm:$0x7]
    %v76 = vld [vmem:[%s0 + $0x58] sm:$0x7]
    %v77 = vld [vmem:[%s0 + $0x5c] sm:$0x7]
    %v78 = vld [vmem:[%s0 + $0x60] sm:$0x7]
    %v79 = vld [vmem:[%s0 + $0x64] sm:$0x7]
    %v80 = vld [vmem:[%s0 + $0x68] sm:$0x7]
    %v81 = vld [vmem:[%s0 + $0x6c] sm:$0x7]
    %v82 = vld [vmem:[%s0 + $0x70] sm:$0x7]
    %v83 = vld [vmem:[%s0 + $0x74] sm:$0x7]
    %v84 = vld [vmem:[%s0 + $0x78] sm:$0x7]
    %v85 = vld [vmem:[%s0 + $0x7c] sm:$0x7]
    %v86 = vld [vmem:[%s1] sm:$0x1]
    %v87 = vld [vmem:[%s1 + $0x1] sm:$0x1]
    %v88 = vld [vmem:[%s1 + $0x2] sm:$0x1]
    %v89 = vld [vmem:[%s1 + $0x3] sm:$0x1]
    %v90 = vld [vmem:[%s1 + $0x4] sm:$0x1]
    %v91 = vld [vmem:[%s1 + $0x5] sm:$0x1]
    %v92 = vld [vmem:[%s1 + $0x6] sm:$0x1]
    %v93 = vld [vmem:[%s1 + $0x7] sm:$0x1]
    %v94 = vld [vmem:[%s1 + $0x8] sm:$0x1]
    %v95 = vld [vmem:[%s1 + $0x9] sm:$0x1]
    %v96 = vld [vmem:[%s1 + $0xa] sm:$0x1]
    %v97 = vld [vmem:[%s1 + $0xb] sm:$0x1]
    %v98 = vld [vmem:[%s1 + $0xc] sm:$0x1]
    %v99 = vld [vmem:[%s1 + $0xd] sm:$0x1]
    %v100 = vld [vmem:[%s1 + $0xe] sm:$0x1]
    %v101 = vld [vmem:[%s1 + $0xf] sm:$0x1]
    %v102 = vld [vmem:[%s1 + $0x10] sm:$0x1]
    %v103 = vld [vmem:[%s1 + $0x11] sm:$0x1]
    %v104 = vld [vmem:[%s1 + $0x12] sm:$0x1]
    %v105 = vld [vmem:[%s1 + $0x13] sm:$0x1]
    %v106 = vld [vmem:[%s1 + $0x14] sm:$0x1]
    %v107 = vld [vmem:[%s1 + $0x15] sm:$0x1]
    %v108 = vld [vmem:[%s1 + $0x16] sm:$0x1]
    %v109 = vld [vmem:[%s1 + $0x17] sm:$0x1]
    %v110 = vld [vmem:[%s1 + $0x18] sm:$0x1]
    %v111 = vld [vmem:[%s1 + $0x19] sm:$0x1]
    %v112 = vld [vmem:[%s1 + $0x1a] sm:$0x1]
    %v113 = vld [vmem:[%s1 + $0x1b] sm:$0x1]
    %v114 = vld [vmem:[%s1 + $0x1c] sm:$0x1]
    %v115 = vld [vmem:[%s1 + $0x1d] sm:$0x1]
    %v116 = vld [vmem:[%s1 + $0x1e] sm:$0x1]
    %v117 = vld [vmem:[%s1 + $0x1f] sm:$0x1]
    %v150 = vperm.slane %v86, 0
    %v151 = vperm.slane %v87, 0
    %v152 = vperm.slane %v88, 0
    %v153 = vperm.slane %v89, 0
    %v154 = vperm.slane %v90, 0
    %v155 = vperm.slane %v91, 0
    %v156 = vperm.slane %v92, 0
    %v157 = vperm.slane %v93, 0
    %v158 = vperm.slane %v94, 0
    %v159 = vperm.slane %v95, 0
    %v160 = vperm.slane %v96, 0
    %v161 = vperm.slane %v97, 0
    %v162 = vperm.slane %v98, 0
    %v163 = vperm.slane %v99, 0
    %v164 = vperm.slane %v100, 0
    %v165 = vperm.slane %v101, 0
    %v166 = vperm.slane %v102, 0
    %v167 = vperm.slane %v103, 0
    %v168 = vperm.slane %v104, 0
    %v169 = vperm.slane %v105, 0
    %v170 = vperm.slane %v106, 0
    %v171 = vperm.slane %v107, 0
    %v172 = vperm.slane %v108, 0
    %v173 = vperm.slane %v109, 0
    %v174 = vperm.slane %v110, 0
    %v175 = vperm.slane %v111, 0
    %v176 = vperm.slane %v112, 0
    %v177 = vperm.slane %v113, 0
    %v178 = vperm.slane %v114, 0
    %v179 = vperm.slane %v115, 0
    %v180 = vperm.slane %v116, 0
    %v181 = vperm.slane %v117, 0
    %v214 = vmul.f32 %v54, %v150
    %v215 = vmul.f32 %v55, %v151
    %v216 = vmul.f32 %v56, %v152
    %v217 = vmul.f32 %v57, %v153
    %v218 = vmul.f32 %v58, %v154
    %v219 = vmul.f32 %v59, %v155
    %v220 = vmul.f32 %v60, %v156
    %v221 = vmul.f32 %v61, %v157
    %v222 = vmul.f32 %v62, %v158
    %v223 = vmul.f32 %v63, %v159
    %v224 = vmul.f32 %v64, %v160
    %v225 = vmul.f32 %v65, %v161
    %v226 = vmul.f32 %v66, %v162
    %v227 = vmul.f32 %v67, %v163
    %v228 = vmul.f32 %v68, %v164
    %v229 = vmul.f32 %v69, %v165
    %v230 = vmul.f32 %v70, %v166
    %v231 = vmul.f32 %v71, %v167
    %v232 = vmul.f32 %v72, %v168
    %v233 = vmul.f32 %v73, %v169
    %v234 = vmul.f32 %v74, %v170
    %v235 = vmul.f32 %v75, %v171
    %v236 = vmul.f32 %v76, %v172
    %v237 = vmul.f32 %v77, %v173
    %v238 = vmul.f32 %v78, %v174
    %v239 = vmul.f32 %v79, %v175
    %v240 = vmul.f32 %v80, %v176
    %v241 = vmul.f32 %v81, %v177
    %v242 = vmul.f32 %v82, %v178
    %v243 = vmul.f32 %v83, %v179
    %v244 = vmul.f32 %v84, %v180
    %v245 = vmul.f32 %v85, %v181
    %vm246 = vcmask 518144
    %v247 = vsel %vm246, %v214, 0.0
    %248 = vadd.xlane.f32.xlu0 %v247
    %v249 = vpop.xlane.xlu0 %248
    %v250 = vsel %vm246, %v215, 0.0
    %251 = vadd.xlane.f32.xlu0 %v250
    %v252 = vpop.xlane.xlu0 %251
    %v253 = vsel %vm246, %v216, 0.0
    %254 = vadd.xlane.f32.xlu0 %v253
    %v255 = vpop.xlane.xlu0 %254
    %v256 = vsel %vm246, %v217, 0.0
    %257 = vadd.xlane.f32.xlu0 %v256
    %v258 = vpop.xlane.xlu0 %257
    %v259 = vsel %vm246, %v218, 0.0
    %260 = vadd.xlane.f32.xlu0 %v259
    %v261 = vpop.xlane.xlu0 %260
    %v262 = vsel %vm246, %v219, 0.0
    %263 = vadd.xlane.f32.xlu0 %v262
    %v264 = vpop.xlane.xlu0 %263
    %v265 = vsel %vm246, %v220, 0.0
    %266 = vadd.xlane.f32.xlu0 %v265
    %v267 = vpop.xlane.xlu0 %266
    %v268 = vsel %vm246, %v221, 0.0
    %269 = vadd.xlane.f32.xlu0 %v268
    %v270 = vpop.xlane.xlu0 %269
    %v271 = vsel %vm246, %v222, 0.0
    %272 = vadd.xlane.f32.xlu0 %v271
    %v273 = vpop.xlane.xlu0 %272
    %v274 = vsel %vm246, %v223, 0.0
    %275 = vadd.xlane.f32.xlu0 %v274
    %v276 = vpop.xlane.xlu0 %275
    %v277 = vsel %vm246, %v224, 0.0
    %278 = vadd.xlane.f32.xlu0 %v277
    %v279 = vpop.xlane.xlu0 %278
    %v280 = vsel %vm246, %v225, 0.0
    %281 = vadd.xlane.f32.xlu0 %v280
    %v282 = vpop.xlane.xlu0 %281
    %v283 = vsel %vm246, %v226, 0.0
    %284 = vadd.xlane.f32.xlu0 %v283
    %v285 = vpop.xlane.xlu0 %284
    %v286 = vsel %vm246, %v227, 0.0
    %287 = vadd.xlane.f32.xlu0 %v286
    %v288 = vpop.xlane.xlu0 %287
    %v289 = vsel %vm246, %v228, 0.0
    %290 = vadd.xlane.f32.xlu0 %v289
    %v291 = vpop.xlane.xlu0 %290
    %v292 = vsel %vm246, %v229, 0.0
    %293 = vadd.xlane.f32.xlu0 %v292
    %v294 = vpop.xlane.xlu0 %293
    %v295 = vsel %vm246, %v230, 0.0
    %296 = vadd.xlane.f32.xlu0 %v295
    %v297 = vpop.xlane.xlu0 %296
    %v298 = vsel %vm246, %v231, 0.0
    %299 = vadd.xlane.f32.xlu0 %v298
    %v300 = vpop.xlane.xlu0 %299
    %v301 = vsel %vm246, %v232, 0.0
    %302 = vadd.xlane.f32.xlu0 %v301
    %v303 = vpop.xlane.xlu0 %302
    %v304 = vsel %vm246, %v233, 0.0
    %305 = vadd.xlane.f32.xlu0 %v304
    %v306 = vpop.xlane.xlu0 %305
    %v307 = vsel %vm246, %v234, 0.0
    %308 = vadd.xlane.f32.xlu0 %v307
    %v309 = vpop.xlane.xlu0 %308
    %v310 = vsel %vm246, %v235, 0.0
    %311 = vadd.xlane.f32.xlu0 %v310
    %v312 = vpop.xlane.xlu0 %311
    %v313 = vsel %vm246, %v236, 0.0
    %314 = vadd.xlane.f32.xlu0 %v313
    %v315 = vpop.xlane.xlu0 %314
    %v316 = vsel %vm246, %v237, 0.0
    %317 = vadd.xlane.f32.xlu0 %v316
    %v318 = vpop.xlane.xlu0 %317
    %v319 = vsel %vm246, %v238, 0.0
    %320 = vadd.xlane.f32.xlu0 %v319
    %v321 = vpop.xlane.xlu0 %320
    %v322 = vsel %vm246, %v239, 0.0
    %323 = vadd.xlane.f32.xlu0 %v322
    %v324 = vpop.xlane.xlu0 %323
    %v325 = vsel %vm246, %v240, 0.0
    %326 = vadd.xlane.f32.xlu0 %v325
    %v327 = vpop.xlane.xlu0 %326
    %v328 = vsel %vm246, %v241, 0.0
    %329 = vadd.xlane.f32.xlu0 %v328
    %v330 = vpop.xlane.xlu0 %329
    %v331 = vsel %vm246, %v242, 0.0
    %332 = vadd.xlane.f32.xlu0 %v331
    %v333 = vpop.xlane.xlu0 %332
    %v334 = vsel %vm246, %v243, 0.0
    %335 = vadd.xlane.f32.xlu0 %v334
    %v336 = vpop.xlane.xlu0 %335
    %v337 = vsel %vm246, %v244, 0.0
    %338 = vadd.xlane.f32.xlu0 %v337
    %v339 = vpop.xlane.xlu0 %338
    %v340 = vsel %vm246, %v245, 0.0
    %341 = vadd.xlane.f32.xlu0 %v340
    %v342 = vpop.xlane.xlu0 %341
    %vm343 = vcmask 516096
    %v344 = vsel %vm343, %v86, 0.0
    %345 = vadd.xlane.f32.xlu0 %v344
    %v346 = vpop.xlane.xlu0 %345
    %v347 = vsel %vm343, %v87, 0.0
    %348 = vadd.xlane.f32.xlu0 %v347
    %v349 = vpop.xlane.xlu0 %348
    %v350 = vsel %vm343, %v88, 0.0
    %351 = vadd.xlane.f32.xlu0 %v350
    %v352 = vpop.xlane.xlu0 %351
    %v353 = vsel %vm343, %v89, 0.0
    %354 = vadd.xlane.f32.xlu0 %v353
    %v355 = vpop.xlane.xlu0 %354
    %v356 = vsel %vm343, %v90, 0.0
    %357 = vadd.xlane.f32.xlu0 %v356
    %v358 = vpop.xlane.xlu0 %357
    %v359 = vsel %vm343, %v91, 0.0
    %360 = vadd.xlane.f32.xlu0 %v359
    %v361 = vpop.xlane.xlu0 %360
    %v362 = vsel %vm343, %v92, 0.0
    %363 = vadd.xlane.f32.xlu0 %v362
    %v364 = vpop.xlane.xlu0 %363
    %v365 = vsel %vm343, %v93, 0.0
    %366 = vadd.xlane.f32.xlu0 %v365
    %v367 = vpop.xlane.xlu0 %366
    %v368 = vsel %vm343, %v94, 0.0
    %369 = vadd.xlane.f32.xlu0 %v368
    %v370 = vpop.xlane.xlu0 %369
    %v371 = vsel %vm343, %v95, 0.0
    %372 = vadd.xlane.f32.xlu0 %v371
    %v373 = vpop.xlane.xlu0 %372
    %v374 = vsel %vm343, %v96, 0.0
    %375 = vadd.xlane.f32.xlu0 %v374
    %v376 = vpop.xlane.xlu0 %375
    %v377 = vsel %vm343, %v97, 0.0
    %378 = vadd.xlane.f32.xlu0 %v377
    %v379 = vpop.xlane.xlu0 %378
    %v380 = vsel %vm343, %v98, 0.0
    %381 = vadd.xlane.f32.xlu0 %v380
    %v382 = vpop.xlane.xlu0 %381
    %v383 = vsel %vm343, %v99, 0.0
    %384 = vadd.xlane.f32.xlu0 %v383
    %v385 = vpop.xlane.xlu0 %384
    %v386 = vsel %vm343, %v100, 0.0
    %387 = vadd.xlane.f32.xlu0 %v386
    %v388 = vpop.xlane.xlu0 %387
    %v389 = vsel %vm343, %v101, 0.0
    %390 = vadd.xlane.f32.xlu0 %v389
    %v391 = vpop.xlane.xlu0 %390
    %v392 = vsel %vm343, %v102, 0.0
    %393 = vadd.xlane.f32.xlu0 %v392
    %v394 = vpop.xlane.xlu0 %393
    %v395 = vsel %vm343, %v103, 0.0
    %396 = vadd.xlane.f32.xlu0 %v395
    %v397 = vpop.xlane.xlu0 %396
    %v398 = vsel %vm343, %v104, 0.0
    %399 = vadd.xlane.f32.xlu0 %v398
    %v400 = vpop.xlane.xlu0 %399
    %v401 = vsel %vm343, %v105, 0.0
    %402 = vadd.xlane.f32.xlu0 %v401
    %v403 = vpop.xlane.xlu0 %402
    %v404 = vsel %vm343, %v106, 0.0
    %405 = vadd.xlane.f32.xlu0 %v404
    %v406 = vpop.xlane.xlu0 %405
    %v407 = vsel %vm343, %v107, 0.0
    %408 = vadd.xlane.f32.xlu0 %v407
    %v409 = vpop.xlane.xlu0 %408
    %v410 = vsel %vm343, %v108, 0.0
    %411 = vadd.xlane.f32.xlu0 %v410
    %v412 = vpop.xlane.xlu0 %411
    %v413 = vsel %vm343, %v109, 0.0
    %414 = vadd.xlane.f32.xlu0 %v413
    %v415 = vpop.xlane.xlu0 %414
    %v416 = vsel %vm343, %v110, 0.0
    %417 = vadd.xlane.f32.xlu0 %v416
    %v418 = vpop.xlane.xlu0 %417
    %v419 = vsel %vm343, %v111, 0.0
    %420 = vadd.xlane.f32.xlu0 %v419
    %v421 = vpop.xlane.xlu0 %420
    %v422 = vsel %vm343, %v112, 0.0
    %423 = vadd.xlane.f32.xlu0 %v422
    %v424 = vpop.xlane.xlu0 %423
    %v425 = vsel %vm343, %v113, 0.0
    %426 = vadd.xlane.f32.xlu0 %v425
    %v427 = vpop.xlane.xlu0 %426
    %v428 = vsel %vm343, %v114, 0.0
    %429 = vadd.xlane.f32.xlu0 %v428
    %v430 = vpop.xlane.xlu0 %429
    %v431 = vsel %vm343, %v115, 0.0
    %432 = vadd.xlane.f32.xlu0 %v431
    %v433 = vpop.xlane.xlu0 %432
    %v434 = vsel %vm343, %v116, 0.0
    %435 = vadd.xlane.f32.xlu0 %v434
    %v436 = vpop.xlane.xlu0 %435
    %v437 = vsel %vm343, %v117, 0.0
    %438 = vadd.xlane.f32.xlu0 %v437
    %v439 = vpop.xlane.xlu0 %438
    %v440 = vadd.f32 %v346, 0.001
    %v441 = vadd.f32 %v349, 0.001
    %v442 = vadd.f32 %v352, 0.001
    %v443 = vadd.f32 %v355, 0.001
    %v444 = vadd.f32 %v358, 0.001
    %v445 = vadd.f32 %v361, 0.001
    %v446 = vadd.f32 %v364, 0.001
    %v447 = vadd.f32 %v367, 0.001
    %v448 = vadd.f32 %v370, 0.001
    %v449 = vadd.f32 %v373, 0.001
    %v450 = vadd.f32 %v376, 0.001
    %v451 = vadd.f32 %v379, 0.001
    %v452 = vadd.f32 %v382, 0.001
    %v453 = vadd.f32 %v385, 0.001
    %v454 = vadd.f32 %v388, 0.001
    %v455 = vadd.f32 %v391, 0.001
    %v456 = vadd.f32 %v394, 0.001
    %v457 = vadd.f32 %v397, 0.001
    %v458 = vadd.f32 %v400, 0.001
    %v459 = vadd.f32 %v403, 0.001
    %v460 = vadd.f32 %v406, 0.001
    %v461 = vadd.f32 %v409, 0.001
    %v462 = vadd.f32 %v412, 0.001
    %v463 = vadd.f32 %v415, 0.001
    %v464 = vadd.f32 %v418, 0.001
    %v465 = vadd.f32 %v421, 0.001
    %v466 = vadd.f32 %v424, 0.001
    %v467 = vadd.f32 %v427, 0.001
    %v468 = vadd.f32 %v430, 0.001
    %v469 = vadd.f32 %v433, 0.001
    %v470 = vadd.f32 %v436, 0.001
    %v471 = vadd.f32 %v439, 0.001
    %v472 = vperm.slane %v440, 0
    %v473 = vperm.slane %v441, 0
    %v474 = vperm.slane %v442, 0
    %v475 = vperm.slane %v443, 0
    %v476 = vperm.slane %v444, 0
    %v477 = vperm.slane %v445, 0
    %v478 = vperm.slane %v446, 0
    %v479 = vperm.slane %v447, 0
    %v480 = vperm.slane %v448, 0
    %v481 = vperm.slane %v449, 0
    %v482 = vperm.slane %v450, 0
    %v483 = vperm.slane %v451, 0
    %v484 = vperm.slane %v452, 0
    %v485 = vperm.slane %v453, 0
    %v486 = vperm.slane %v454, 0
    %v487 = vperm.slane %v455, 0
    %v488 = vperm.slane %v456, 0
    %v489 = vperm.slane %v457, 0
    %v490 = vperm.slane %v458, 0
    %v491 = vperm.slane %v459, 0
    %v492 = vperm.slane %v460, 0
    %v493 = vperm.slane %v461, 0
    %v494 = vperm.slane %v462, 0
    %v495 = vperm.slane %v463, 0
    %v496 = vperm.slane %v464, 0
    %v497 = vperm.slane %v465, 0
    %v498 = vperm.slane %v466, 0
    %v499 = vperm.slane %v467, 0
    %v500 = vperm.slane %v468, 0
    %v501 = vperm.slane %v469, 0
    %v502 = vperm.slane %v470, 0
    %v503 = vperm.slane %v471, 0
    %v504 = vrcp.pop %v472
    %v505 = vmul.f32 %v472, %v504
    %v506 = vsub.f32 1.0, %v505
    %v507 = vmul.f32 %v504, %v506
    %v508 = vadd.f32 %v504, %v507
    %vm509 = vweird.f32 %v472
    %vm510 = vweird.f32 %v504
    %vm511 = vmor %vm509, %vm510
    %v512 = vsel %vm511, %v504, %v508
    %v513 = vand.u32 2147483647, %v472
    %vm514 = vcmp.eq.f32.partialorder %v513, 8.507059e+37
    %v515 = vand.u32 %v472, 2147483648
    %v516 = vor.u32 1.1754944e-38, %v515
    %v517 = vsel %vm514, %v516, %v512
    %v518 = vmul.f32 %v249, %v517
    %v519 = vrcp.pop %v473
    %v520 = vmul.f32 %v473, %v519
    %v521 = vsub.f32 1.0, %v520
    %v522 = vmul.f32 %v519, %v521
    %v523 = vadd.f32 %v519, %v522
    %vm524 = vweird.f32 %v473
    %vm525 = vweird.f32 %v519
    %vm526 = vmor %vm524, %vm525
    %v527 = vsel %vm526, %v519, %v523
    %v528 = vand.u32 2147483647, %v473
    %vm529 = vcmp.eq.f32.partialorder %v528, 8.507059e+37
    %v530 = vand.u32 %v473, 2147483648
    %v531 = vor.u32 1.1754944e-38, %v530
    %v532 = vsel %vm529, %v531, %v527
    %v533 = vmul.f32 %v252, %v532
    %v534 = vrcp.pop %v474
    %v535 = vmul.f32 %v474, %v534
    %v536 = vsub.f32 1.0, %v535
    %v537 = vmul.f32 %v534, %v536
    %v538 = vadd.f32 %v534, %v537
    %vm539 = vweird.f32 %v474
    %vm540 = vweird.f32 %v534
    %vm541 = vmor %vm539, %vm540
    %v542 = vsel %vm541, %v534, %v538
    %v543 = vand.u32 2147483647, %v474
    %vm544 = vcmp.eq.f32.partialorder %v543, 8.507059e+37
    %v545 = vand.u32 %v474, 2147483648
    %v546 = vor.u32 1.1754944e-38, %v545
    %v547 = vsel %vm544, %v546, %v542
    %v548 = vmul.f32 %v255, %v547
    %v549 = vrcp.pop %v475
    %v550 = vmul.f32 %v475, %v549
    %v551 = vsub.f32 1.0, %v550
    %v552 = vmul.f32 %v549, %v551
    %v553 = vadd.f32 %v549, %v552
    %vm554 = vweird.f32 %v475
    %vm555 = vweird.f32 %v549
    %vm556 = vmor %vm554, %vm555
    %v557 = vsel %vm556, %v549, %v553
    %v558 = vand.u32 2147483647, %v475
    %vm559 = vcmp.eq.f32.partialorder %v558, 8.507059e+37
    %v560 = vand.u32 %v475, 2147483648
    %v561 = vor.u32 1.1754944e-38, %v560
    %v562 = vsel %vm559, %v561, %v557
    %v563 = vmul.f32 %v258, %v562
    %v564 = vrcp.pop %v476
    %v565 = vmul.f32 %v476, %v564
    %v566 = vsub.f32 1.0, %v565
    %v567 = vmul.f32 %v564, %v566
    %v568 = vadd.f32 %v564, %v567
    %vm569 = vweird.f32 %v476
    %vm570 = vweird.f32 %v564
    %vm571 = vmor %vm569, %vm570
    %v572 = vsel %vm571, %v564, %v568
    %v573 = vand.u32 2147483647, %v476
    %vm574 = vcmp.eq.f32.partialorder %v573, 8.507059e+37
    %v575 = vand.u32 %v476, 2147483648
    %v576 = vor.u32 1.1754944e-38, %v575
    %v577 = vsel %vm574, %v576, %v572
    %v578 = vmul.f32 %v261, %v577
    %v579 = vrcp.pop %v477
    %v580 = vmul.f32 %v477, %v579
    %v581 = vsub.f32 1.0, %v580
    %v582 = vmul.f32 %v579, %v581
    %v583 = vadd.f32 %v579, %v582
    %vm584 = vweird.f32 %v477
    %vm585 = vweird.f32 %v579
    %vm586 = vmor %vm584, %vm585
    %v587 = vsel %vm586, %v579, %v583
    %v588 = vand.u32 2147483647, %v477
    %vm589 = vcmp.eq.f32.partialorder %v588, 8.507059e+37
    %v590 = vand.u32 %v477, 2147483648
    %v591 = vor.u32 1.1754944e-38, %v590
    %v592 = vsel %vm589, %v591, %v587
    %v593 = vmul.f32 %v264, %v592
    %v594 = vrcp.pop %v478
    %v595 = vmul.f32 %v478, %v594
    %v596 = vsub.f32 1.0, %v595
    %v597 = vmul.f32 %v594, %v596
    %v598 = vadd.f32 %v594, %v597
    %vm599 = vweird.f32 %v478
    %vm600 = vweird.f32 %v594
    %vm601 = vmor %vm599, %vm600
    %v602 = vsel %vm601, %v594, %v598
    %v603 = vand.u32 2147483647, %v478
    %vm604 = vcmp.eq.f32.partialorder %v603, 8.507059e+37
    %v605 = vand.u32 %v478, 2147483648
    %v606 = vor.u32 1.1754944e-38, %v605
    %v607 = vsel %vm604, %v606, %v602
    %v608 = vmul.f32 %v267, %v607
    %v609 = vrcp.pop %v479
    %v610 = vmul.f32 %v479, %v609
    %v611 = vsub.f32 1.0, %v610
    %v612 = vmul.f32 %v609, %v611
    %v613 = vadd.f32 %v609, %v612
    %vm614 = vweird.f32 %v479
    %vm615 = vweird.f32 %v609
    %vm616 = vmor %vm614, %vm615
    %v617 = vsel %vm616, %v609, %v613
    %v618 = vand.u32 2147483647, %v479
    %vm619 = vcmp.eq.f32.partialorder %v618, 8.507059e+37
    %v620 = vand.u32 %v479, 2147483648
    %v621 = vor.u32 1.1754944e-38, %v620
    %v622 = vsel %vm619, %v621, %v617
    %v623 = vmul.f32 %v270, %v622
    %v624 = vrcp.pop %v480
    %v625 = vmul.f32 %v480, %v624
    %v626 = vsub.f32 1.0, %v625
    %v627 = vmul.f32 %v624, %v626
    %v628 = vadd.f32 %v624, %v627
    %vm629 = vweird.f32 %v480
    %vm630 = vweird.f32 %v624
    %vm631 = vmor %vm629, %vm630
    %v632 = vsel %vm631, %v624, %v628
    %v633 = vand.u32 2147483647, %v480
    %vm634 = vcmp.eq.f32.partialorder %v633, 8.507059e+37
    %v635 = vand.u32 %v480, 2147483648
    %v636 = vor.u32 1.1754944e-38, %v635
    %v637 = vsel %vm634, %v636, %v632
    %v638 = vmul.f32 %v273, %v637
    %v639 = vrcp.pop %v481
    %v640 = vmul.f32 %v481, %v639
    %v641 = vsub.f32 1.0, %v640
    %v642 = vmul.f32 %v639, %v641
    %v643 = vadd.f32 %v639, %v642
    %vm644 = vweird.f32 %v481
    %vm645 = vweird.f32 %v639
    %vm646 = vmor %vm644, %vm645
    %v647 = vsel %vm646, %v639, %v643
    %v648 = vand.u32 2147483647, %v481
    %vm649 = vcmp.eq.f32.partialorder %v648, 8.507059e+37
    %v650 = vand.u32 %v481, 2147483648
    %v651 = vor.u32 1.1754944e-38, %v650
    %v652 = vsel %vm649, %v651, %v647
    %v653 = vmul.f32 %v276, %v652
    %v654 = vrcp.pop %v482
    %v655 = vmul.f32 %v482, %v654
    %v656 = vsub.f32 1.0, %v655
    %v657 = vmul.f32 %v654, %v656
    %v658 = vadd.f32 %v654, %v657
    %vm659 = vweird.f32 %v482
    %vm660 = vweird.f32 %v654
    %vm661 = vmor %vm659, %vm660
    %v662 = vsel %vm661, %v654, %v658
    %v663 = vand.u32 2147483647, %v482
    %vm664 = vcmp.eq.f32.partialorder %v663, 8.507059e+37
    %v665 = vand.u32 %v482, 2147483648
    %v666 = vor.u32 1.1754944e-38, %v665
    %v667 = vsel %vm664, %v666, %v662
    %v668 = vmul.f32 %v279, %v667
    %v669 = vrcp.pop %v483
    %v670 = vmul.f32 %v483, %v669
    %v671 = vsub.f32 1.0, %v670
    %v672 = vmul.f32 %v669, %v671
    %v673 = vadd.f32 %v669, %v672
    %vm674 = vweird.f32 %v483
    %vm675 = vweird.f32 %v669
    %vm676 = vmor %vm674, %vm675
    %v677 = vsel %vm676, %v669, %v673
    %v678 = vand.u32 2147483647, %v483
    %vm679 = vcmp.eq.f32.partialorder %v678, 8.507059e+37
    %v680 = vand.u32 %v483, 2147483648
    %v681 = vor.u32 1.1754944e-38, %v680
    %v682 = vsel %vm679, %v681, %v677
    %v683 = vmul.f32 %v282, %v682
    %v684 = vrcp.pop %v484
    %v685 = vmul.f32 %v484, %v684
    %v686 = vsub.f32 1.0, %v685
    %v687 = vmul.f32 %v684, %v686
    %v688 = vadd.f32 %v684, %v687
    %vm689 = vweird.f32 %v484
    %vm690 = vweird.f32 %v684
    %vm691 = vmor %vm689, %vm690
    %v692 = vsel %vm691, %v684, %v688
    %v693 = vand.u32 2147483647, %v484
    %vm694 = vcmp.eq.f32.partialorder %v693, 8.507059e+37
    %v695 = vand.u32 %v484, 2147483648
    %v696 = vor.u32 1.1754944e-38, %v695
    %v697 = vsel %vm694, %v696, %v692
    %v698 = vmul.f32 %v285, %v697
    %v699 = vrcp.pop %v485
    %v700 = vmul.f32 %v485, %v699
    %v701 = vsub.f32 1.0, %v700
    %v702 = vmul.f32 %v699, %v701
    %v703 = vadd.f32 %v699, %v702
    %vm704 = vweird.f32 %v485
    %vm705 = vweird.f32 %v699
    %vm706 = vmor %vm704, %vm705
    %v707 = vsel %vm706, %v699, %v703
    %v708 = vand.u32 2147483647, %v485
    %vm709 = vcmp.eq.f32.partialorder %v708, 8.507059e+37
    %v710 = vand.u32 %v485, 2147483648
    %v711 = vor.u32 1.1754944e-38, %v710
    %v712 = vsel %vm709, %v711, %v707
    %v713 = vmul.f32 %v288, %v712
    %v714 = vrcp.pop %v486
    %v715 = vmul.f32 %v486, %v714
    %v716 = vsub.f32 1.0, %v715
    %v717 = vmul.f32 %v714, %v716
    %v718 = vadd.f32 %v714, %v717
    %vm719 = vweird.f32 %v486
    %vm720 = vweird.f32 %v714
    %vm721 = vmor %vm719, %vm720
    %v722 = vsel %vm721, %v714, %v718
    %v723 = vand.u32 2147483647, %v486
    %vm724 = vcmp.eq.f32.partialorder %v723, 8.507059e+37
    %v725 = vand.u32 %v486, 2147483648
    %v726 = vor.u32 1.1754944e-38, %v725
    %v727 = vsel %vm724, %v726, %v722
    %v728 = vmul.f32 %v291, %v727
    %v729 = vrcp.pop %v487
    %v730 = vmul.f32 %v487, %v729
    %v731 = vsub.f32 1.0, %v730
    %v732 = vmul.f32 %v729, %v731
    %v733 = vadd.f32 %v729, %v732
    %vm734 = vweird.f32 %v487
    %vm735 = vweird.f32 %v729
    %vm736 = vmor %vm734, %vm735
    %v737 = vsel %vm736, %v729, %v733
    %v738 = vand.u32 2147483647, %v487
    %vm739 = vcmp.eq.f32.partialorder %v738, 8.507059e+37
    %v740 = vand.u32 %v487, 2147483648
    %v741 = vor.u32 1.1754944e-38, %v740
    %v742 = vsel %vm739, %v741, %v737
    %v743 = vmul.f32 %v294, %v742
    %v744 = vrcp.pop %v488
    %v745 = vmul.f32 %v488, %v744
    %v746 = vsub.f32 1.0, %v745
    %v747 = vmul.f32 %v744, %v746
    %v748 = vadd.f32 %v744, %v747
    %vm749 = vweird.f32 %v488
    %vm750 = vweird.f32 %v744
    %vm751 = vmor %vm749, %vm750
    %v752 = vsel %vm751, %v744, %v748
    %v753 = vand.u32 2147483647, %v488
    %vm754 = vcmp.eq.f32.partialorder %v753, 8.507059e+37
    %v755 = vand.u32 %v488, 2147483648
    %v756 = vor.u32 1.1754944e-38, %v755
    %v757 = vsel %vm754, %v756, %v752
    %v758 = vmul.f32 %v297, %v757
    %v759 = vrcp.pop %v489
    %v760 = vmul.f32 %v489, %v759
    %v761 = vsub.f32 1.0, %v760
    %v762 = vmul.f32 %v759, %v761
    %v763 = vadd.f32 %v759, %v762
    %vm764 = vweird.f32 %v489
    %vm765 = vweird.f32 %v759
    %vm766 = vmor %vm764, %vm765
    %v767 = vsel %vm766, %v759, %v763
    %v768 = vand.u32 2147483647, %v489
    %vm769 = vcmp.eq.f32.partialorder %v768, 8.507059e+37
    %v770 = vand.u32 %v489, 2147483648
    %v771 = vor.u32 1.1754944e-38, %v770
    %v772 = vsel %vm769, %v771, %v767
    %v773 = vmul.f32 %v300, %v772
    %v774 = vrcp.pop %v490
    %v775 = vmul.f32 %v490, %v774
    %v776 = vsub.f32 1.0, %v775
    %v777 = vmul.f32 %v774, %v776
    %v778 = vadd.f32 %v774, %v777
    %vm779 = vweird.f32 %v490
    %vm780 = vweird.f32 %v774
    %vm781 = vmor %vm779, %vm780
    %v782 = vsel %vm781, %v774, %v778
    %v783 = vand.u32 2147483647, %v490
    %vm784 = vcmp.eq.f32.partialorder %v783, 8.507059e+37
    %v785 = vand.u32 %v490, 2147483648
    %v786 = vor.u32 1.1754944e-38, %v785
    %v787 = vsel %vm784, %v786, %v782
    %v788 = vmul.f32 %v303, %v787
    %v789 = vrcp.pop %v491
    %v790 = vmul.f32 %v491, %v789
    %v791 = vsub.f32 1.0, %v790
    %v792 = vmul.f32 %v789, %v791
    %v793 = vadd.f32 %v789, %v792
    %vm794 = vweird.f32 %v491
    %vm795 = vweird.f32 %v789
    %vm796 = vmor %vm794, %vm795
    %v797 = vsel %vm796, %v789, %v793
    %v798 = vand.u32 2147483647, %v491
    %vm799 = vcmp.eq.f32.partialorder %v798, 8.507059e+37
    %v800 = vand.u32 %v491, 2147483648
    %v801 = vor.u32 1.1754944e-38, %v800
    %v802 = vsel %vm799, %v801, %v797
    %v803 = vmul.f32 %v306, %v802
    %v804 = vrcp.pop %v492
    %v805 = vmul.f32 %v492, %v804
    %v806 = vsub.f32 1.0, %v805
    %v807 = vmul.f32 %v804, %v806
    %v808 = vadd.f32 %v804, %v807
    %vm809 = vweird.f32 %v492
    %vm810 = vweird.f32 %v804
    %vm811 = vmor %vm809, %vm810
    %v812 = vsel %vm811, %v804, %v808
    %v813 = vand.u32 2147483647, %v492
    %vm814 = vcmp.eq.f32.partialorder %v813, 8.507059e+37
    %v815 = vand.u32 %v492, 2147483648
    %v816 = vor.u32 1.1754944e-38, %v815
    %v817 = vsel %vm814, %v816, %v812
    %v818 = vmul.f32 %v309, %v817
    %v819 = vrcp.pop %v493
    %v820 = vmul.f32 %v493, %v819
    %v821 = vsub.f32 1.0, %v820
    %v822 = vmul.f32 %v819, %v821
    %v823 = vadd.f32 %v819, %v822
    %vm824 = vweird.f32 %v493
    %vm825 = vweird.f32 %v819
    %vm826 = vmor %vm824, %vm825
    %v827 = vsel %vm826, %v819, %v823
    %v828 = vand.u32 2147483647, %v493
    %vm829 = vcmp.eq.f32.partialorder %v828, 8.507059e+37
    %v830 = vand.u32 %v493, 2147483648
    %v831 = vor.u32 1.1754944e-38, %v830
    %v832 = vsel %vm829, %v831, %v827
    %v833 = vmul.f32 %v312, %v832
    %v834 = vrcp.pop %v494
    %v835 = vmul.f32 %v494, %v834
    %v836 = vsub.f32 1.0, %v835
    %v837 = vmul.f32 %v834, %v836
    %v838 = vadd.f32 %v834, %v837
    %vm839 = vweird.f32 %v494
    %vm840 = vweird.f32 %v834
    %vm841 = vmor %vm839, %vm840
    %v842 = vsel %vm841, %v834, %v838
    %v843 = vand.u32 2147483647, %v494
    %vm844 = vcmp.eq.f32.partialorder %v843, 8.507059e+37
    %v845 = vand.u32 %v494, 2147483648
    %v846 = vor.u32 1.1754944e-38, %v845
    %v847 = vsel %vm844, %v846, %v842
    %v848 = vmul.f32 %v315, %v847
    %v849 = vrcp.pop %v495
    %v850 = vmul.f32 %v495, %v849
    %v851 = vsub.f32 1.0, %v850
    %v852 = vmul.f32 %v849, %v851
    %v853 = vadd.f32 %v849, %v852
    %vm854 = vweird.f32 %v495
    %vm855 = vweird.f32 %v849
    %vm856 = vmor %vm854, %vm855
    %v857 = vsel %vm856, %v849, %v853
    %v858 = vand.u32 2147483647, %v495
    %vm859 = vcmp.eq.f32.partialorder %v858, 8.507059e+37
    %v860 = vand.u32 %v495, 2147483648
    %v861 = vor.u32 1.1754944e-38, %v860
    %v862 = vsel %vm859, %v861, %v857
    %v863 = vmul.f32 %v318, %v862
    %v864 = vrcp.pop %v496
    %v865 = vmul.f32 %v496, %v864
    %v866 = vsub.f32 1.0, %v865
    %v867 = vmul.f32 %v864, %v866
    %v868 = vadd.f32 %v864, %v867
    %vm869 = vweird.f32 %v496
    %vm870 = vweird.f32 %v864
    %vm871 = vmor %vm869, %vm870
    %v872 = vsel %vm871, %v864, %v868
    %v873 = vand.u32 2147483647, %v496
    %vm874 = vcmp.eq.f32.partialorder %v873, 8.507059e+37
    %v875 = vand.u32 %v496, 2147483648
    %v876 = vor.u32 1.1754944e-38, %v875
    %v877 = vsel %vm874, %v876, %v872
    %v878 = vmul.f32 %v321, %v877
    %v879 = vrcp.pop %v497
    %v880 = vmul.f32 %v497, %v879
    %v881 = vsub.f32 1.0, %v880
    %v882 = vmul.f32 %v879, %v881
    %v883 = vadd.f32 %v879, %v882
    %vm884 = vweird.f32 %v497
    %vm885 = vweird.f32 %v879
    %vm886 = vmor %vm884, %vm885
    %v887 = vsel %vm886, %v879, %v883
    %v888 = vand.u32 2147483647, %v497
    %vm889 = vcmp.eq.f32.partialorder %v888, 8.507059e+37
    %v890 = vand.u32 %v497, 2147483648
    %v891 = vor.u32 1.1754944e-38, %v890
    %v892 = vsel %vm889, %v891, %v887
    %v893 = vmul.f32 %v324, %v892
    %v894 = vrcp.pop %v498
    %v895 = vmul.f32 %v498, %v894
    %v896 = vsub.f32 1.0, %v895
    %v897 = vmul.f32 %v894, %v896
    %v898 = vadd.f32 %v894, %v897
    %vm899 = vweird.f32 %v498
    %vm900 = vweird.f32 %v894
    %vm901 = vmor %vm899, %vm900
    %v902 = vsel %vm901, %v894, %v898
    %v903 = vand.u32 2147483647, %v498
    %vm904 = vcmp.eq.f32.partialorder %v903, 8.507059e+37
    %v905 = vand.u32 %v498, 2147483648
    %v906 = vor.u32 1.1754944e-38, %v905
    %v907 = vsel %vm904, %v906, %v902
    %v908 = vmul.f32 %v327, %v907
    %v909 = vrcp.pop %v499
    %v910 = vmul.f32 %v499, %v909
    %v911 = vsub.f32 1.0, %v910
    %v912 = vmul.f32 %v909, %v911
    %v913 = vadd.f32 %v909, %v912
    %vm914 = vweird.f32 %v499
    %vm915 = vweird.f32 %v909
    %vm916 = vmor %vm914, %vm915
    %v917 = vsel %vm916, %v909, %v913
    %v918 = vand.u32 2147483647, %v499
    %vm919 = vcmp.eq.f32.partialorder %v918, 8.507059e+37
    %v920 = vand.u32 %v499, 2147483648
    %v921 = vor.u32 1.1754944e-38, %v920
    %v922 = vsel %vm919, %v921, %v917
    %v923 = vmul.f32 %v330, %v922
    %v924 = vrcp.pop %v500
    %v925 = vmul.f32 %v500, %v924
    %v926 = vsub.f32 1.0, %v925
    %v927 = vmul.f32 %v924, %v926
    %v928 = vadd.f32 %v924, %v927
    %vm929 = vweird.f32 %v500
    %vm930 = vweird.f32 %v924
    %vm931 = vmor %vm929, %vm930
    %v932 = vsel %vm931, %v924, %v928
    %v933 = vand.u32 2147483647, %v500
    %vm934 = vcmp.eq.f32.partialorder %v933, 8.507059e+37
    %v935 = vand.u32 %v500, 2147483648
    %v936 = vor.u32 1.1754944e-38, %v935
    %v937 = vsel %vm934, %v936, %v932
    %v938 = vmul.f32 %v333, %v937
    %v939 = vrcp.pop %v501
    %v940 = vmul.f32 %v501, %v939
    %v941 = vsub.f32 1.0, %v940
    %v942 = vmul.f32 %v939, %v941
    %v943 = vadd.f32 %v939, %v942
    %vm944 = vweird.f32 %v501
    %vm945 = vweird.f32 %v939
    %vm946 = vmor %vm944, %vm945
    %v947 = vsel %vm946, %v939, %v943
    %v948 = vand.u32 2147483647, %v501
    %vm949 = vcmp.eq.f32.partialorder %v948, 8.507059e+37
    %v950 = vand.u32 %v501, 2147483648
    %v951 = vor.u32 1.1754944e-38, %v950
    %v952 = vsel %vm949, %v951, %v947
    %v953 = vmul.f32 %v336, %v952
    %v954 = vrcp.pop %v502
    %v955 = vmul.f32 %v502, %v954
    %v956 = vsub.f32 1.0, %v955
    %v957 = vmul.f32 %v954, %v956
    %v958 = vadd.f32 %v954, %v957
    %vm959 = vweird.f32 %v502
    %vm960 = vweird.f32 %v954
    %vm961 = vmor %vm959, %vm960
    %v962 = vsel %vm961, %v954, %v958
    %v963 = vand.u32 2147483647, %v502
    %vm964 = vcmp.eq.f32.partialorder %v963, 8.507059e+37
    %v965 = vand.u32 %v502, 2147483648
    %v966 = vor.u32 1.1754944e-38, %v965
    %v967 = vsel %vm964, %v966, %v962
    %v968 = vmul.f32 %v339, %v967
    %v969 = vrcp.pop %v503
    %v970 = vmul.f32 %v503, %v969
    %v971 = vsub.f32 1.0, %v970
    %v972 = vmul.f32 %v969, %v971
    %v973 = vadd.f32 %v969, %v972
    %vm974 = vweird.f32 %v503
    %vm975 = vweird.f32 %v969
    %vm976 = vmor %vm974, %vm975
    %v977 = vsel %vm976, %v969, %v973
    %v978 = vand.u32 2147483647, %v503
    %vm979 = vcmp.eq.f32.partialorder %v978, 8.507059e+37
    %v980 = vand.u32 %v503, 2147483648
    %v981 = vor.u32 1.1754944e-38, %v980
    %v982 = vsel %vm979, %v981, %v977
    %v983 = vmul.f32 %v342, %v982
    %v1016 = vlaneseq
    %v1017 = vand.u32 %v1016, 127
    %v1018 = vperm.slane %v518, %v1017
    %v1019 = vperm.slane %v533, %v1017
    %v1020 = vperm.slane %v548, %v1017
    %v1021 = vperm.slane %v563, %v1017
    %v1022 = vperm.slane %v578, %v1017
    %v1023 = vperm.slane %v593, %v1017
    %v1024 = vperm.slane %v608, %v1017
    %v1025 = vperm.slane %v623, %v1017
    %v1026 = vperm.slane %v638, %v1017
    %v1027 = vperm.slane %v653, %v1017
    %v1028 = vperm.slane %v668, %v1017
    %v1029 = vperm.slane %v683, %v1017
    %v1030 = vperm.slane %v698, %v1017
    %v1031 = vperm.slane %v713, %v1017
    %v1032 = vperm.slane %v728, %v1017
    %v1033 = vperm.slane %v743, %v1017
    %v1034 = vperm.slane %v758, %v1017
    %v1035 = vperm.slane %v773, %v1017
    %v1036 = vperm.slane %v788, %v1017
    %v1037 = vperm.slane %v803, %v1017
    %v1038 = vperm.slane %v818, %v1017
    %v1039 = vperm.slane %v833, %v1017
    %v1040 = vperm.slane %v848, %v1017
    %v1041 = vperm.slane %v863, %v1017
    %v1042 = vperm.slane %v878, %v1017
    %v1043 = vperm.slane %v893, %v1017
    %v1044 = vperm.slane %v908, %v1017
    %v1045 = vperm.slane %v923, %v1017
    %v1046 = vperm.slane %v938, %v1017
    %v1047 = vperm.slane %v953, %v1017
    %v1048 = vperm.slane %v968, %v1017
    %v1049 = vperm.slane %v983, %v1017
    %vm1050 = vcmask 1041409
    %v1051 = vsel %vm1050, %v1019, %v1018
    %vm1052 = vcmask 1042434
    %v1053 = vsel %vm1052, %v1020, %v1051
    %vm1054 = vcmask 1043459
    %v1055 = vsel %vm1054, %v1021, %v1053
    %vm1056 = vcmask 1044484
    %v1057 = vsel %vm1056, %v1022, %v1055
    %vm1058 = vcmask 1045509
    %v1059 = vsel %vm1058, %v1023, %v1057
    %vm1060 = vcmask 1046534
    %v1061 = vsel %vm1060, %v1024, %v1059
    %vm1062 = vcmask 1047559
    %v1063 = vsel %vm1062, %v1025, %v1061
    %v1064 = vsel %vm1050, %v1027, %v1026
    %v1065 = vsel %vm1052, %v1028, %v1064
    %v1066 = vsel %vm1054, %v1029, %v1065
    %v1067 = vsel %vm1056, %v1030, %v1066
    %v1068 = vsel %vm1058, %v1031, %v1067
    %v1069 = vsel %vm1060, %v1032, %v1068
    %v1070 = vsel %vm1062, %v1033, %v1069
    %v1071 = vsel %vm1050, %v1035, %v1034
    %v1072 = vsel %vm1052, %v1036, %v1071
    %v1073 = vsel %vm1054, %v1037, %v1072
    %v1074 = vsel %vm1056, %v1038, %v1073
    %v1075 = vsel %vm1058, %v1039, %v1074
    %v1076 = vsel %vm1060, %v1040, %v1075
    %v1077 = vsel %vm1062, %v1041, %v1076
    %v1078 = vsel %vm1050, %v1043, %v1042
    %v1079 = vsel %vm1052, %v1044, %v1078
    %v1080 = vsel %vm1054, %v1045, %v1079
    %v1081 = vsel %vm1056, %v1046, %v1080
    %v1082 = vsel %vm1058, %v1047, %v1081
    %v1083 = vsel %vm1060, %v1048, %v1082
    %v1084 = vsel %vm1062, %v1049, %v1083
    %vm1089 = vcmask 23552
    %1090 = vst.msk [vmem:[%s10] sm:$0xff] %vm1089, %v1063
    %1091 = vst.msk [vmem:[%s10 + $0x8] sm:$0xff] %vm1089, %v1070
    %1092 = vst.msk [vmem:[%s10 + $0x10] sm:$0xff] %vm1089, %v1077
    %1093 = vst.msk [vmem:[%s10 + $0x18] sm:$0xff] %vm1089, %v1084
    %v1094 = vld [vmem:[%s2] sm:$0x3]
    %v1095 = vpack.c.bf16 %v518, %v518
    %v1096 = vpack.c.bf16 %v533, %v533
    %v1097 = vpack.c.bf16 %v548, %v548
    %v1098 = vpack.c.bf16 %v563, %v563
    %v1099 = vpack.c.bf16 %v578, %v578
    %v1100 = vpack.c.bf16 %v593, %v593
    %v1101 = vpack.c.bf16 %v608, %v608
    %v1102 = vpack.c.bf16 %v623, %v623
    %v1103 = vpack.c.bf16 %v638, %v638
    %v1104 = vpack.c.bf16 %v653, %v653
    %v1105 = vpack.c.bf16 %v668, %v668
    %v1106 = vpack.c.bf16 %v683, %v683
    %v1107 = vpack.c.bf16 %v698, %v698
    %v1108 = vpack.c.bf16 %v713, %v713
    %v1109 = vpack.c.bf16 %v728, %v728
    %v1110 = vpack.c.bf16 %v743, %v743
    %v1111 = vpack.c.bf16 %v758, %v758
    %v1112 = vpack.c.bf16 %v773, %v773
    %v1113 = vpack.c.bf16 %v788, %v788
    %v1114 = vpack.c.bf16 %v803, %v803
    %v1115 = vpack.c.bf16 %v818, %v818
    %v1116 = vpack.c.bf16 %v833, %v833
    %v1117 = vpack.c.bf16 %v848, %v848
    %v1118 = vpack.c.bf16 %v863, %v863
    %v1119 = vpack.c.bf16 %v878, %v878
    %v1120 = vpack.c.bf16 %v893, %v893
    %v1121 = vpack.c.bf16 %v908, %v908
    %v1122 = vpack.c.bf16 %v923, %v923
    %v1123 = vpack.c.bf16 %v938, %v938
    %v1124 = vpack.c.bf16 %v953, %v953
    %v1125 = vpack.c.bf16 %v968, %v968
    %v1126 = vpack.c.bf16 %v983, %v983
    %v1127 = vld [vmem:[%s3] sm:$0x1]
    %v1129 = vperm.slane %v1127, 0
    %v1163 = vunpack.c.l.b16 %v1095
    %v1164 = vunpack.c.l.b16 %v1096
    %v1165 = vunpack.c.l.b16 %v1097
    %v1166 = vunpack.c.l.b16 %v1098
    %v1167 = vunpack.c.l.b16 %v1099
    %v1168 = vunpack.c.l.b16 %v1100
    %v1169 = vunpack.c.l.b16 %v1101
    %v1170 = vunpack.c.l.b16 %v1102
    %v1171 = vunpack.c.l.b16 %v1103
    %v1172 = vunpack.c.l.b16 %v1104
    %v1173 = vunpack.c.l.b16 %v1105
    %v1174 = vunpack.c.l.b16 %v1106
    %v1175 = vunpack.c.l.b16 %v1107
    %v1176 = vunpack.c.l.b16 %v1108
    %v1177 = vunpack.c.l.b16 %v1109
    %v1178 = vunpack.c.l.b16 %v1110
    %v1179 = vunpack.c.l.b16 %v1111
    %v1180 = vunpack.c.l.b16 %v1112
    %v1181 = vunpack.c.l.b16 %v1113
    %v1182 = vunpack.c.l.b16 %v1114
    %v1183 = vunpack.c.l.b16 %v1115
    %v1184 = vunpack.c.l.b16 %v1116
    %v1185 = vunpack.c.l.b16 %v1117
    %v1186 = vunpack.c.l.b16 %v1118
    %v1187 = vunpack.c.l.b16 %v1119
    %v1188 = vunpack.c.l.b16 %v1120
    %v1189 = vunpack.c.l.b16 %v1121
    %v1190 = vunpack.c.l.b16 %v1122
    %v1191 = vunpack.c.l.b16 %v1123
    %v1192 = vunpack.c.l.b16 %v1124
    %v1193 = vunpack.c.l.b16 %v1125
    %v1194 = vunpack.c.l.b16 %v1126
    %v1195 = vperm.slane %v1163, %v1017
    %v1196 = vperm.slane %v1164, %v1017
    %v1197 = vperm.slane %v1165, %v1017
    %v1198 = vperm.slane %v1166, %v1017
    %v1199 = vperm.slane %v1167, %v1017
    %v1200 = vperm.slane %v1168, %v1017
    %v1201 = vperm.slane %v1169, %v1017
    %v1202 = vperm.slane %v1170, %v1017
    %v1203 = vperm.slane %v1171, %v1017
    %v1204 = vperm.slane %v1172, %v1017
    %v1205 = vperm.slane %v1173, %v1017
    %v1206 = vperm.slane %v1174, %v1017
    %v1207 = vperm.slane %v1175, %v1017
    %v1208 = vperm.slane %v1176, %v1017
    %v1209 = vperm.slane %v1177, %v1017
    %v1210 = vperm.slane %v1178, %v1017
    %v1211 = vperm.slane %v1179, %v1017
    %v1212 = vperm.slane %v1180, %v1017
    %v1213 = vperm.slane %v1181, %v1017
    %v1214 = vperm.slane %v1182, %v1017
    %v1215 = vperm.slane %v1183, %v1017
    %v1216 = vperm.slane %v1184, %v1017
    %v1217 = vperm.slane %v1185, %v1017
    %v1218 = vperm.slane %v1186, %v1017
    %v1219 = vperm.slane %v1187, %v1017
    %v1220 = vperm.slane %v1188, %v1017
    %v1221 = vperm.slane %v1189, %v1017
    %v1222 = vperm.slane %v1190, %v1017
    %v1223 = vperm.slane %v1191, %v1017
    %v1224 = vperm.slane %v1192, %v1017
    %v1225 = vperm.slane %v1193, %v1017
    %v1226 = vperm.slane %v1194, %v1017
    %v1227 = vsel %vm1050, %v1196, %v1195
    %v1228 = vsel %vm1052, %v1197, %v1227
    %v1229 = vsel %vm1054, %v1198, %v1228
    %v1230 = vsel %vm1056, %v1199, %v1229
    %v1231 = vsel %vm1058, %v1200, %v1230
    %v1232 = vsel %vm1060, %v1201, %v1231
    %v1233 = vsel %vm1062, %v1202, %v1232
    %v1234 = vsel %vm1050, %v1204, %v1203
    %v1235 = vsel %vm1052, %v1205, %v1234
    %v1236 = vsel %vm1054, %v1206, %v1235
    %v1237 = vsel %vm1056, %v1207, %v1236
    %v1238 = vsel %vm1058, %v1208, %v1237
    %v1239 = vsel %vm1060, %v1209, %v1238
    %v1240 = vsel %vm1062, %v1210, %v1239
    %v1241 = vsel %vm1050, %v1212, %v1211
    %v1242 = vsel %vm1052, %v1213, %v1241
    %v1243 = vsel %vm1054, %v1214, %v1242
    %v1244 = vsel %vm1056, %v1215, %v1243
    %v1245 = vsel %vm1058, %v1216, %v1244
    %v1246 = vsel %vm1060, %v1217, %v1245
    %v1247 = vsel %vm1062, %v1218, %v1246
    %v1248 = vsel %vm1050, %v1220, %v1219
    %v1249 = vsel %vm1052, %v1221, %v1248
    %v1250 = vsel %vm1054, %v1222, %v1249
    %v1251 = vsel %vm1056, %v1223, %v1250
    %v1252 = vsel %vm1058, %v1224, %v1251
    %v1253 = vsel %vm1060, %v1225, %v1252
    %v1254 = vsel %vm1062, %v1226, %v1253
    %v1255 = vpack.c.b16 %v1240, %v1233
    %v1256 = vpack.c.b16 %v1254, %v1247
    %v1258 = vsel %vm1089, %v1255, 0
    %v1261 = vsel %vm1089, %v1256, 0
    %vm1263 = vcmask 1040384
    %vm1264 = vcmask 1041408
    %v1265 = vsel %vm1263, 4294967295, 65535
    %v1266 = vsel %vm1264, %v1265, 0
    %v1268 = vand.u32 %v1094, %v1266
    %1270 = vmatpush.bf16.msra.mxu0 0
    %1271 = vmatpush.bf16.msra.mxu0 0
    %1272 = vmatpush.bf16.msra.mxu0 0
    %1273 = vmatpush.bf16.msra.mxu0 0
    %1274 = vmatpush.bf16.msra.mxu0 0
    %1275 = vmatpush.bf16.msra.mxu0 0
    %1276 = vmatpush.bf16.msra.mxu0 0
    %1277 = vmatpush.bf16.msra.mxu0 %v1268
    %1278 = vmatmul.bf16.gmra.mxu0 %v1258
    %v1279 = vpop.f32.mrf.mxu0
    %v1280 = vadd.f32 %v1129, %v1279
    %v1281 = vpop.f32.mrf.mxu0
    %v1282 = vadd.f32 %v1129, %v1281
    %1283 = vmatmul.bf16.gmra.mxu0 %v1261
    %v1284 = vpop.f32.mrf.mxu0
    %v1285 = vadd.f32 %v1129, %v1284
    %v1286 = vpop.f32.mrf.mxu0
    %v1287 = vadd.f32 %v1129, %v1286
    %1288 = vdwg.mxu0
    %vm1289 = vcmp.ge.f32.partialorder %v1280, 0.0
    %vm1290 = vcmp.ge.f32.partialorder %v1282, 0.0
    %vm1291 = vcmp.ge.f32.partialorder %v1285, 0.0
    %vm1292 = vcmp.ge.f32.partialorder %v1287, 0.0
    %v1293 = vmul.f32 %v1280, 0.01
    %v1294 = vmul.f32 %v1282, 0.01
    %v1295 = vmul.f32 %v1285, 0.01
    %v1296 = vmul.f32 %v1287, 0.01
    %v1297 = vsel %vm1289, %v1280, %v1293
    %v1298 = vsel %vm1290, %v1282, %v1294
    %v1299 = vsel %vm1291, %v1285, %v1295
    %v1300 = vsel %vm1292, %v1287, %v1296
    %v1301 = vld [vmem:[%s6] sm:$0x1]
    %v1302 = vld [vmem:[%s7] sm:$0x1]
    %1303 = vadd.xlane.f32.xlu0 %v1297
    %v1304 = vpop.xlane.xlu0 %1303
    %1305 = vadd.xlane.f32.xlu0 %v1298
    %v1306 = vpop.xlane.xlu0 %1305
    %1307 = vadd.xlane.f32.xlu0 %v1299
    %v1308 = vpop.xlane.xlu0 %1307
    %1309 = vadd.xlane.f32.xlu0 %v1300
    %v1310 = vpop.xlane.xlu0 %1309
    %v1311 = vrcp.pop 128.0
    %v1312 = vmul.f32 128.0, %v1311
    %v1313 = vsub.f32 1.0, %v1312
    %v1314 = vmul.f32 %v1311, %v1313
    %v1315 = vadd.f32 %v1311, %v1314
    %vm1316 = vweird.f32 %v1311
    %v1317 = vsel %vm1316, %v1311, %v1315
    %v1318 = vmul.f32 %v1304, %v1317
    %v1319 = vmul.f32 %v1306, %v1317
    %v1320 = vmul.f32 %v1308, %v1317
    %v1321 = vmul.f32 %v1310, %v1317
    %v1322 = vsub.f32 %v1297, %v1318
    %v1323 = vsub.f32 %v1298, %v1319
    %v1324 = vsub.f32 %v1299, %v1320
    %v1325 = vsub.f32 %v1300, %v1321
    %v1326 = vmul.f32 %v1322, %v1322
    %v1327 = vmul.f32 %v1323, %v1323
    %v1328 = vmul.f32 %v1324, %v1324
    %v1329 = vmul.f32 %v1325, %v1325
    %1330 = vadd.xlane.f32.xlu0 %v1326
    %v1331 = vpop.xlane.xlu0 %1330
    %1332 = vadd.xlane.f32.xlu0 %v1327
    %v1333 = vpop.xlane.xlu0 %1332
    %1334 = vadd.xlane.f32.xlu0 %v1328
    %v1335 = vpop.xlane.xlu0 %1334
    %1336 = vadd.xlane.f32.xlu0 %v1329
    %v1337 = vpop.xlane.xlu0 %1336
    %v1338 = vmul.f32 %v1331, %v1317
    %v1339 = vmul.f32 %v1333, %v1317
    %v1340 = vmul.f32 %v1335, %v1317
    %v1341 = vmul.f32 %v1337, %v1317
    %v1342 = vadd.f32 %v1338, 1e-05
    %v1343 = vadd.f32 %v1339, 1e-05
    %v1344 = vadd.f32 %v1340, 1e-05
    %v1345 = vadd.f32 %v1341, 1e-05
    %v1346 = vrsqrt.pop %v1342
    %v1347 = vmul.f32 %v1346, %v1342
    %v1348 = vmul.f32 %v1347, %v1346
    %v1349 = vmul.f32 0.5, %v1348
    %v1350 = vsub.f32 1.5, %v1349
    %v1351 = vmul.f32 %v1346, %v1350
    %vm1352 = vweird.f32 %v1342
    %vm1353 = vweird.f32 %v1346
    %vm1354 = vmor %vm1352, %vm1353
    %v1355 = vsel %vm1354, %v1346, %v1351
    %v1356 = vrsqrt.pop %v1343
    %v1357 = vmul.f32 %v1356, %v1343
    %v1358 = vmul.f32 %v1357, %v1356
    %v1359 = vmul.f32 0.5, %v1358
    %v1360 = vsub.f32 1.5, %v1359
    %v1361 = vmul.f32 %v1356, %v1360
    %vm1362 = vweird.f32 %v1343
    %vm1363 = vweird.f32 %v1356
    %vm1364 = vmor %vm1362, %vm1363
    %v1365 = vsel %vm1364, %v1356, %v1361
    %v1366 = vrsqrt.pop %v1344
    %v1367 = vmul.f32 %v1366, %v1344
    %v1368 = vmul.f32 %v1367, %v1366
    %v1369 = vmul.f32 0.5, %v1368
    %v1370 = vsub.f32 1.5, %v1369
    %v1371 = vmul.f32 %v1366, %v1370
    %vm1372 = vweird.f32 %v1344
    %vm1373 = vweird.f32 %v1366
    %vm1374 = vmor %vm1372, %vm1373
    %v1375 = vsel %vm1374, %v1366, %v1371
    %v1376 = vrsqrt.pop %v1345
    %v1377 = vmul.f32 %v1376, %v1345
    %v1378 = vmul.f32 %v1377, %v1376
    %v1379 = vmul.f32 0.5, %v1378
    %v1380 = vsub.f32 1.5, %v1379
    %v1381 = vmul.f32 %v1376, %v1380
    %vm1382 = vweird.f32 %v1345
    %vm1383 = vweird.f32 %v1376
    %vm1384 = vmor %vm1382, %vm1383
    %v1385 = vsel %vm1384, %v1376, %v1381
    %v1386 = vmul.f32 %v1322, %v1355
    %v1387 = vmul.f32 %v1323, %v1365
    %v1388 = vmul.f32 %v1324, %v1375
    %v1389 = vmul.f32 %v1325, %v1385
    %v1391 = vperm.slane %v1301, 0
    %v1393 = vmul.f32 %v1386, %v1391
    %v1394 = vmul.f32 %v1387, %v1391
    %v1395 = vmul.f32 %v1388, %v1391
    %v1396 = vmul.f32 %v1389, %v1391
    %v1398 = vperm.slane %v1302, 0
    %v1400 = vadd.f32 %v1393, %v1398
    %v1401 = vadd.f32 %v1394, %v1398
    %v1402 = vadd.f32 %v1395, %v1398
    %v1403 = vadd.f32 %v1396, %v1398
    %v1404 = vld [vmem:[#allocation2] sm:$0xf]
    %v1405 = vld [vmem:[#allocation2 + $0x4] sm:$0xf]
    %v1406 = vld [vmem:[#allocation2 + $0x8] sm:$0xf]
    %v1407 = vld [vmem:[#allocation2 + $0xc] sm:$0xf]
    %v1408 = vld [vmem:[#allocation2 + $0x10] sm:$0xf]
    %v1409 = vld [vmem:[#allocation2 + $0x14] sm:$0xf]
    %v1410 = vld [vmem:[#allocation2 + $0x18] sm:$0xf]
    %v1411 = vld [vmem:[#allocation2 + $0x1c] sm:$0xf]
    %v1412 = vld [vmem:[#allocation2 + $0x20] sm:$0xf]
    %v1413 = vld [vmem:[#allocation2 + $0x24] sm:$0xf]
    %v1414 = vld [vmem:[#allocation2 + $0x28] sm:$0xf]
    %v1415 = vld [vmem:[#allocation2 + $0x2c] sm:$0xf]
    %v1416 = vld [vmem:[#allocation2 + $0x30] sm:$0xf]
    %v1417 = vld [vmem:[#allocation2 + $0x34] sm:$0xf]
    %v1418 = vld [vmem:[#allocation2 + $0x38] sm:$0xf]
    %v1419 = vld [vmem:[#allocation2 + $0x3c] sm:$0xf]
    %v1420 = vpack.c.bf16 %v1401, %v1400
    %v1421 = vpack.c.bf16 %v1403, %v1402
    %v1422 = vld [vmem:[%s5] sm:$0x1]
    %v1424 = vperm.slane %v1422, 0
    %v1442 = vunpack.c.l.b16 %v1404
    %v1443 = vunpack.c.l.b16 %v1405
    %v1444 = vunpack.c.l.b16 %v1406
    %v1445 = vunpack.c.l.b16 %v1407
    %v1446 = vunpack.c.l.b16 %v1408
    %v1447 = vunpack.c.l.b16 %v1409
    %v1448 = vunpack.c.l.b16 %v1410
    %v1449 = vunpack.c.l.b16 %v1411
    %v1450 = vunpack.c.l.b16 %v1412
    %v1451 = vunpack.c.l.b16 %v1413
    %v1452 = vunpack.c.l.b16 %v1414
    %v1453 = vunpack.c.l.b16 %v1415
    %v1454 = vunpack.c.l.b16 %v1416
    %v1455 = vunpack.c.l.b16 %v1417
    %v1456 = vunpack.c.l.b16 %v1418
    %v1457 = vunpack.c.l.b16 %v1419
    %v1458 = vpack.c.b16 %v1443, %v1442
    %v1459 = vpack.c.b16 %v1445, %v1444
    %v1460 = vpack.c.b16 %v1447, %v1446
    %v1461 = vpack.c.b16 %v1449, %v1448
    %v1462 = vpack.c.b16 %v1451, %v1450
    %v1463 = vpack.c.b16 %v1453, %v1452
    %v1464 = vpack.c.b16 %v1455, %v1454
    %v1465 = vpack.c.b16 %v1457, %v1456
    %1474 = vmatpush.bf16.msra.mxu0 %v1465
    %1475 = vmatpush.bf16.msra.mxu0 %v1464
    %1476 = vmatpush.bf16.msra.mxu0 %v1463
    %1477 = vmatpush.bf16.msra.mxu0 %v1462
    %1478 = vmatpush.bf16.msra.mxu0 %v1461
    %1479 = vmatpush.bf16.msra.mxu0 %v1460
    %1480 = vmatpush.bf16.msra.mxu0 %v1459
    %1481 = vmatpush.bf16.msra.mxu0 %v1458
    %1482 = vmatmul.bf16.gmra.mxu0 %v1420
    %v1483 = vpop.f32.mrf.mxu0
    %v1484 = vadd.f32 %v1424, %v1483
    %v1485 = vpop.f32.mrf.mxu0
    %v1486 = vadd.f32 %v1424, %v1485
    %1487 = vmatmul.bf16.gmra.mxu0 %v1421
    %v1488 = vpop.f32.mrf.mxu0
    %v1489 = vadd.f32 %v1424, %v1488
    %v1490 = vpop.f32.mrf.mxu0
    %v1491 = vadd.f32 %v1424, %v1490
    %1492 = vdwg.mxu0
    %vm1493 = vcmp.ge.f32.partialorder %v1484, 0.0
    %vm1494 = vcmp.ge.f32.partialorder %v1486, 0.0
    %vm1495 = vcmp.ge.f32.partialorder %v1489, 0.0
    %vm1496 = vcmp.ge.f32.partialorder %v1491, 0.0
    %v1497 = vmul.f32 %v1484, 0.01
    %v1498 = vmul.f32 %v1486, 0.01
    %v1499 = vmul.f32 %v1489, 0.01
    %v1500 = vmul.f32 %v1491, 0.01
    %v1501 = vsel %vm1493, %v1484, %v1497
    %v1502 = vsel %vm1494, %v1486, %v1498
    %v1503 = vsel %vm1495, %v1489, %v1499
    %v1504 = vsel %vm1496, %v1491, %v1500
    %v1505 = vadd.f32 %v1297, %v1501
    %v1506 = vadd.f32 %v1298, %v1502
    %v1507 = vadd.f32 %v1299, %v1503
    %v1508 = vadd.f32 %v1300, %v1504
    %s1509 = scalar_lea.vmem %s6, 1
    %v1510 = vld [vmem:[%s1509] sm:$0x1]
    %s1511 = scalar_lea.vmem %s7, 1
    %v1512 = vld [vmem:[%s1511] sm:$0x1]
    %1513 = vadd.xlane.f32.xlu0 %v1505
    %v1514 = vpop.xlane.xlu0 %1513
    %1515 = vadd.xlane.f32.xlu0 %v1506
    %v1516 = vpop.xlane.xlu0 %1515
    %1517 = vadd.xlane.f32.xlu0 %v1507
    %v1518 = vpop.xlane.xlu0 %1517
    %1519 = vadd.xlane.f32.xlu0 %v1508
    %v1520 = vpop.xlane.xlu0 %1519
    %v1521 = vmul.f32 %v1514, %v1317
    %v1522 = vmul.f32 %v1516, %v1317
    %v1523 = vmul.f32 %v1518, %v1317
    %v1524 = vmul.f32 %v1520, %v1317
    %v1525 = vsub.f32 %v1505, %v1521
    %v1526 = vsub.f32 %v1506, %v1522
    %v1527 = vsub.f32 %v1507, %v1523
    %v1528 = vsub.f32 %v1508, %v1524
    %v1529 = vmul.f32 %v1525, %v1525
    %v1530 = vmul.f32 %v1526, %v1526
    %v1531 = vmul.f32 %v1527, %v1527
    %v1532 = vmul.f32 %v1528, %v1528
    %1533 = vadd.xlane.f32.xlu0 %v1529
    %v1534 = vpop.xlane.xlu0 %1533
    %1535 = vadd.xlane.f32.xlu0 %v1530
    %v1536 = vpop.xlane.xlu0 %1535
    %1537 = vadd.xlane.f32.xlu0 %v1531
    %v1538 = vpop.xlane.xlu0 %1537
    %1539 = vadd.xlane.f32.xlu0 %v1532
    %v1540 = vpop.xlane.xlu0 %1539
    %v1541 = vmul.f32 %v1534, %v1317
    %v1542 = vmul.f32 %v1536, %v1317
    %v1543 = vmul.f32 %v1538, %v1317
    %v1544 = vmul.f32 %v1540, %v1317
    %v1545 = vadd.f32 %v1541, 1e-05
    %v1546 = vadd.f32 %v1542, 1e-05
    %v1547 = vadd.f32 %v1543, 1e-05
    %v1548 = vadd.f32 %v1544, 1e-05
    %v1549 = vrsqrt.pop %v1545
    %v1550 = vmul.f32 %v1549, %v1545
    %v1551 = vmul.f32 %v1550, %v1549
    %v1552 = vmul.f32 0.5, %v1551
    %v1553 = vsub.f32 1.5, %v1552
    %v1554 = vmul.f32 %v1549, %v1553
    %vm1555 = vweird.f32 %v1545
    %vm1556 = vweird.f32 %v1549
    %vm1557 = vmor %vm1555, %vm1556
    %v1558 = vsel %vm1557, %v1549, %v1554
    %v1559 = vrsqrt.pop %v1546
    %v1560 = vmul.f32 %v1559, %v1546
    %v1561 = vmul.f32 %v1560, %v1559
    %v1562 = vmul.f32 0.5, %v1561
    %v1563 = vsub.f32 1.5, %v1562
    %v1564 = vmul.f32 %v1559, %v1563
    %vm1565 = vweird.f32 %v1546
    %vm1566 = vweird.f32 %v1559
    %vm1567 = vmor %vm1565, %vm1566
    %v1568 = vsel %vm1567, %v1559, %v1564
    %v1569 = vrsqrt.pop %v1547
    %v1570 = vmul.f32 %v1569, %v1547
    %v1571 = vmul.f32 %v1570, %v1569
    %v1572 = vmul.f32 0.5, %v1571
    %v1573 = vsub.f32 1.5, %v1572
    %v1574 = vmul.f32 %v1569, %v1573
    %vm1575 = vweird.f32 %v1547
    %vm1576 = vweird.f32 %v1569
    %vm1577 = vmor %vm1575, %vm1576
    %v1578 = vsel %vm1577, %v1569, %v1574
    %v1579 = vrsqrt.pop %v1548
    %v1580 = vmul.f32 %v1579, %v1548
    %v1581 = vmul.f32 %v1580, %v1579
    %v1582 = vmul.f32 0.5, %v1581
    %v1583 = vsub.f32 1.5, %v1582
    %v1584 = vmul.f32 %v1579, %v1583
    %vm1585 = vweird.f32 %v1548
    %vm1586 = vweird.f32 %v1579
    %vm1587 = vmor %vm1585, %vm1586
    %v1588 = vsel %vm1587, %v1579, %v1584
    %v1589 = vmul.f32 %v1525, %v1558
    %v1590 = vmul.f32 %v1526, %v1568
    %v1591 = vmul.f32 %v1527, %v1578
    %v1592 = vmul.f32 %v1528, %v1588
    %v1594 = vperm.slane %v1510, 0
    %v1596 = vmul.f32 %v1589, %v1594
    %v1597 = vmul.f32 %v1590, %v1594
    %v1598 = vmul.f32 %v1591, %v1594
    %v1599 = vmul.f32 %v1592, %v1594
    %v1601 = vperm.slane %v1512, 0
    %v1603 = vadd.f32 %v1596, %v1601
    %v1604 = vadd.f32 %v1597, %v1601
    %v1605 = vadd.f32 %v1598, %v1601
    %v1606 = vadd.f32 %v1599, %v1601
    %s1607 = scalar_lea.vmem [#allocation2], 64
    %v1608 = vld [vmem:[%s1607] sm:$0xf]
    %v1609 = vld [vmem:[%s1607 + $0x4] sm:$0xf]
    %v1610 = vld [vmem:[%s1607 + $0x8] sm:$0xf]
    %v1611 = vld [vmem:[%s1607 + $0xc] sm:$0xf]
    %v1612 = vld [vmem:[%s1607 + $0x10] sm:$0xf]
    %v1613 = vld [vmem:[%s1607 + $0x14] sm:$0xf]
    %v1614 = vld [vmem:[%s1607 + $0x18] sm:$0xf]
    %v1615 = vld [vmem:[%s1607 + $0x1c] sm:$0xf]
    %v1616 = vld [vmem:[%s1607 + $0x20] sm:$0xf]
    %v1617 = vld [vmem:[%s1607 + $0x24] sm:$0xf]
    %v1618 = vld [vmem:[%s1607 + $0x28] sm:$0xf]
    %v1619 = vld [vmem:[%s1607 + $0x2c] sm:$0xf]
    %v1620 = vld [vmem:[%s1607 + $0x30] sm:$0xf]
    %v1621 = vld [vmem:[%s1607 + $0x34] sm:$0xf]
    %v1622 = vld [vmem:[%s1607 + $0x38] sm:$0xf]
    %v1623 = vld [vmem:[%s1607 + $0x3c] sm:$0xf]
    %v1624 = vpack.c.bf16 %v1604, %v1603
    %v1625 = vpack.c.bf16 %v1606, %v1605
    %s1626 = scalar_lea.vmem %s5, 1
    %v1627 = vld [vmem:[%s1626] sm:$0x1]
    %v1629 = vperm.slane %v1627, 0
    %v1647 = vunpack.c.l.b16 %v1608
    %v1648 = vunpack.c.l.b16 %v1609
    %v1649 = vunpack.c.l.b16 %v1610
    %v1650 = vunpack.c.l.b16 %v1611
    %v1651 = vunpack.c.l.b16 %v1612
    %v1652 = vunpack.c.l.b16 %v1613
    %v1653 = vunpack.c.l.b16 %v1614
    %v1654 = vunpack.c.l.b16 %v1615
    %v1655 = vunpack.c.l.b16 %v1616
    %v1656 = vunpack.c.l.b16 %v1617
    %v1657 = vunpack.c.l.b16 %v1618
    %v1658 = vunpack.c.l.b16 %v1619
    %v1659 = vunpack.c.l.b16 %v1620
    %v1660 = vunpack.c.l.b16 %v1621
    %v1661 = vunpack.c.l.b16 %v1622
    %v1662 = vunpack.c.l.b16 %v1623
    %v1663 = vpack.c.b16 %v1648, %v1647
    %v1664 = vpack.c.b16 %v1650, %v1649
    %v1665 = vpack.c.b16 %v1652, %v1651
    %v1666 = vpack.c.b16 %v1654, %v1653
    %v1667 = vpack.c.b16 %v1656, %v1655
    %v1668 = vpack.c.b16 %v1658, %v1657
    %v1669 = vpack.c.b16 %v1660, %v1659
    %v1670 = vpack.c.b16 %v1662, %v1661
    %1679 = vmatpush.bf16.msra.mxu0 %v1670
    %1680 = vmatpush.bf16.msra.mxu0 %v1669
    %1681 = vmatpush.bf16.msra.mxu0 %v1668
    %1682 = vmatpush.bf16.msra.mxu0 %v1667
    %1683 = vmatpush.bf16.msra.mxu0 %v1666
    %1684 = vmatpush.bf16.msra.mxu0 %v1665
    %1685 = vmatpush.bf16.msra.mxu0 %v1664
    %1686 = vmatpush.bf16.msra.mxu0 %v1663
    %1687 = vmatmul.bf16.gmra.mxu0 %v1624
    %v1688 = vpop.f32.mrf.mxu0
    %v1689 = vadd.f32 %v1629, %v1688
    %v1690 = vpop.f32.mrf.mxu0
    %v1691 = vadd.f32 %v1629, %v1690
    %1692 = vmatmul.bf16.gmra.mxu0 %v1625
    %v1693 = vpop.f32.mrf.mxu0
    %v1694 = vadd.f32 %v1629, %v1693
    %v1695 = vpop.f32.mrf.mxu0
    %v1696 = vadd.f32 %v1629, %v1695
    %1697 = vdwg.mxu0
    %vm1698 = vcmp.ge.f32.partialorder %v1689, 0.0
    %vm1699 = vcmp.ge.f32.partialorder %v1691, 0.0
    %vm1700 = vcmp.ge.f32.partialorder %v1694, 0.0
    %vm1701 = vcmp.ge.f32.partialorder %v1696, 0.0
    %v1702 = vmul.f32 %v1689, 0.01
    %v1703 = vmul.f32 %v1691, 0.01
    %v1704 = vmul.f32 %v1694, 0.01
    %v1705 = vmul.f32 %v1696, 0.01
    %v1706 = vsel %vm1698, %v1689, %v1702
    %v1707 = vsel %vm1699, %v1691, %v1703
    %v1708 = vsel %vm1700, %v1694, %v1704
    %v1709 = vsel %vm1701, %v1696, %v1705
    %v1710 = vadd.f32 %v1505, %v1706
    %v1711 = vadd.f32 %v1506, %v1707
    %v1712 = vadd.f32 %v1507, %v1708
    %v1713 = vadd.f32 %v1508, %v1709
    %s1714 = scalar_lea.vmem %s6, 2
    %v1715 = vld [vmem:[%s1714] sm:$0x1]
    %s1716 = scalar_lea.vmem %s7, 2
    %v1717 = vld [vmem:[%s1716] sm:$0x1]
    %1718 = vadd.xlane.f32.xlu0 %v1710
    %v1719 = vpop.xlane.xlu0 %1718
    %1720 = vadd.xlane.f32.xlu0 %v1711
    %v1721 = vpop.xlane.xlu0 %1720
    %1722 = vadd.xlane.f32.xlu0 %v1712
    %v1723 = vpop.xlane.xlu0 %1722
    %1724 = vadd.xlane.f32.xlu0 %v1713
    %v1725 = vpop.xlane.xlu0 %1724
    %v1726 = vmul.f32 %v1719, %v1317
    %v1727 = vmul.f32 %v1721, %v1317
    %v1728 = vmul.f32 %v1723, %v1317
    %v1729 = vmul.f32 %v1725, %v1317
    %v1730 = vsub.f32 %v1710, %v1726
    %v1731 = vsub.f32 %v1711, %v1727
    %v1732 = vsub.f32 %v1712, %v1728
    %v1733 = vsub.f32 %v1713, %v1729
    %v1734 = vmul.f32 %v1730, %v1730
    %v1735 = vmul.f32 %v1731, %v1731
    %v1736 = vmul.f32 %v1732, %v1732
    %v1737 = vmul.f32 %v1733, %v1733
    %1738 = vadd.xlane.f32.xlu0 %v1734
    %v1739 = vpop.xlane.xlu0 %1738
    %1740 = vadd.xlane.f32.xlu0 %v1735
    %v1741 = vpop.xlane.xlu0 %1740
    %1742 = vadd.xlane.f32.xlu0 %v1736
    %v1743 = vpop.xlane.xlu0 %1742
    %1744 = vadd.xlane.f32.xlu0 %v1737
    %v1745 = vpop.xlane.xlu0 %1744
    %v1746 = vmul.f32 %v1739, %v1317
    %v1747 = vmul.f32 %v1741, %v1317
    %v1748 = vmul.f32 %v1743, %v1317
    %v1749 = vmul.f32 %v1745, %v1317
    %v1750 = vadd.f32 %v1746, 1e-05
    %v1751 = vadd.f32 %v1747, 1e-05
    %v1752 = vadd.f32 %v1748, 1e-05
    %v1753 = vadd.f32 %v1749, 1e-05
    %v1754 = vrsqrt.pop %v1750
    %v1755 = vmul.f32 %v1754, %v1750
    %v1756 = vmul.f32 %v1755, %v1754
    %v1757 = vmul.f32 0.5, %v1756
    %v1758 = vsub.f32 1.5, %v1757
    %v1759 = vmul.f32 %v1754, %v1758
    %vm1760 = vweird.f32 %v1750
    %vm1761 = vweird.f32 %v1754
    %vm1762 = vmor %vm1760, %vm1761
    %v1763 = vsel %vm1762, %v1754, %v1759
    %v1764 = vrsqrt.pop %v1751
    %v1765 = vmul.f32 %v1764, %v1751
    %v1766 = vmul.f32 %v1765, %v1764
    %v1767 = vmul.f32 0.5, %v1766
    %v1768 = vsub.f32 1.5, %v1767
    %v1769 = vmul.f32 %v1764, %v1768
    %vm1770 = vweird.f32 %v1751
    %vm1771 = vweird.f32 %v1764
    %vm1772 = vmor %vm1770, %vm1771
    %v1773 = vsel %vm1772, %v1764, %v1769
    %v1774 = vrsqrt.pop %v1752
    %v1775 = vmul.f32 %v1774, %v1752
    %v1776 = vmul.f32 %v1775, %v1774
    %v1777 = vmul.f32 0.5, %v1776
    %v1778 = vsub.f32 1.5, %v1777
    %v1779 = vmul.f32 %v1774, %v1778
    %vm1780 = vweird.f32 %v1752
    %vm1781 = vweird.f32 %v1774
    %vm1782 = vmor %vm1780, %vm1781
    %v1783 = vsel %vm1782, %v1774, %v1779
    %v1784 = vrsqrt.pop %v1753
    %v1785 = vmul.f32 %v1784, %v1753
    %v1786 = vmul.f32 %v1785, %v1784
    %v1787 = vmul.f32 0.5, %v1786
    %v1788 = vsub.f32 1.5, %v1787
    %v1789 = vmul.f32 %v1784, %v1788
    %vm1790 = vweird.f32 %v1753
    %vm1791 = vweird.f32 %v1784
    %vm1792 = vmor %vm1790, %vm1791
    %v1793 = vsel %vm1792, %v1784, %v1789
    %v1794 = vmul.f32 %v1730, %v1763
    %v1795 = vmul.f32 %v1731, %v1773
    %v1796 = vmul.f32 %v1732, %v1783
    %v1797 = vmul.f32 %v1733, %v1793
    %v1799 = vperm.slane %v1715, 0
    %v1801 = vmul.f32 %v1794, %v1799
    %v1802 = vmul.f32 %v1795, %v1799
    %v1803 = vmul.f32 %v1796, %v1799
    %v1804 = vmul.f32 %v1797, %v1799
    %v1806 = vperm.slane %v1717, 0
    %v1808 = vadd.f32 %v1801, %v1806
    %v1809 = vadd.f32 %v1802, %v1806
    %v1810 = vadd.f32 %v1803, %v1806
    %v1811 = vadd.f32 %v1804, %v1806
    %s1812 = scalar_lea.vmem [#allocation2], 128
    %v1813 = vld [vmem:[%s1812] sm:$0xf]
    %v1814 = vld [vmem:[%s1812 + $0x4] sm:$0xf]
    %v1815 = vld [vmem:[%s1812 + $0x8] sm:$0xf]
    %v1816 = vld [vmem:[%s1812 + $0xc] sm:$0xf]
    %v1817 = vld [vmem:[%s1812 + $0x10] sm:$0xf]
    %v1818 = vld [vmem:[%s1812 + $0x14] sm:$0xf]
    %v1819 = vld [vmem:[%s1812 + $0x18] sm:$0xf]
    %v1820 = vld [vmem:[%s1812 + $0x1c] sm:$0xf]
    %v1821 = vld [vmem:[%s1812 + $0x20] sm:$0xf]
    %v1822 = vld [vmem:[%s1812 + $0x24] sm:$0xf]
    %v1823 = vld [vmem:[%s1812 + $0x28] sm:$0xf]
    %v1824 = vld [vmem:[%s1812 + $0x2c] sm:$0xf]
    %v1825 = vld [vmem:[%s1812 + $0x30] sm:$0xf]
    %v1826 = vld [vmem:[%s1812 + $0x34] sm:$0xf]
    %v1827 = vld [vmem:[%s1812 + $0x38] sm:$0xf]
    %v1828 = vld [vmem:[%s1812 + $0x3c] sm:$0xf]
    %v1829 = vpack.c.bf16 %v1809, %v1808
    %v1830 = vpack.c.bf16 %v1811, %v1810
    %s1831 = scalar_lea.vmem %s5, 2
    %v1832 = vld [vmem:[%s1831] sm:$0x1]
    %v1834 = vperm.slane %v1832, 0
    %v1852 = vunpack.c.l.b16 %v1813
    %v1853 = vunpack.c.l.b16 %v1814
    %v1854 = vunpack.c.l.b16 %v1815
    %v1855 = vunpack.c.l.b16 %v1816
    %v1856 = vunpack.c.l.b16 %v1817
    %v1857 = vunpack.c.l.b16 %v1818
    %v1858 = vunpack.c.l.b16 %v1819
    %v1859 = vunpack.c.l.b16 %v1820
    %v1860 = vunpack.c.l.b16 %v1821
    %v1861 = vunpack.c.l.b16 %v1822
    %v1862 = vunpack.c.l.b16 %v1823
    %v1863 = vunpack.c.l.b16 %v1824
    %v1864 = vunpack.c.l.b16 %v1825
    %v1865 = vunpack.c.l.b16 %v1826
    %v1866 = vunpack.c.l.b16 %v1827
    %v1867 = vunpack.c.l.b16 %v1828
    %v1868 = vpack.c.b16 %v1853, %v1852
    %v1869 = vpack.c.b16 %v1855, %v1854
    %v1870 = vpack.c.b16 %v1857, %v1856
    %v1871 = vpack.c.b16 %v1859, %v1858
    %v1872 = vpack.c.b16 %v1861, %v1860
    %v1873 = vpack.c.b16 %v1863, %v1862
    %v1874 = vpack.c.b16 %v1865, %v1864
    %v1875 = vpack.c.b16 %v1867, %v1866
    %1884 = vmatpush.bf16.msra.mxu0 %v1875
    %1885 = vmatpush.bf16.msra.mxu0 %v1874
    %1886 = vmatpush.bf16.msra.mxu0 %v1873
    %1887 = vmatpush.bf16.msra.mxu0 %v1872
    %1888 = vmatpush.bf16.msra.mxu0 %v1871
    %1889 = vmatpush.bf16.msra.mxu0 %v1870
    %1890 = vmatpush.bf16.msra.mxu0 %v1869
    %1891 = vmatpush.bf16.msra.mxu0 %v1868
    %1892 = vmatmul.bf16.gmra.mxu0 %v1829
    %v1893 = vpop.f32.mrf.mxu0
    %v1894 = vadd.f32 %v1834, %v1893
    %v1895 = vpop.f32.mrf.mxu0
    %v1896 = vadd.f32 %v1834, %v1895
    %1897 = vmatmul.bf16.gmra.mxu0 %v1830
    %v1898 = vpop.f32.mrf.mxu0
    %v1899 = vadd.f32 %v1834, %v1898
    %v1900 = vpop.f32.mrf.mxu0
    %v1901 = vadd.f32 %v1834, %v1900
    %1902 = vdwg.mxu0
    %vm1903 = vcmp.ge.f32.partialorder %v1894, 0.0
    %vm1904 = vcmp.ge.f32.partialorder %v1896, 0.0
    %vm1905 = vcmp.ge.f32.partialorder %v1899, 0.0
    %vm1906 = vcmp.ge.f32.partialorder %v1901, 0.0
    %v1907 = vmul.f32 %v1894, 0.01
    %v1908 = vmul.f32 %v1896, 0.01
    %v1909 = vmul.f32 %v1899, 0.01
    %v1910 = vmul.f32 %v1901, 0.01
    %v1911 = vsel %vm1903, %v1894, %v1907
    %v1912 = vsel %vm1904, %v1896, %v1908
    %v1913 = vsel %vm1905, %v1899, %v1909
    %v1914 = vsel %vm1906, %v1901, %v1910
    %v1915 = vadd.f32 %v1710, %v1911
    %v1916 = vadd.f32 %v1711, %v1912
    %v1917 = vadd.f32 %v1712, %v1913
    %v1918 = vadd.f32 %v1713, %v1914
    %s1919 = scalar_lea.vmem %s6, 3
    %v1920 = vld [vmem:[%s1919] sm:$0x1]
    %s1921 = scalar_lea.vmem %s7, 3
    %v1922 = vld [vmem:[%s1921] sm:$0x1]
    %1923 = vadd.xlane.f32.xlu0 %v1915
    %v1924 = vpop.xlane.xlu0 %1923
    %1925 = vadd.xlane.f32.xlu0 %v1916
    %v1926 = vpop.xlane.xlu0 %1925
    %1927 = vadd.xlane.f32.xlu0 %v1917
    %v1928 = vpop.xlane.xlu0 %1927
    %1929 = vadd.xlane.f32.xlu0 %v1918
    %v1930 = vpop.xlane.xlu0 %1929
    %v1931 = vmul.f32 %v1924, %v1317
    %v1932 = vmul.f32 %v1926, %v1317
    %v1933 = vmul.f32 %v1928, %v1317
    %v1934 = vmul.f32 %v1930, %v1317
    %v1935 = vsub.f32 %v1915, %v1931
    %v1936 = vsub.f32 %v1916, %v1932
    %v1937 = vsub.f32 %v1917, %v1933
    %v1938 = vsub.f32 %v1918, %v1934
    %v1939 = vmul.f32 %v1935, %v1935
    %v1940 = vmul.f32 %v1936, %v1936
    %v1941 = vmul.f32 %v1937, %v1937
    %v1942 = vmul.f32 %v1938, %v1938
    %1943 = vadd.xlane.f32.xlu0 %v1939
    %v1944 = vpop.xlane.xlu0 %1943
    %1945 = vadd.xlane.f32.xlu0 %v1940
    %v1946 = vpop.xlane.xlu0 %1945
    %1947 = vadd.xlane.f32.xlu0 %v1941
    %v1948 = vpop.xlane.xlu0 %1947
    %1949 = vadd.xlane.f32.xlu0 %v1942
    %v1950 = vpop.xlane.xlu0 %1949
    %v1951 = vmul.f32 %v1944, %v1317
    %v1952 = vmul.f32 %v1946, %v1317
    %v1953 = vmul.f32 %v1948, %v1317
    %v1954 = vmul.f32 %v1950, %v1317
    %v1955 = vadd.f32 %v1951, 1e-05
    %v1956 = vadd.f32 %v1952, 1e-05
    %v1957 = vadd.f32 %v1953, 1e-05
    %v1958 = vadd.f32 %v1954, 1e-05
    %v1959 = vrsqrt.pop %v1955
    %v1960 = vmul.f32 %v1959, %v1955
    %v1961 = vmul.f32 %v1960, %v1959
    %v1962 = vmul.f32 0.5, %v1961
    %v1963 = vsub.f32 1.5, %v1962
    %v1964 = vmul.f32 %v1959, %v1963
    %vm1965 = vweird.f32 %v1955
    %vm1966 = vweird.f32 %v1959
    %vm1967 = vmor %vm1965, %vm1966
    %v1968 = vsel %vm1967, %v1959, %v1964
    %v1969 = vrsqrt.pop %v1956
    %v1970 = vmul.f32 %v1969, %v1956
    %v1971 = vmul.f32 %v1970, %v1969
    %v1972 = vmul.f32 0.5, %v1971
    %v1973 = vsub.f32 1.5, %v1972
    %v1974 = vmul.f32 %v1969, %v1973
    %vm1975 = vweird.f32 %v1956
    %vm1976 = vweird.f32 %v1969
    %vm1977 = vmor %vm1975, %vm1976
    %v1978 = vsel %vm1977, %v1969, %v1974
    %v1979 = vrsqrt.pop %v1957
    %v1980 = vmul.f32 %v1979, %v1957
    %v1981 = vmul.f32 %v1980, %v1979
    %v1982 = vmul.f32 0.5, %v1981
    %v1983 = vsub.f32 1.5, %v1982
    %v1984 = vmul.f32 %v1979, %v1983
    %vm1985 = vweird.f32 %v1957
    %vm1986 = vweird.f32 %v1979
    %vm1987 = vmor %vm1985, %vm1986
    %v1988 = vsel %vm1987, %v1979, %v1984
    %v1989 = vrsqrt.pop %v1958
    %v1990 = vmul.f32 %v1989, %v1958
    %v1991 = vmul.f32 %v1990, %v1989
    %v1992 = vmul.f32 0.5, %v1991
    %v1993 = vsub.f32 1.5, %v1992
    %v1994 = vmul.f32 %v1989, %v1993
    %vm1995 = vweird.f32 %v1958
    %vm1996 = vweird.f32 %v1989
    %vm1997 = vmor %vm1995, %vm1996
    %v1998 = vsel %vm1997, %v1989, %v1994
    %v1999 = vmul.f32 %v1935, %v1968
    %v2000 = vmul.f32 %v1936, %v1978
    %v2001 = vmul.f32 %v1937, %v1988
    %v2002 = vmul.f32 %v1938, %v1998
    %v2004 = vperm.slane %v1920, 0
    %v2006 = vmul.f32 %v1999, %v2004
    %v2007 = vmul.f32 %v2000, %v2004
    %v2008 = vmul.f32 %v2001, %v2004
    %v2009 = vmul.f32 %v2002, %v2004
    %v2011 = vperm.slane %v1922, 0
    %v2013 = vadd.f32 %v2006, %v2011
    %v2014 = vadd.f32 %v2007, %v2011
    %v2015 = vadd.f32 %v2008, %v2011
    %v2016 = vadd.f32 %v2009, %v2011
    %s2017 = scalar_lea.vmem [#allocation2], 192
    %v2018 = vld [vmem:[%s2017] sm:$0xf]
    %v2019 = vld [vmem:[%s2017 + $0x4] sm:$0xf]
    %v2020 = vld [vmem:[%s2017 + $0x8] sm:$0xf]
    %v2021 = vld [vmem:[%s2017 + $0xc] sm:$0xf]
    %v2022 = vld [vmem:[%s2017 + $0x10] sm:$0xf]
    %v2023 = vld [vmem:[%s2017 + $0x14] sm:$0xf]
    %v2024 = vld [vmem:[%s2017 + $0x18] sm:$0xf]
    %v2025 = vld [vmem:[%s2017 + $0x1c] sm:$0xf]
    %v2026 = vld [vmem:[%s2017 + $0x20] sm:$0xf]
    %v2027 = vld [vmem:[%s2017 + $0x24] sm:$0xf]
    %v2028 = vld [vmem:[%s2017 + $0x28] sm:$0xf]
    %v2029 = vld [vmem:[%s2017 + $0x2c] sm:$0xf]
    %v2030 = vld [vmem:[%s2017 + $0x30] sm:$0xf]
    %v2031 = vld [vmem:[%s2017 + $0x34] sm:$0xf]
    %v2032 = vld [vmem:[%s2017 + $0x38] sm:$0xf]
    %v2033 = vld [vmem:[%s2017 + $0x3c] sm:$0xf]
    %v2034 = vpack.c.bf16 %v2014, %v2013
    %v2035 = vpack.c.bf16 %v2016, %v2015
    %s2036 = scalar_lea.vmem %s5, 3
    %v2037 = vld [vmem:[%s2036] sm:$0x1]
    %v2039 = vperm.slane %v2037, 0
    %v2057 = vunpack.c.l.b16 %v2018
    %v2058 = vunpack.c.l.b16 %v2019
    %v2059 = vunpack.c.l.b16 %v2020
    %v2060 = vunpack.c.l.b16 %v2021
    %v2061 = vunpack.c.l.b16 %v2022
    %v2062 = vunpack.c.l.b16 %v2023
    %v2063 = vunpack.c.l.b16 %v2024
    %v2064 = vunpack.c.l.b16 %v2025
    %v2065 = vunpack.c.l.b16 %v2026
    %v2066 = vunpack.c.l.b16 %v2027
    %v2067 = vunpack.c.l.b16 %v2028
    %v2068 = vunpack.c.l.b16 %v2029
    %v2069 = vunpack.c.l.b16 %v2030
    %v2070 = vunpack.c.l.b16 %v2031
    %v2071 = vunpack.c.l.b16 %v2032
    %v2072 = vunpack.c.l.b16 %v2033
    %v2073 = vpack.c.b16 %v2058, %v2057
    %v2074 = vpack.c.b16 %v2060, %v2059
    %v2075 = vpack.c.b16 %v2062, %v2061
    %v2076 = vpack.c.b16 %v2064, %v2063
    %v2077 = vpack.c.b16 %v2066, %v2065
    %v2078 = vpack.c.b16 %v2068, %v2067
    %v2079 = vpack.c.b16 %v2070, %v2069
    %v2080 = vpack.c.b16 %v2072, %v2071
    %2089 = vmatpush.bf16.msra.mxu0 %v2080
    %2090 = vmatpush.bf16.msra.mxu0 %v2079
    %2091 = vmatpush.bf16.msra.mxu0 %v2078
    %2092 = vmatpush.bf16.msra.mxu0 %v2077
    %2093 = vmatpush.bf16.msra.mxu0 %v2076
    %2094 = vmatpush.bf16.msra.mxu0 %v2075
    %2095 = vmatpush.bf16.msra.mxu0 %v2074
    %2096 = vmatpush.bf16.msra.mxu0 %v2073
    %2097 = vmatmul.bf16.gmra.mxu0 %v2034
    %v2098 = vpop.f32.mrf.mxu0
    %v2099 = vadd.f32 %v2039, %v2098
    %v2100 = vpop.f32.mrf.mxu0
    %v2101 = vadd.f32 %v2039, %v2100
    %2102 = vmatmul.bf16.gmra.mxu0 %v2035
    %v2103 = vpop.f32.mrf.mxu0
    %v2104 = vadd.f32 %v2039, %v2103
    %v2105 = vpop.f32.mrf.mxu0
    %v2106 = vadd.f32 %v2039, %v2105
    %2107 = vdwg.mxu0
    %vm2108 = vcmp.ge.f32.partialorder %v2099, 0.0
    %vm2109 = vcmp.ge.f32.partialorder %v2101, 0.0
    %vm2110 = vcmp.ge.f32.partialorder %v2104, 0.0
    %vm2111 = vcmp.ge.f32.partialorder %v2106, 0.0
    %v2112 = vmul.f32 %v2099, 0.01
    %v2113 = vmul.f32 %v2101, 0.01
    %v2114 = vmul.f32 %v2104, 0.01
    %v2115 = vmul.f32 %v2106, 0.01
    %v2116 = vsel %vm2108, %v2099, %v2112
    %v2117 = vsel %vm2109, %v2101, %v2113
    %v2118 = vsel %vm2110, %v2104, %v2114
    %v2119 = vsel %vm2111, %v2106, %v2115
    %v2120 = vadd.f32 %v1915, %v2116
    %v2121 = vadd.f32 %v1916, %v2117
    %v2122 = vadd.f32 %v1917, %v2118
    %v2123 = vadd.f32 %v1918, %v2119
    %s2124 = scalar_lea.vmem %s6, 4
    %v2125 = vld [vmem:[%s2124] sm:$0x1]
    %s2126 = scalar_lea.vmem %s7, 4
    %v2127 = vld [vmem:[%s2126] sm:$0x1]
    %2128 = vadd.xlane.f32.xlu0 %v2120
    %v2129 = vpop.xlane.xlu0 %2128
    %2130 = vadd.xlane.f32.xlu0 %v2121
    %v2131 = vpop.xlane.xlu0 %2130
    %2132 = vadd.xlane.f32.xlu0 %v2122
    %v2133 = vpop.xlane.xlu0 %2132
    %2134 = vadd.xlane.f32.xlu0 %v2123
    %v2135 = vpop.xlane.xlu0 %2134
    %v2136 = vmul.f32 %v2129, %v1317
    %v2137 = vmul.f32 %v2131, %v1317
    %v2138 = vmul.f32 %v2133, %v1317
    %v2139 = vmul.f32 %v2135, %v1317
    %v2140 = vsub.f32 %v2120, %v2136
    %v2141 = vsub.f32 %v2121, %v2137
    %v2142 = vsub.f32 %v2122, %v2138
    %v2143 = vsub.f32 %v2123, %v2139
    %v2144 = vmul.f32 %v2140, %v2140
    %v2145 = vmul.f32 %v2141, %v2141
    %v2146 = vmul.f32 %v2142, %v2142
    %v2147 = vmul.f32 %v2143, %v2143
    %2148 = vadd.xlane.f32.xlu0 %v2144
    %v2149 = vpop.xlane.xlu0 %2148
    %2150 = vadd.xlane.f32.xlu0 %v2145
    %v2151 = vpop.xlane.xlu0 %2150
    %2152 = vadd.xlane.f32.xlu0 %v2146
    %v2153 = vpop.xlane.xlu0 %2152
    %2154 = vadd.xlane.f32.xlu0 %v2147
    %v2155 = vpop.xlane.xlu0 %2154
    %v2156 = vmul.f32 %v2149, %v1317
    %v2157 = vmul.f32 %v2151, %v1317
    %v2158 = vmul.f32 %v2153, %v1317
    %v2159 = vmul.f32 %v2155, %v1317
    %v2160 = vadd.f32 %v2156, 1e-05
    %v2161 = vadd.f32 %v2157, 1e-05
    %v2162 = vadd.f32 %v2158, 1e-05
    %v2163 = vadd.f32 %v2159, 1e-05
    %v2164 = vrsqrt.pop %v2160
    %v2165 = vmul.f32 %v2164, %v2160
    %v2166 = vmul.f32 %v2165, %v2164
    %v2167 = vmul.f32 0.5, %v2166
    %v2168 = vsub.f32 1.5, %v2167
    %v2169 = vmul.f32 %v2164, %v2168
    %vm2170 = vweird.f32 %v2160
    %vm2171 = vweird.f32 %v2164
    %vm2172 = vmor %vm2170, %vm2171
    %v2173 = vsel %vm2172, %v2164, %v2169
    %v2174 = vrsqrt.pop %v2161
    %v2175 = vmul.f32 %v2174, %v2161
    %v2176 = vmul.f32 %v2175, %v2174
    %v2177 = vmul.f32 0.5, %v2176
    %v2178 = vsub.f32 1.5, %v2177
    %v2179 = vmul.f32 %v2174, %v2178
    %vm2180 = vweird.f32 %v2161
    %vm2181 = vweird.f32 %v2174
    %vm2182 = vmor %vm2180, %vm2181
    %v2183 = vsel %vm2182, %v2174, %v2179
    %v2184 = vrsqrt.pop %v2162
    %v2185 = vmul.f32 %v2184, %v2162
    %v2186 = vmul.f32 %v2185, %v2184
    %v2187 = vmul.f32 0.5, %v2186
    %v2188 = vsub.f32 1.5, %v2187
    %v2189 = vmul.f32 %v2184, %v2188
    %vm2190 = vweird.f32 %v2162
    %vm2191 = vweird.f32 %v2184
    %vm2192 = vmor %vm2190, %vm2191
    %v2193 = vsel %vm2192, %v2184, %v2189
    %v2194 = vrsqrt.pop %v2163
    %v2195 = vmul.f32 %v2194, %v2163
    %v2196 = vmul.f32 %v2195, %v2194
    %v2197 = vmul.f32 0.5, %v2196
    %v2198 = vsub.f32 1.5, %v2197
    %v2199 = vmul.f32 %v2194, %v2198
    %vm2200 = vweird.f32 %v2163
    %vm2201 = vweird.f32 %v2194
    %vm2202 = vmor %vm2200, %vm2201
    %v2203 = vsel %vm2202, %v2194, %v2199
    %v2204 = vmul.f32 %v2140, %v2173
    %v2205 = vmul.f32 %v2141, %v2183
    %v2206 = vmul.f32 %v2142, %v2193
    %v2207 = vmul.f32 %v2143, %v2203
    %v2209 = vperm.slane %v2125, 0
    %v2211 = vmul.f32 %v2204, %v2209
    %v2212 = vmul.f32 %v2205, %v2209
    %v2213 = vmul.f32 %v2206, %v2209
    %v2214 = vmul.f32 %v2207, %v2209
    %v2216 = vperm.slane %v2127, 0
    %v2218 = vadd.f32 %v2211, %v2216
    %v2219 = vadd.f32 %v2212, %v2216
    %v2220 = vadd.f32 %v2213, %v2216
    %v2221 = vadd.f32 %v2214, %v2216
    %s2222 = scalar_lea.vmem [#allocation2], 256
    %v2223 = vld [vmem:[%s2222] sm:$0xf]
    %v2224 = vld [vmem:[%s2222 + $0x4] sm:$0xf]
    %v2225 = vld [vmem:[%s2222 + $0x8] sm:$0xf]
    %v2226 = vld [vmem:[%s2222 + $0xc] sm:$0xf]
    %v2227 = vld [vmem:[%s2222 + $0x10] sm:$0xf]
    %v2228 = vld [vmem:[%s2222 + $0x14] sm:$0xf]
    %v2229 = vld [vmem:[%s2222 + $0x18] sm:$0xf]
    %v2230 = vld [vmem:[%s2222 + $0x1c] sm:$0xf]
    %v2231 = vld [vmem:[%s2222 + $0x20] sm:$0xf]
    %v2232 = vld [vmem:[%s2222 + $0x24] sm:$0xf]
    %v2233 = vld [vmem:[%s2222 + $0x28] sm:$0xf]
    %v2234 = vld [vmem:[%s2222 + $0x2c] sm:$0xf]
    %v2235 = vld [vmem:[%s2222 + $0x30] sm:$0xf]
    %v2236 = vld [vmem:[%s2222 + $0x34] sm:$0xf]
    %v2237 = vld [vmem:[%s2222 + $0x38] sm:$0xf]
    %v2238 = vld [vmem:[%s2222 + $0x3c] sm:$0xf]
    %v2239 = vpack.c.bf16 %v2219, %v2218
    %v2240 = vpack.c.bf16 %v2221, %v2220
    %s2241 = scalar_lea.vmem %s5, 4
    %v2242 = vld [vmem:[%s2241] sm:$0x1]
    %v2244 = vperm.slane %v2242, 0
    %v2262 = vunpack.c.l.b16 %v2223
    %v2263 = vunpack.c.l.b16 %v2224
    %v2264 = vunpack.c.l.b16 %v2225
    %v2265 = vunpack.c.l.b16 %v2226
    %v2266 = vunpack.c.l.b16 %v2227
    %v2267 = vunpack.c.l.b16 %v2228
    %v2268 = vunpack.c.l.b16 %v2229
    %v2269 = vunpack.c.l.b16 %v2230
    %v2270 = vunpack.c.l.b16 %v2231
    %v2271 = vunpack.c.l.b16 %v2232
    %v2272 = vunpack.c.l.b16 %v2233
    %v2273 = vunpack.c.l.b16 %v2234
    %v2274 = vunpack.c.l.b16 %v2235
    %v2275 = vunpack.c.l.b16 %v2236
    %v2276 = vunpack.c.l.b16 %v2237
    %v2277 = vunpack.c.l.b16 %v2238
    %v2278 = vpack.c.b16 %v2263, %v2262
    %v2279 = vpack.c.b16 %v2265, %v2264
    %v2280 = vpack.c.b16 %v2267, %v2266
    %v2281 = vpack.c.b16 %v2269, %v2268
    %v2282 = vpack.c.b16 %v2271, %v2270
    %v2283 = vpack.c.b16 %v2273, %v2272
    %v2284 = vpack.c.b16 %v2275, %v2274
    %v2285 = vpack.c.b16 %v2277, %v2276
    %2294 = vmatpush.bf16.msra.mxu0 %v2285
    %2295 = vmatpush.bf16.msra.mxu0 %v2284
    %2296 = vmatpush.bf16.msra.mxu0 %v2283
    %2297 = vmatpush.bf16.msra.mxu0 %v2282
    %2298 = vmatpush.bf16.msra.mxu0 %v2281
    %2299 = vmatpush.bf16.msra.mxu0 %v2280
    %2300 = vmatpush.bf16.msra.mxu0 %v2279
    %2301 = vmatpush.bf16.msra.mxu0 %v2278
    %2302 = vmatmul.bf16.gmra.mxu0 %v2239
    %v2303 = vpop.f32.mrf.mxu0
    %v2304 = vadd.f32 %v2244, %v2303
    %v2305 = vpop.f32.mrf.mxu0
    %v2306 = vadd.f32 %v2244, %v2305
    %2307 = vmatmul.bf16.gmra.mxu0 %v2240
    %v2308 = vpop.f32.mrf.mxu0
    %v2309 = vadd.f32 %v2244, %v2308
    %v2310 = vpop.f32.mrf.mxu0
    %v2311 = vadd.f32 %v2244, %v2310
    %2312 = vdwg.mxu0
    %vm2313 = vcmp.ge.f32.partialorder %v2304, 0.0
    %vm2314 = vcmp.ge.f32.partialorder %v2306, 0.0
    %vm2315 = vcmp.ge.f32.partialorder %v2309, 0.0
    %vm2316 = vcmp.ge.f32.partialorder %v2311, 0.0
    %v2317 = vmul.f32 %v2304, 0.01
    %v2318 = vmul.f32 %v2306, 0.01
    %v2319 = vmul.f32 %v2309, 0.01
    %v2320 = vmul.f32 %v2311, 0.01
    %v2321 = vsel %vm2313, %v2304, %v2317
    %v2322 = vsel %vm2314, %v2306, %v2318
    %v2323 = vsel %vm2315, %v2309, %v2319
    %v2324 = vsel %vm2316, %v2311, %v2320
    %v2325 = vadd.f32 %v2120, %v2321
    %v2326 = vadd.f32 %v2121, %v2322
    %v2327 = vadd.f32 %v2122, %v2323
    %v2328 = vadd.f32 %v2123, %v2324
    %v2329 = vld [vmem:[%s8] sm:$0xf]
    %v2330 = vld [vmem:[%s8 + $0x4] sm:$0xf]
    %v2331 = vld [vmem:[%s8 + $0x8] sm:$0xf]
    %v2332 = vld [vmem:[%s8 + $0xc] sm:$0xf]
    %v2333 = vld [vmem:[%s8 + $0x10] sm:$0xf]
    %v2334 = vld [vmem:[%s8 + $0x14] sm:$0xf]
    %v2335 = vld [vmem:[%s8 + $0x18] sm:$0xf]
    %v2336 = vld [vmem:[%s8 + $0x1c] sm:$0xf]
    %v2337 = vld [vmem:[%s8 + $0x20] sm:$0xf]
    %v2338 = vld [vmem:[%s8 + $0x24] sm:$0xf]
    %v2339 = vld [vmem:[%s8 + $0x28] sm:$0xf]
    %v2340 = vld [vmem:[%s8 + $0x2c] sm:$0xf]
    %v2341 = vld [vmem:[%s8 + $0x30] sm:$0xf]
    %v2342 = vld [vmem:[%s8 + $0x34] sm:$0xf]
    %v2343 = vld [vmem:[%s8 + $0x38] sm:$0xf]
    %v2344 = vld [vmem:[%s8 + $0x3c] sm:$0xf]
    %v2345 = vpack.c.bf16 %v2326, %v2325
    %v2346 = vpack.c.bf16 %v2328, %v2327
    %v2347 = vld [vmem:[%s9] sm:$0x1]
    %v2349 = vperm.slane %v2347, 0
    %v2367 = vunpack.c.l.b16 %v2329
    %v2368 = vunpack.c.l.b16 %v2330
    %v2369 = vunpack.c.l.b16 %v2331
    %v2370 = vunpack.c.l.b16 %v2332
    %v2371 = vunpack.c.l.b16 %v2333
    %v2372 = vunpack.c.l.b16 %v2334
    %v2373 = vunpack.c.l.b16 %v2335
    %v2374 = vunpack.c.l.b16 %v2336
    %v2375 = vunpack.c.l.b16 %v2337
    %v2376 = vunpack.c.l.b16 %v2338
    %v2377 = vunpack.c.l.b16 %v2339
    %v2378 = vunpack.c.l.b16 %v2340
    %v2379 = vunpack.c.l.b16 %v2341
    %v2380 = vunpack.c.l.b16 %v2342
    %v2381 = vunpack.c.l.b16 %v2343
    %v2382 = vunpack.c.l.b16 %v2344
    %v2383 = vpack.c.b16 %v2368, %v2367
    %v2384 = vpack.c.b16 %v2370, %v2369
    %v2385 = vpack.c.b16 %v2372, %v2371
    %v2386 = vpack.c.b16 %v2374, %v2373
    %v2387 = vpack.c.b16 %v2376, %v2375
    %v2388 = vpack.c.b16 %v2378, %v2377
    %v2389 = vpack.c.b16 %v2380, %v2379
    %v2390 = vpack.c.b16 %v2382, %v2381
    %2399 = vmatpush.bf16.msra.mxu0 %v2390
    %2400 = vmatpush.bf16.msra.mxu0 %v2389
    %2401 = vmatpush.bf16.msra.mxu0 %v2388
    %2402 = vmatpush.bf16.msra.mxu0 %v2387
    %2403 = vmatpush.bf16.msra.mxu0 %v2386
    %2404 = vmatpush.bf16.msra.mxu0 %v2385
    %2405 = vmatpush.bf16.msra.mxu0 %v2384
    %2406 = vmatpush.bf16.msra.mxu0 %v2383
    %2407 = vmatmul.bf16.gmra.mxu0 %v2345
    %v2408 = vpop.f32.mrf.mxu0
    %v2409 = vadd.f32 %v2349, %v2408
    %v2410 = vpop.f32.mrf.mxu0
    %v2411 = vadd.f32 %v2349, %v2410
    %2412 = vmatmul.bf16.gmra.mxu0 %v2346
    %v2413 = vpop.f32.mrf.mxu0
    %v2414 = vadd.f32 %v2349, %v2413
    %v2415 = vpop.f32.mrf.mxu0
    %v2416 = vadd.f32 %v2349, %v2415
    %2417 = vdwg.mxu0
    %vm2418 = vcmp.ge.s32.totalorder %v1017, 1
    %vm2419 = vcmp.le.s32.totalorder %v1017, 2
    %vm2420 = vmand %vm2418, %vm2419
    %v2421 = vand.u32 2147483647, %v2409
    %v2422 = vand.u32 2147483647, %v2411
    %v2423 = vand.u32 2147483647, %v2414
    %v2424 = vand.u32 2147483647, %v2416
    %v2425 = vadd.f32 %v2421, 0.0001
    %v2426 = vadd.f32 %v2422, 0.0001
    %v2427 = vadd.f32 %v2423, 0.0001
    %v2428 = vadd.f32 %v2424, 0.0001
    %v2429 = vsel %vm2420, %v2425, %v2409
    %v2430 = vsel %vm2420, %v2426, %v2411
    %v2431 = vsel %vm2420, %v2427, %v2414
    %v2432 = vsel %vm2420, %v2428, %v2416
    %vm2433 = vcmask 39936
    %2434 = vst.msk [vmem:[%s11] sm:$0xff] %vm2433, %v2429
    %2435 = vst.msk [vmem:[%s11 + $0x8] sm:$0xff] %vm2433, %v2430
    %2436 = vst.msk [vmem:[%s11 + $0x10] sm:$0xff] %vm2433, %v2431
    %2437 = vst.msk [vmem:[%s11 + $0x18] sm:$0xff] %vm2433, %v2432
    // Predicated region
    $region46: #{funky_forward.5} parent=1 // pred_check
      _
    $region47: #{funky_forward.5} parent=1 // pred_check_branch
      %2439 = sbr.rel (0) target = $region49
    $region48: #{funky_forward.5} parent=1 // pred_region
      _
    $region49: #{funky_forward.5} parent=1 // pred_fallthru
      _
    // Predicated region
    $region50: #{funky_forward.5} parent=1 // pred_check
      _
    $region51: #{funky_forward.5} parent=1 // pred_check_branch
      %2441 = sbr.rel (0) target = $region53
    $region52: #{funky_forward.5} parent=1 // pred_region
      _
    $region53: #{funky_forward.5} parent=1 // pred_fallthru
      _
    // Predicated region
    $region54: #{funky_forward.5} parent=1 // pred_check
      _
    $region55: #{funky_forward.5} parent=1 // pred_check_branch
      %2443 = sbr.rel (0) target = $region57
    $region56: #{funky_forward.5} parent=1 // pred_region
      _
    $region57: #{funky_forward.5} parent=1 // pred_fallthru
      _
    // Predicated region
    $region58: #{funky_forward.5} parent=1 // pred_check
      _
    $region59: #{funky_forward.5} parent=1 // pred_check_branch
      %2445 = sbr.rel (0) target = $region61
    $region60: #{funky_forward.5} parent=1 // pred_region
      _
    $region61: #{funky_forward.5} parent=1 // pred_fallthru
      _
    %2446 = vsyncpa [#allocation3], 1

// kernel: funky_forward.7
$region0: #{funky_forward.7}
  #allocation0 [shape = 'u32[]', space=smem, size = 0x4, offset = 0x4, fixed_abs, tag = 'smem constant byte address 0x4 - core index']
  #allocation1 [shape = 'u32[72,128]{1,0:T(1,128)}', space=vmem, size = 0x9000, scoped, tag = 'internal scratch']
  %s0 = inlined_call_operand.vmem [shape: f32[2,8,128], index: 0, kind: input, shape index: {}]
  %s1 = inlined_call_operand.vmem [shape: bf16[4,128,32], index: 1, kind: input, shape index: {}]
  %s2 = inlined_call_operand.vmem [shape: bf16[4,128,32], index: 2, kind: input, shape index: {}]
  %s3 = inlined_call_operand.vmem [shape: bf16[4,128,32], index: 3, kind: input, shape index: {}]
  %s4 = inlined_call_operand.vmem [shape: f32[4,1,32], index: 4, kind: input, shape index: {}]
  %s5 = inlined_call_operand.vmem [shape: f32[4,1,32], index: 5, kind: input, shape index: {}]
  %s6 = inlined_call_operand.vmem [shape: f32[4,1,32], index: 6, kind: input, shape index: {}]
  %s7 = inlined_call_operand.vmem [shape: bf16[4,32,128], index: 7, kind: input, shape index: {}]
  %s8 = inlined_call_operand.vmem [shape: f32[1,128], index: 8, kind: input, shape index: {}]
  %s9 = inlined_call_operand.vmem [shape: f32[1,128], index: 9, kind: input, shape index: {}]
  %s10 = inlined_call_operand.vmem [shape: f32[1,128], index: 10, kind: input, shape index: {}]
  %s11 = inlined_call_operand.vmem [shape: bf16[128,64], index: 11, kind: input, shape index: {}]
  %s12 = inlined_call_operand.vmem [shape: f32[1,64], index: 12, kind: input, shape index: {}]
  %s13 = inlined_call_operand.vmem [shape: bf16[64,128], index: 13, kind: input, shape index: {}]
  %s14 = inlined_call_operand.vmem [shape: f32[1,128], index: 14, kind: input, shape index: {}]
  %s15 = inlined_call_operand.vmem [shape: f32[1,128], index: 15, kind: input, shape index: {}]
  %s16 = inlined_call_operand.vmem [shape: f32[1,128], index: 16, kind: input, shape index: {}]
  %s17 = inlined_call_operand.vmem [shape: f32[2,8,128], index: 17, kind: output, shape index: {}]
  %s18 = sld [smem:[#allocation0]]
  $region101: #{funky_forward.7} parent=0
    _
  %s20 = ssub.s32 1, %s18
  %s21 = scalar_select 0, %s20, %s18
  loop: start=0, step=1, limit=4
  $region2: #{funky_forward.7} parent=0 // loop_pre_header
    _
  $region3: #{funky_forward.7} parent=0 // loop_header
    %s23 = sphi 0, %s27
    %p24 = scmp.ge.s32.totalorder %s23, 4
    %s33 = sphi 0, %s35
    %s36 = sphi 0, %s33
    %s37 = sphi 0, %s36
    %s53 = sphi 0, %s37
    %s57 = sphi 0, %s57
    %s59 = sphi 0, %s57
    %s60 = sphi 0, %s59
    %s74 = sphi 0, %s60
    %s78 = sphi 0, %s78
    %s80 = sphi 0, %s78
    %s81 = sphi 0, %s80
    %s95 = sphi 0, %s81
    %s99 = sphi 0, %s99
    %s101 = sphi 0, %s99
    %s102 = sphi 0, %s101
    %s116 = sphi 0, %s102
    %s120 = sphi 0, %s120
    %s122 = sphi 0, %s120
    %s123 = sphi 0, %s122
    %s137 = sphi 0, %s123
    %s141 = sphi 0, %s141
    %s143 = sphi 0, %s141
    %s144 = sphi 0, %s143
    %s158 = sphi 0, %s144
    %s162 = sphi 0, %s162
    %s164 = sphi 0, %s162
    %s165 = sphi 0, %s164
    %s179 = sphi 0, %s165
    %s183 = sphi 0, %s183
    %s185 = sphi 0, %s183
    %s186 = sphi 0, %s185
    %s200 = sphi 0, %s186
    %s204 = sphi 0, %s204
    %s206 = sphi 0, %s204
    %s207 = sphi 0, %s206
    %s221 = sphi 0, %s207
    %s225 = sphi 0, %s225
    %s227 = sphi 0, %s225
    %s228 = sphi 0, %s227
    %s242 = sphi 0, %s228
    %s246 = sphi 0, %s246
    %s248 = sphi 0, %s246
    %s249 = sphi 0, %s248
    %s263 = sphi 0, %s249
    %s267 = sphi 0, %s267
    %s269 = sphi 0, %s267
    %s270 = sphi 0, %s269
    %s284 = sphi 0, %s270
    %s288 = sphi 0, %s288
    %s290 = sphi 0, %s288
    %s291 = sphi 0, %s290
    %s305 = sphi 0, %s291
    %s309 = sphi 0, %s309
    %s311 = sphi 0, %s309
    %s312 = sphi 0, %s311
    %s326 = sphi 0, %s312
    %s330 = sphi 0, %s330
    %s332 = sphi 0, %s330
    %s333 = sphi 0, %s332
    %s347 = sphi 0, %s333
    %s351 = sphi 0, %s351
    %s353 = sphi 0, %s351
    %s354 = sphi 0, %s353
    %s368 = sphi 0, %s354
    %s372 = sphi 0, %s372
    %s374 = sphi 0, %s372
    %s375 = sphi 0, %s374
    %s389 = sphi 0, %s375
    %s395 = sphi 0, %s397
    %s398 = sphi 0, %s395
    %s399 = sphi 0, %s398
    %s415 = sphi 0, %s399
  $region4: #{funky_forward.7} parent=0 // loop_header_branch
    %26 = sbr.rel (%p24) target = $region8
  $region5: #{funky_forward.7} parent=0 // loop_body
    %s28 = ssub.s32 %s23, 1
    %s29 = ssub.s32 %s23, 2
    %s30 = sadd.s32 %s23, 1
    %s31 = ssub.s32 %s23, %s30
    %p32 = scmp.eq.s32.totalorder %s31, 0
    %s34 = sadd.s32 %s33, 1
    %s35 = scalar_select %p32, %s33, %s34
    %p38 = pneg %p32
    %p39 = scmp.eq.s32.totalorder %s23, 1
    %p40 = por %p38, %p39
    %p41 = scmp.ne.s32.totalorder %s33, %s36
    %p42 = scmp.eq.s32.totalorder %s23, 0
    %p43 = por %p41, %p42
    %p44 = scmp.ne.s32.totalorder %s33, %s36
    %p45 = scmp.eq.s32.totalorder %s28, 1
    %p46 = por %p44, %p45
    %p47 = scmp.ne.s32.totalorder %s36, %s37
    %p48 = scmp.eq.s32.totalorder %s28, 0
    %p49 = por %p47, %p48
    %p50 = scmp.ne.s32.totalorder %s36, %s37
    %p51 = scmp.eq.s32.totalorder %s29, 1
    %p52 = por %p50, %p51
    %p54 = scmp.ne.s32.totalorder %s37, %s53
    %p55 = scmp.eq.s32.totalorder %s29, 0
    %p56 = por %p54, %p55
    %s58 = sadd.s32 %s57, 1
    %p61 = scmp.eq.s32.totalorder %s23, 1
    %p62 = scmp.ne.s32.totalorder %s57, %s59
    %p63 = scmp.eq.s32.totalorder %s23, 0
    %p64 = por %p62, %p63
    %p65 = scmp.ne.s32.totalorder %s57, %s59
    %p66 = scmp.eq.s32.totalorder %s28, 1
    %p67 = por %p65, %p66
    %p68 = scmp.ne.s32.totalorder %s59, %s60
    %p69 = scmp.eq.s32.totalorder %s28, 0
    %p70 = por %p68, %p69
    %p71 = scmp.ne.s32.totalorder %s59, %s60
    %p72 = scmp.eq.s32.totalorder %s29, 1
    %p73 = por %p71, %p72
    %p75 = scmp.ne.s32.totalorder %s60, %s74
    %p76 = scmp.eq.s32.totalorder %s29, 0
    %p77 = por %p75, %p76
    %s79 = sadd.s32 %s78, 1
    %p82 = scmp.eq.s32.totalorder %s23, 1
    %p83 = scmp.ne.s32.totalorder %s78, %s80
    %p84 = scmp.eq.s32.totalorder %s23, 0
    %p85 = por %p83, %p84
    %p86 = scmp.ne.s32.totalorder %s78, %s80
    %p87 = scmp.eq.s32.totalorder %s28, 1
    %p88 = por %p86, %p87
    %p89 = scmp.ne.s32.totalorder %s80, %s81
    %p90 = scmp.eq.s32.totalorder %s28, 0
    %p91 = por %p89, %p90
    %p92 = scmp.ne.s32.totalorder %s80, %s81
    %p93 = scmp.eq.s32.totalorder %s29, 1
    %p94 = por %p92, %p93
    %p96 = scmp.ne.s32.totalorder %s81, %s95
    %p97 = scmp.eq.s32.totalorder %s29, 0
    %p98 = por %p96, %p97
    %s100 = sadd.s32 %s99, 1
    %p103 = scmp.eq.s32.totalorder %s23, 1
    %p104 = scmp.ne.s32.totalorder %s99, %s101
    %p105 = scmp.eq.s32.totalorder %s23, 0
    %p106 = por %p104, %p105
    %p107 = scmp.ne.s32.totalorder %s99, %s101
    %p108 = scmp.eq.s32.totalorder %s28, 1
    %p109 = por %p107, %p108
    %p110 = scmp.ne.s32.totalorder %s101, %s102
    %p111 = scmp.eq.s32.totalorder %s28, 0
    %p112 = por %p110, %p111
    %p113 = scmp.ne.s32.totalorder %s101, %s102
    %p114 = scmp.eq.s32.totalorder %s29, 1
    %p115 = por %p113, %p114
    %p117 = scmp.ne.s32.totalorder %s102, %s116
    %p118 = scmp.eq.s32.totalorder %s29, 0
    %p119 = por %p117, %p118
    %s121 = sadd.s32 %s120, 1
    %p124 = scmp.eq.s32.totalorder %s23, 1
    %p125 = scmp.ne.s32.totalorder %s120, %s122
    %p126 = scmp.eq.s32.totalorder %s23, 0
    %p127 = por %p125, %p126
    %p128 = scmp.ne.s32.totalorder %s120, %s122
    %p129 = scmp.eq.s32.totalorder %s28, 1
    %p130 = por %p128, %p129
    %p131 = scmp.ne.s32.totalorder %s122, %s123
    %p132 = scmp.eq.s32.totalorder %s28, 0
    %p133 = por %p131, %p132
    %p134 = scmp.ne.s32.totalorder %s122, %s123
    %p135 = scmp.eq.s32.totalorder %s29, 1
    %p136 = por %p134, %p135
    %p138 = scmp.ne.s32.totalorder %s123, %s137
    %p139 = scmp.eq.s32.totalorder %s29, 0
    %p140 = por %p138, %p139
    %s142 = sadd.s32 %s141, 1
    %p145 = scmp.eq.s32.totalorder %s23, 1
    %p146 = scmp.ne.s32.totalorder %s141, %s143
    %p147 = scmp.eq.s32.totalorder %s23, 0
    %p148 = por %p146, %p147
    %p149 = scmp.ne.s32.totalorder %s141, %s143
    %p150 = scmp.eq.s32.totalorder %s28, 1
    %p151 = por %p149, %p150
    %p152 = scmp.ne.s32.totalorder %s143, %s144
    %p153 = scmp.eq.s32.totalorder %s28, 0
    %p154 = por %p152, %p153
    %p155 = scmp.ne.s32.totalorder %s143, %s144
    %p156 = scmp.eq.s32.totalorder %s29, 1
    %p157 = por %p155, %p156
    %p159 = scmp.ne.s32.totalorder %s144, %s158
    %p160 = scmp.eq.s32.totalorder %s29, 0
    %p161 = por %p159, %p160
    %s163 = sadd.s32 %s162, 1
    %p166 = scmp.eq.s32.totalorder %s23, 1
    %p167 = scmp.ne.s32.totalorder %s162, %s164
    %p168 = scmp.eq.s32.totalorder %s23, 0
    %p169 = por %p167, %p168
    %p170 = scmp.ne.s32.totalorder %s162, %s164
    %p171 = scmp.eq.s32.totalorder %s28, 1
    %p172 = por %p170, %p171
    %p173 = scmp.ne.s32.totalorder %s164, %s165
    %p174 = scmp.eq.s32.totalorder %s28, 0
    %p175 = por %p173, %p174
    %p176 = scmp.ne.s32.totalorder %s164, %s165
    %p177 = scmp.eq.s32.totalorder %s29, 1
    %p178 = por %p176, %p177
    %p180 = scmp.ne.s32.totalorder %s165, %s179
    %p181 = scmp.eq.s32.totalorder %s29, 0
    %p182 = por %p180, %p181
    %s184 = sadd.s32 %s183, 1
    %p187 = scmp.eq.s32.totalorder %s23, 1
    %p188 = scmp.ne.s32.totalorder %s183, %s185
    %p189 = scmp.eq.s32.totalorder %s23, 0
    %p190 = por %p188, %p189
    %p191 = scmp.ne.s32.totalorder %s183, %s185
    %p192 = scmp.eq.s32.totalorder %s28, 1
    %p193 = por %p191, %p192
    %p194 = scmp.ne.s32.totalorder %s185, %s186
    %p195 = scmp.eq.s32.totalorder %s28, 0
    %p196 = por %p194, %p195
    %p197 = scmp.ne.s32.totalorder %s185, %s186
    %p198 = scmp.eq.s32.totalorder %s29, 1
    %p199 = por %p197, %p198
    %p201 = scmp.ne.s32.totalorder %s186, %s200
    %p202 = scmp.eq.s32.totalorder %s29, 0
    %p203 = por %p201, %p202
    %s205 = sadd.s32 %s204, 1
    %p208 = scmp.eq.s32.totalorder %s23, 1
    %p209 = scmp.ne.s32.totalorder %s204, %s206
    %p210 = scmp.eq.s32.totalorder %s23, 0
    %p211 = por %p209, %p210
    %p212 = scmp.ne.s32.totalorder %s204, %s206
    %p213 = scmp.eq.s32.totalorder %s28, 1
    %p214 = por %p212, %p213
    %p215 = scmp.ne.s32.totalorder %s206, %s207
    %p216 = scmp.eq.s32.totalorder %s28, 0
    %p217 = por %p215, %p216
    %p218 = scmp.ne.s32.totalorder %s206, %s207
    %p219 = scmp.eq.s32.totalorder %s29, 1
    %p220 = por %p218, %p219
    %p222 = scmp.ne.s32.totalorder %s207, %s221
    %p223 = scmp.eq.s32.totalorder %s29, 0
    %p224 = por %p222, %p223
    %s226 = sadd.s32 %s225, 1
    %p229 = scmp.eq.s32.totalorder %s23, 1
    %p230 = scmp.ne.s32.totalorder %s225, %s227
    %p231 = scmp.eq.s32.totalorder %s23, 0
    %p232 = por %p230, %p231
    %p233 = scmp.ne.s32.totalorder %s225, %s227
    %p234 = scmp.eq.s32.totalorder %s28, 1
    %p235 = por %p233, %p234
    %p236 = scmp.ne.s32.totalorder %s227, %s228
    %p237 = scmp.eq.s32.totalorder %s28, 0
    %p238 = por %p236, %p237
    %p239 = scmp.ne.s32.totalorder %s227, %s228
    %p240 = scmp.eq.s32.totalorder %s29, 1
    %p241 = por %p239, %p240
    %p243 = scmp.ne.s32.totalorder %s228, %s242
    %p244 = scmp.eq.s32.totalorder %s29, 0
    %p245 = por %p243, %p244
    %s247 = sadd.s32 %s246, 1
    %p250 = scmp.eq.s32.totalorder %s23, 1
    %p251 = scmp.ne.s32.totalorder %s246, %s248
    %p252 = scmp.eq.s32.totalorder %s23, 0
    %p253 = por %p251, %p252
    %p254 = scmp.ne.s32.totalorder %s246, %s248
    %p255 = scmp.eq.s32.totalorder %s28, 1
    %p256 = por %p254, %p255
    %p257 = scmp.ne.s32.totalorder %s248, %s249
    %p258 = scmp.eq.s32.totalorder %s28, 0
    %p259 = por %p257, %p258
    %p260 = scmp.ne.s32.totalorder %s248, %s249
    %p261 = scmp.eq.s32.totalorder %s29, 1
    %p262 = por %p260, %p261
    %p264 = scmp.ne.s32.totalorder %s249, %s263
    %p265 = scmp.eq.s32.totalorder %s29, 0
    %p266 = por %p264, %p265
    %s268 = sadd.s32 %s267, 1
    %p271 = scmp.eq.s32.totalorder %s23, 1
    %p272 = scmp.ne.s32.totalorder %s267, %s269
    %p273 = scmp.eq.s32.totalorder %s23, 0
    %p274 = por %p272, %p273
    %p275 = scmp.ne.s32.totalorder %s267, %s269
    %p276 = scmp.eq.s32.totalorder %s28, 1
    %p277 = por %p275, %p276
    %p278 = scmp.ne.s32.totalorder %s269, %s270
    %p279 = scmp.eq.s32.totalorder %s28, 0
    %p280 = por %p278, %p279
    %p281 = scmp.ne.s32.totalorder %s269, %s270
    %p282 = scmp.eq.s32.totalorder %s29, 1
    %p283 = por %p281, %p282
    %p285 = scmp.ne.s32.totalorder %s270, %s284
    %p286 = scmp.eq.s32.totalorder %s29, 0
    %p287 = por %p285, %p286
    %s289 = sadd.s32 %s288, 1
    %p292 = scmp.eq.s32.totalorder %s23, 1
    %p293 = scmp.ne.s32.totalorder %s288, %s290
    %p294 = scmp.eq.s32.totalorder %s23, 0
    %p295 = por %p293, %p294
    %p296 = scmp.ne.s32.totalorder %s288, %s290
    %p297 = scmp.eq.s32.totalorder %s28, 1
    %p298 = por %p296, %p297
    %p299 = scmp.ne.s32.totalorder %s290, %s291
    %p300 = scmp.eq.s32.totalorder %s28, 0
    %p301 = por %p299, %p300
    %p302 = scmp.ne.s32.totalorder %s290, %s291
    %p303 = scmp.eq.s32.totalorder %s29, 1
    %p304 = por %p302, %p303
    %p306 = scmp.ne.s32.totalorder %s291, %s305
    %p307 = scmp.eq.s32.totalorder %s29, 0
    %p308 = por %p306, %p307
    %s310 = sadd.s32 %s309, 1
    %p313 = scmp.eq.s32.totalorder %s23, 1
    %p314 = scmp.ne.s32.totalorder %s309, %s311
    %p315 = scmp.eq.s32.totalorder %s23, 0
    %p316 = por %p314, %p315
    %p317 = scmp.ne.s32.totalorder %s309, %s311
    %p318 = scmp.eq.s32.totalorder %s28, 1
    %p319 = por %p317, %p318
    %p320 = scmp.ne.s32.totalorder %s311, %s312
    %p321 = scmp.eq.s32.totalorder %s28, 0
    %p322 = por %p320, %p321
    %p323 = scmp.ne.s32.totalorder %s311, %s312
    %p324 = scmp.eq.s32.totalorder %s29, 1
    %p325 = por %p323, %p324
    %p327 = scmp.ne.s32.totalorder %s312, %s326
    %p328 = scmp.eq.s32.totalorder %s29, 0
    %p329 = por %p327, %p328
    %s331 = sadd.s32 %s330, 1
    %p334 = scmp.eq.s32.totalorder %s23, 1
    %p335 = scmp.ne.s32.totalorder %s330, %s332
    %p336 = scmp.eq.s32.totalorder %s23, 0
    %p337 = por %p335, %p336
    %p338 = scmp.ne.s32.totalorder %s330, %s332
    %p339 = scmp.eq.s32.totalorder %s28, 1
    %p340 = por %p338, %p339
    %p341 = scmp.ne.s32.totalorder %s332, %s333
    %p342 = scmp.eq.s32.totalorder %s28, 0
    %p343 = por %p341, %p342
    %p344 = scmp.ne.s32.totalorder %s332, %s333
    %p345 = scmp.eq.s32.totalorder %s29, 1
    %p346 = por %p344, %p345
    %p348 = scmp.ne.s32.totalorder %s333, %s347
    %p349 = scmp.eq.s32.totalorder %s29, 0
    %p350 = por %p348, %p349
    %s352 = sadd.s32 %s351, 1
    %p355 = scmp.eq.s32.totalorder %s23, 1
    %p356 = scmp.ne.s32.totalorder %s351, %s353
    %p357 = scmp.eq.s32.totalorder %s23, 0
    %p358 = por %p356, %p357
    %p359 = scmp.ne.s32.totalorder %s351, %s353
    %p360 = scmp.eq.s32.totalorder %s28, 1
    %p361 = por %p359, %p360
    %p362 = scmp.ne.s32.totalorder %s353, %s354
    %p363 = scmp.eq.s32.totalorder %s28, 0
    %p364 = por %p362, %p363
    %p365 = scmp.ne.s32.totalorder %s353, %s354
    %p366 = scmp.eq.s32.totalorder %s29, 1
    %p367 = por %p365, %p366
    %p369 = scmp.ne.s32.totalorder %s354, %s368
    %p370 = scmp.eq.s32.totalorder %s29, 0
    %p371 = por %p369, %p370
    %s373 = sadd.s32 %s372, 1
    %p376 = scmp.eq.s32.totalorder %s23, 1
    %p377 = scmp.ne.s32.totalorder %s372, %s374
    %p378 = scmp.eq.s32.totalorder %s23, 0
    %p379 = por %p377, %p378
    %p380 = scmp.ne.s32.totalorder %s372, %s374
    %p381 = scmp.eq.s32.totalorder %s28, 1
    %p382 = por %p380, %p381
    %p383 = scmp.ne.s32.totalorder %s374, %s375
    %p384 = scmp.eq.s32.totalorder %s28, 0
    %p385 = por %p383, %p384
    %p386 = scmp.ne.s32.totalorder %s374, %s375
    %p387 = scmp.eq.s32.totalorder %s29, 1
    %p388 = por %p386, %p387
    %p390 = scmp.ne.s32.totalorder %s375, %s389
    %p391 = scmp.eq.s32.totalorder %s29, 0
    %p392 = por %p390, %p391
    %s393 = ssub.s32 %s23, %s30
    %p394 = scmp.eq.s32.totalorder %s393, 0
    %s396 = sadd.s32 %s395, 1
    %s397 = scalar_select %p394, %s395, %s396
    %p400 = pneg %p394
    %p401 = scmp.eq.s32.totalorder %s23, 1
    %p402 = por %p400, %p401
    %p403 = scmp.ne.s32.totalorder %s395, %s398
    %p404 = scmp.eq.s32.totalorder %s23, 0
    %p405 = por %p403, %p404
    %p406 = scmp.ne.s32.totalorder %s395, %s398
    %p407 = scmp.eq.s32.totalorder %s28, 1
    %p408 = por %p406, %p407
    %p409 = scmp.ne.s32.totalorder %s398, %s399
    %p410 = scmp.eq.s32.totalorder %s28, 0
    %p411 = por %p409, %p410
    %p412 = scmp.ne.s32.totalorder %s398, %s399
    %p413 = scmp.eq.s32.totalorder %s29, 1
    %p414 = por %p412, %p413
    %p416 = scmp.ne.s32.totalorder %s399, %s415
    %p417 = scmp.eq.s32.totalorder %s29, 0
    %p418 = por %p416, %p417
    %p419 = scmp.le.s32.totalorder 1, %s23
    %p420 = scmp.lt.s32.totalorder %s23, 3
    %p421 = pnand %p419, %p420
    %p422 = pneg %p421
    // Predicated region
    $region9: #{funky_forward.7} parent=5 // pred_check
      _
    $region10: #{funky_forward.7} parent=5 // pred_check_branch
      %424 = sbr.rel (%p421) target = $region12
    $region11: #{funky_forward.7} parent=5 // pred_region
      %s425 = ssub.s32 %s23, 1
      // Predicated region
      $region13: #{funky_forward.7} parent=11 // pred_check
        %p426 = pneg %p70
      $region14: #{funky_forward.7} parent=11 // pred_check_branch
        %428 = sbr.rel (%p426) target = $region16
      $region15: #{funky_forward.7} parent=11 // pred_region
        _
      $region16: #{funky_forward.7} parent=11 // pred_fallthru
        _
      // Predicated region
      $region17: #{funky_forward.7} parent=11 // pred_check
        %p429 = pneg %p91
      $region18: #{funky_forward.7} parent=11 // pred_check_branch
        %431 = sbr.rel (%p429) target = $region20
      $region19: #{funky_forward.7} parent=11 // pred_region
        _
      $region20: #{funky_forward.7} parent=11 // pred_fallthru
        _
      // Predicated region
      $region21: #{funky_forward.7} parent=11 // pred_check
        %p432 = pneg %p112
      $region22: #{funky_forward.7} parent=11 // pred_check_branch
        %434 = sbr.rel (%p432) target = $region24
      $region23: #{funky_forward.7} parent=11 // pred_region
        _
      $region24: #{funky_forward.7} parent=11 // pred_fallthru
        _
      // Predicated region
      $region25: #{funky_forward.7} parent=11 // pred_check
        %p435 = pneg %p133
      $region26: #{funky_forward.7} parent=11 // pred_check_branch
        %437 = sbr.rel (%p435) target = $region28
      $region27: #{funky_forward.7} parent=11 // pred_region
        _
      $region28: #{funky_forward.7} parent=11 // pred_fallthru
        _
      // Predicated region
      $region29: #{funky_forward.7} parent=11 // pred_check
        %p438 = pneg %p154
      $region30: #{funky_forward.7} parent=11 // pred_check_branch
        %440 = sbr.rel (%p438) target = $region32
      $region31: #{funky_forward.7} parent=11 // pred_region
        _
      $region32: #{funky_forward.7} parent=11 // pred_fallthru
        _
      // Predicated region
      $region33: #{funky_forward.7} parent=11 // pred_check
        %p441 = pneg %p175
      $region34: #{funky_forward.7} parent=11 // pred_check_branch
        %443 = sbr.rel (%p441) target = $region36
      $region35: #{funky_forward.7} parent=11 // pred_region
        _
      $region36: #{funky_forward.7} parent=11 // pred_fallthru
        _
      // Predicated region
      $region37: #{funky_forward.7} parent=11 // pred_check
        %p444 = pneg %p196
      $region38: #{funky_forward.7} parent=11 // pred_check_branch
        %446 = sbr.rel (%p444) target = $region40
      $region39: #{funky_forward.7} parent=11 // pred_region
        _
      $region40: #{funky_forward.7} parent=11 // pred_fallthru
        _
      // Predicated region
      $region41: #{funky_forward.7} parent=11 // pred_check
        %p447 = pneg %p217
      $region42: #{funky_forward.7} parent=11 // pred_check_branch
        %449 = sbr.rel (%p447) target = $region44
      $region43: #{funky_forward.7} parent=11 // pred_region
        _
      $region44: #{funky_forward.7} parent=11 // pred_fallthru
        _
      // Predicated region
      $region45: #{funky_forward.7} parent=11 // pred_check
        %p450 = pneg %p238
      $region46: #{funky_forward.7} parent=11 // pred_check_branch
        %452 = sbr.rel (%p450) target = $region48
      $region47: #{funky_forward.7} parent=11 // pred_region
        _
      $region48: #{funky_forward.7} parent=11 // pred_fallthru
        _
      // Predicated region
      $region49: #{funky_forward.7} parent=11 // pred_check
        %p453 = pneg %p259
      $region50: #{funky_forward.7} parent=11 // pred_check_branch
        %455 = sbr.rel (%p453) target = $region52
      $region51: #{funky_forward.7} parent=11 // pred_region
        _
      $region52: #{funky_forward.7} parent=11 // pred_fallthru
        _
      // Predicated region
      $region53: #{funky_forward.7} parent=11 // pred_check
        %p456 = pneg %p280
      $region54: #{funky_forward.7} parent=11 // pred_check_branch
        %458 = sbr.rel (%p456) target = $region56
      $region55: #{funky_forward.7} parent=11 // pred_region
        _
      $region56: #{funky_forward.7} parent=11 // pred_fallthru
        _
      // Predicated region
      $region57: #{funky_forward.7} parent=11 // pred_check
        %p459 = pneg %p301
      $region58: #{funky_forward.7} parent=11 // pred_check_branch
        %461 = sbr.rel (%p459) target = $region60
      $region59: #{funky_forward.7} parent=11 // pred_region
        _
      $region60: #{funky_forward.7} parent=11 // pred_fallthru
        _
      // Predicated region
      $region61: #{funky_forward.7} parent=11 // pred_check
        %p462 = pneg %p322
      $region62: #{funky_forward.7} parent=11 // pred_check_branch
        %464 = sbr.rel (%p462) target = $region64
      $region63: #{funky_forward.7} parent=11 // pred_region
        _
      $region64: #{funky_forward.7} parent=11 // pred_fallthru
        _
      // Predicated region
      $region65: #{funky_forward.7} parent=11 // pred_check
        %p465 = pneg %p343
      $region66: #{funky_forward.7} parent=11 // pred_check_branch
        %467 = sbr.rel (%p465) target = $region68
      $region67: #{funky_forward.7} parent=11 // pred_region
        _
      $region68: #{funky_forward.7} parent=11 // pred_fallthru
        _
      // Predicated region
      $region69: #{funky_forward.7} parent=11 // pred_check
        %p468 = pneg %p364
      $region70: #{funky_forward.7} parent=11 // pred_check_branch
        %470 = sbr.rel (%p468) target = $region72
      $region71: #{funky_forward.7} parent=11 // pred_region
        _
      $region72: #{funky_forward.7} parent=11 // pred_fallthru
        _
      // Predicated region
      $region73: #{funky_forward.7} parent=11 // pred_check
        %p471 = pneg %p385
      $region74: #{funky_forward.7} parent=11 // pred_check_branch
        %473 = sbr.rel (%p471) target = $region76
      $region75: #{funky_forward.7} parent=11 // pred_region
        _
      $region76: #{funky_forward.7} parent=11 // pred_fallthru
        _
    $region12: #{funky_forward.7} parent=5 // pred_fallthru
      _
    %p474 = scmp.lt.s32.totalorder %s23, 2
    // Predicated region
    $region77: #{funky_forward.7} parent=5 // pred_check
      %p475 = pneg %p474
    $region78: #{funky_forward.7} parent=5 // pred_check_branch
      %477 = sbr.rel (%p475) target = $region80
    $region79: #{funky_forward.7} parent=5 // pred_region
      // Predicated region
      $region81: #{funky_forward.7} parent=79 // pred_check
        %p478 = pneg %p43
      $region82: #{funky_forward.7} parent=79 // pred_check_branch
        %480 = sbr.rel (%p478) target = $region84
      $region83: #{funky_forward.7} parent=79 // pred_region
        %p481 = scmp.lt.s32.totalorder %s23, 1
        %s482 = scalar_select %p481, %s23, 1
        %s483 = smul.addr %s482, 8
        %s484 = scalar_lea.vmem %s0, %s483
      $region84: #{funky_forward.7} parent=79 // pred_fallthru
        _
    $region80: #{funky_forward.7} parent=5 // pred_fallthru
      _
    %p485 = scmp.le.s32.totalorder 1, %s23
    %p486 = scmp.lt.s32.totalorder %s23, 3
    %p487 = pnand %p485, %p486
    %p488 = pneg %p487
    // Predicated region
    $region85: #{funky_forward.7} parent=5 // pred_check
      _
    $region86: #{funky_forward.7} parent=5 // pred_check_branch
      %490 = sbr.rel (%p487) target = $region88
    $region87: #{funky_forward.7} parent=5 // pred_region
      %s491 = ssub.s32 %s23, 1
      %p492 = scmp.lt.s32.totalorder %s28, 1
      %s493 = scalar_select %p492, %s28, 1
      %s494 = smul.addr %s493, 8
      %s495 = scalar_lea.vmem %s0, %s494
      %p496 = pneg %p49
      %p497 = pneg %p46
      %p498 = pneg %p70
      %p499 = pneg %p67
      %p500 = pneg %p91
      %p501 = pneg %p88
      %p502 = pneg %p112
      %p503 = pneg %p109
      %p504 = pneg %p133
      %p505 = pneg %p130
      %p506 = pneg %p154
      %p507 = pneg %p151
      %p508 = pneg %p175
      %p509 = pneg %p172
      %p510 = pneg %p196
      %p511 = pneg %p193
      %p512 = pneg %p217
      %p513 = pneg %p214
      %p514 = pneg %p238
      %p515 = pneg %p235
      %p516 = pneg %p259
      %p517 = pneg %p256
      %p518 = pneg %p280
      %p519 = pneg %p277
      %p520 = pneg %p301
      %p521 = pneg %p298
      %p522 = pneg %p322
      %p523 = pneg %p319
      %p524 = pneg %p343
      %p525 = pneg %p340
      %p526 = pneg %p364
      %p527 = pneg %p361
      %p528 = pneg %p385
      %p529 = pneg %p382
      %p530 = pneg %p411
      %p531 = pneg %p408
      %p532 = scmp.lt.s32.totalorder %s28, 1
      %s533 = scalar_select %p532, %s28, 1
      %s534 = smul.addr %s533, 8
      %s535 = scalar_lea.vmem %s17, %s534
      %p536 = scmp.lt.s32.totalorder %s28, 1
      %s537 = scalar_select %p536, %s28, 1
      %s538 = smul.addr %s537, 8
      %s539 = scalar_lea.vmem %s0, %s538
      %p540 = scmp.lt.s32.totalorder %s28, 1
      %s541 = scalar_select %p540, %s28, 1
      %s542 = smul.addr %s541, 8
      %s543 = scalar_lea.vmem %s17, %s542
      %v545 = vld [vmem:[%s539] sm:$0xff]
      %v546 = vpack.c.bf16 %v545, %v545
      %v547 = vld [vmem:[%s8] sm:$0x1]
      %v549 = vperm.slane %v547, 0
      %v551 = vadd.f32 %v549, 0.0
      %v552 = vld [vmem:[%s1] sm:$0xf]
      %v553 = vld [vmem:[%s1 + $0x4] sm:$0xf]
      %v554 = vld [vmem:[%s1 + $0x8] sm:$0xf]
      %v555 = vld [vmem:[%s1 + $0xc] sm:$0xf]
      %v556 = vld [vmem:[%s1 + $0x10] sm:$0xf]
      %v557 = vld [vmem:[%s1 + $0x14] sm:$0xf]
      %v558 = vld [vmem:[%s1 + $0x18] sm:$0xf]
      %v559 = vld [vmem:[%s1 + $0x1c] sm:$0xf]
      %v560 = vld [vmem:[%s1 + $0x20] sm:$0xf]
      %v561 = vld [vmem:[%s1 + $0x24] sm:$0xf]
      %v562 = vld [vmem:[%s1 + $0x28] sm:$0xf]
      %v563 = vld [vmem:[%s1 + $0x2c] sm:$0xf]
      %v564 = vld [vmem:[%s1 + $0x30] sm:$0xf]
      %v565 = vld [vmem:[%s1 + $0x34] sm:$0xf]
      %v566 = vld [vmem:[%s1 + $0x38] sm:$0xf]
      %v567 = vld [vmem:[%s1 + $0x3c] sm:$0xf]
      %v568 = vld [vmem:[%s4] sm:$0x1]
      %v570 = vperm.slane %v568, 0
      %v588 = vunpack.c.l.b16 %v552
      %v589 = vunpack.c.l.b16 %v553
      %v590 = vunpack.c.l.b16 %v554
      %v591 = vunpack.c.l.b16 %v555
      %v592 = vunpack.c.l.b16 %v556
      %v593 = vunpack.c.l.b16 %v557
      %v594 = vunpack.c.l.b16 %v558
      %v595 = vunpack.c.l.b16 %v559
      %v596 = vunpack.c.l.b16 %v560
      %v597 = vunpack.c.l.b16 %v561
      %v598 = vunpack.c.l.b16 %v562
      %v599 = vunpack.c.l.b16 %v563
      %v600 = vunpack.c.l.b16 %v564
      %v601 = vunpack.c.l.b16 %v565
      %v602 = vunpack.c.l.b16 %v566
      %v603 = vunpack.c.l.b16 %v567
      %v604 = vpack.c.b16 %v589, %v588
      %v605 = vpack.c.b16 %v591, %v590
      %v606 = vpack.c.b16 %v593, %v592
      %v607 = vpack.c.b16 %v595, %v594
      %v608 = vpack.c.b16 %v597, %v596
      %v609 = vpack.c.b16 %v599, %v598
      %v610 = vpack.c.b16 %v601, %v600
      %v611 = vpack.c.b16 %v603, %v602
      %620 = vmatpush.bf16.msra.mxu0 %v611
      %621 = vmatpush.bf16.msra.mxu0 %v610
      %622 = vmatpush.bf16.msra.mxu0 %v609
      %623 = vmatpush.bf16.msra.mxu0 %v608
      %624 = vmatpush.bf16.msra.mxu0 %v607
      %625 = vmatpush.bf16.msra.mxu0 %v606
      %626 = vmatpush.bf16.msra.mxu0 %v605
      %627 = vmatpush.bf16.msra.mxu0 %v604
      %628 = vmatmul.bf16.gmra.mxu0 %v546
      %v629 = vpop.f32.mrf.mxu0
      %v630 = vadd.f32 %v570, %v629
      %v631 = vpop.f32.mrf.mxu0
      %632 = vdwg.mxu0
      %v633 = vld [vmem:[%s2] sm:$0xf]
      %v634 = vld [vmem:[%s2 + $0x4] sm:$0xf]
      %v635 = vld [vmem:[%s2 + $0x8] sm:$0xf]
      %v636 = vld [vmem:[%s2 + $0xc] sm:$0xf]
      %v637 = vld [vmem:[%s2 + $0x10] sm:$0xf]
      %v638 = vld [vmem:[%s2 + $0x14] sm:$0xf]
      %v639 = vld [vmem:[%s2 + $0x18] sm:$0xf]
      %v640 = vld [vmem:[%s2 + $0x1c] sm:$0xf]
      %v641 = vld [vmem:[%s2 + $0x20] sm:$0xf]
      %v642 = vld [vmem:[%s2 + $0x24] sm:$0xf]
      %v643 = vld [vmem:[%s2 + $0x28] sm:$0xf]
      %v644 = vld [vmem:[%s2 + $0x2c] sm:$0xf]
      %v645 = vld [vmem:[%s2 + $0x30] sm:$0xf]
      %v646 = vld [vmem:[%s2 + $0x34] sm:$0xf]
      %v647 = vld [vmem:[%s2 + $0x38] sm:$0xf]
      %v648 = vld [vmem:[%s2 + $0x3c] sm:$0xf]
      %v649 = vld [vmem:[%s5] sm:$0x1]
      %v651 = vperm.slane %v649, 0
      %v669 = vunpack.c.l.b16 %v633
      %v670 = vunpack.c.l.b16 %v634
      %v671 = vunpack.c.l.b16 %v635
      %v672 = vunpack.c.l.b16 %v636
      %v673 = vunpack.c.l.b16 %v637
      %v674 = vunpack.c.l.b16 %v638
      %v675 = vunpack.c.l.b16 %v639
      %v676 = vunpack.c.l.b16 %v640
      %v677 = vunpack.c.l.b16 %v641
      %v678 = vunpack.c.l.b16 %v642
      %v679 = vunpack.c.l.b16 %v643
      %v680 = vunpack.c.l.b16 %v644
      %v681 = vunpack.c.l.b16 %v645
      %v682 = vunpack.c.l.b16 %v646
      %v683 = vunpack.c.l.b16 %v647
      %v684 = vunpack.c.l.b16 %v648
      %v685 = vpack.c.b16 %v670, %v669
      %v686 = vpack.c.b16 %v672, %v671
      %v687 = vpack.c.b16 %v674, %v673
      %v688 = vpack.c.b16 %v676, %v675
      %v689 = vpack.c.b16 %v678, %v677
      %v690 = vpack.c.b16 %v680, %v679
      %v691 = vpack.c.b16 %v682, %v681
      %v692 = vpack.c.b16 %v684, %v683
      %701 = vmatpush.bf16.msra.mxu0 %v692
      %702 = vmatpush.bf16.msra.mxu0 %v691
      %703 = vmatpush.bf16.msra.mxu0 %v690
      %704 = vmatpush.bf16.msra.mxu0 %v689
      %705 = vmatpush.bf16.msra.mxu0 %v688
      %706 = vmatpush.bf16.msra.mxu0 %v687
      %707 = vmatpush.bf16.msra.mxu0 %v686
      %708 = vmatpush.bf16.msra.mxu0 %v685
      %709 = vmatmul.bf16.gmra.mxu0 %v546
      %v710 = vpop.f32.mrf.mxu0
      %v711 = vadd.f32 %v651, %v710
      %v712 = vpop.f32.mrf.mxu0
      %713 = vdwg.mxu0
      %v714 = vld [vmem:[%s3] sm:$0xf]
      %v715 = vld [vmem:[%s3 + $0x4] sm:$0xf]
      %v716 = vld [vmem:[%s3 + $0x8] sm:$0xf]
      %v717 = vld [vmem:[%s3 + $0xc] sm:$0xf]
      %v718 = vld [vmem:[%s3 + $0x10] sm:$0xf]
      %v719 = vld [vmem:[%s3 + $0x14] sm:$0xf]
      %v720 = vld [vmem:[%s3 + $0x18] sm:$0xf]
      %v721 = vld [vmem:[%s3 + $0x1c] sm:$0xf]
      %v722 = vld [vmem:[%s3 + $0x20] sm:$0xf]
      %v723 = vld [vmem:[%s3 + $0x24] sm:$0xf]
      %v724 = vld [vmem:[%s3 + $0x28] sm:$0xf]
      %v725 = vld [vmem:[%s3 + $0x2c] sm:$0xf]
      %v726 = vld [vmem:[%s3 + $0x30] sm:$0xf]
      %v727 = vld [vmem:[%s3 + $0x34] sm:$0xf]
      %v728 = vld [vmem:[%s3 + $0x38] sm:$0xf]
      %v729 = vld [vmem:[%s3 + $0x3c] sm:$0xf]
      %v730 = vld [vmem:[%s6] sm:$0x1]
      %v732 = vperm.slane %v730, 0
      %v750 = vunpack.c.l.b16 %v714
      %v751 = vunpack.c.l.b16 %v715
      %v752 = vunpack.c.l.b16 %v716
      %v753 = vunpack.c.l.b16 %v717
      %v754 = vunpack.c.l.b16 %v718
      %v755 = vunpack.c.l.b16 %v719
      %v756 = vunpack.c.l.b16 %v720
      %v757 = vunpack.c.l.b16 %v721
      %v758 = vunpack.c.l.b16 %v722
      %v759 = vunpack.c.l.b16 %v723
      %v760 = vunpack.c.l.b16 %v724
      %v761 = vunpack.c.l.b16 %v725
      %v762 = vunpack.c.l.b16 %v726
      %v763 = vunpack.c.l.b16 %v727
      %v764 = vunpack.c.l.b16 %v728
      %v765 = vunpack.c.l.b16 %v729
      %v766 = vpack.c.b16 %v751, %v750
      %v767 = vpack.c.b16 %v753, %v752
      %v768 = vpack.c.b16 %v755, %v754
      %v769 = vpack.c.b16 %v757, %v756
      %v770 = vpack.c.b16 %v759, %v758
      %v771 = vpack.c.b16 %v761, %v760
      %v772 = vpack.c.b16 %v763, %v762
      %v773 = vpack.c.b16 %v765, %v764
      %782 = vmatpush.bf16.msra.mxu0 %v773
      %783 = vmatpush.bf16.msra.mxu0 %v772
      %784 = vmatpush.bf16.msra.mxu0 %v771
      %785 = vmatpush.bf16.msra.mxu0 %v770
      %786 = vmatpush.bf16.msra.mxu0 %v769
      %787 = vmatpush.bf16.msra.mxu0 %v768
      %788 = vmatpush.bf16.msra.mxu0 %v767
      %789 = vmatpush.bf16.msra.mxu0 %v766
      %790 = vmatmul.bf16.gmra.mxu0 %v546
      %v791 = vpop.f32.mrf.mxu0
      %v792 = vadd.f32 %v732, %v791
      %v793 = vpop.f32.mrf.mxu0
      %794 = vdwg.mxu0
      %v795 = vpack.c.bf16 %v630, %v630
      %v796 = vpack.c.bf16 %v711, %v711
      %vm797 = vcmask 261120
      %v799 = vsel %vm797, %v795, 0
      %v802 = vsel %vm797, %v796, 0
      %804 = vmatpush.bf16.xpose.msra.mxu0 0
      %805 = vmatpush.bf16.xpose.msra.mxu0 0
      %806 = vmatpush.bf16.xpose.msra.mxu0 0
      %807 = vmatpush.bf16.xpose.msra.mxu0 0
      %808 = vmatpush.bf16.xpose.msra.mxu0 0
      %809 = vmatpush.bf16.xpose.msra.mxu0 0
      %810 = vmatpush.bf16.xpose.msra.mxu0 0
      %811 = vmatpush.bf16.xpose.msra.mxu0 %v802
      %812 = vmatmul.bf16.gmra.mxu0 %v799
      %v813 = vpop.f32.mrf.mxu0
      %v814 = vadd.f32 0.0, %v813
      %v815 = vpop.f32.mrf.mxu0
      %816 = vdwg.mxu0
      %v817 = vmul.f32 %v814, 0.17677669
      %vm818 = vcmask 64512
      %v819 = vsel %vm818, %v817, -inf
      %820 = vmax.xlane.f32.xlu0 %v819
      %v821 = vpop.xlane.xlu0 %820
      %v822 = vsub.f32 %v817, %v821
      %v823 = vmul.f32 %v822, 1.442695
      %v824 = vpow.pop %v823
      %v825 = vsel %vm818, %v824, 0.0
      %826 = vadd.xlane.f32.xlu0 %v825
      %v827 = vpop.xlane.xlu0 %826
      %v828 = vrcp.pop %v827
      %v829 = vmul.f32 %v824, %v828
      %v830 = vpack.c.bf16 %v829, %v829
      %v831 = vpack.c.bf16 %v792, %v792
      %v833 = vsel %vm818, %v830, 0
      %vm835 = vcmask 1043456
      %v837 = vsel %vm835, %v831, 0
      %839 = vmatpush.bf16.msra.mxu0 0
      %840 = vmatpush.bf16.msra.mxu0 0
      %841 = vmatpush.bf16.msra.mxu0 0
      %842 = vmatpush.bf16.msra.mxu0 0
      %843 = vmatpush.bf16.msra.mxu0 0
      %844 = vmatpush.bf16.msra.mxu0 0
      %845 = vmatpush.bf16.msra.mxu0 0
      %846 = vmatpush.bf16.msra.mxu0 %v837
      %847 = vmatmul.bf16.gmra.mxu0 %v833
      %v848 = vpop.f32.mrf.mxu0
      %v849 = vadd.f32 0.0, %v848
      %v850 = vpop.f32.mrf.mxu0
      %851 = vdwg.mxu0
      %v852 = vld [vmem:[%s7] sm:$0xf]
      %v853 = vld [vmem:[%s7 + $0x4] sm:$0xf]
      %v854 = vld [vmem:[%s7 + $0x8] sm:$0xf]
      %v855 = vld [vmem:[%s7 + $0xc] sm:$0xf]
      %v856 = vpack.c.bf16 %v849, %v849
      %v861 = vunpack.c.l.b16 %v852
      %v862 = vunpack.c.l.b16 %v853
      %v863 = vunpack.c.l.b16 %v854
      %v864 = vunpack.c.l.b16 %v855
      %v865 = vpack.c.b16 %v862, %v861
      %v866 = vpack.c.b16 %v864, %v863
      %v870 = vsel %vm797, %v856, 0
      %872 = vmatpush.bf16.msra.mxu0 0
      %873 = vmatpush.bf16.msra.mxu0 0
      %874 = vmatpush.bf16.msra.mxu0 0
      %875 = vmatpush.bf16.msra.mxu0 0
      %876 = vmatpush.bf16.msra.mxu0 0
      %877 = vmatpush.bf16.msra.mxu0 0
      %878 = vmatpush.bf16.msra.mxu0 %v866
      %879 = vmatpush.bf16.msra.mxu0 %v865
      %880 = vmatmul.bf16.gmra.mxu0 %v870
      %v881 = vpop.f32.mrf.mxu0
      %v882 = vadd.f32 0.0, %v881
      %v883 = vpop.f32.mrf.mxu0
      %884 = vdwg.mxu0
      %v885 = vadd.f32 %v551, %v882
      %s886 = scalar_lea.vmem %s1, 64
      %v887 = vld [vmem:[%s886] sm:$0xf]
      %v888 = vld [vmem:[%s886 + $0x4] sm:$0xf]
      %v889 = vld [vmem:[%s886 + $0x8] sm:$0xf]
      %v890 = vld [vmem:[%s886 + $0xc] sm:$0xf]
      %v891 = vld [vmem:[%s886 + $0x10] sm:$0xf]
      %v892 = vld [vmem:[%s886 + $0x14] sm:$0xf]
      %v893 = vld [vmem:[%s886 + $0x18] sm:$0xf]
      %v894 = vld [vmem:[%s886 + $0x1c] sm:$0xf]
      %v895 = vld [vmem:[%s886 + $0x20] sm:$0xf]
      %v896 = vld [vmem:[%s886 + $0x24] sm:$0xf]
      %v897 = vld [vmem:[%s886 + $0x28] sm:$0xf]
      %v898 = vld [vmem:[%s886 + $0x2c] sm:$0xf]
      %v899 = vld [vmem:[%s886 + $0x30] sm:$0xf]
      %v900 = vld [vmem:[%s886 + $0x34] sm:$0xf]
      %v901 = vld [vmem:[%s886 + $0x38] sm:$0xf]
      %v902 = vld [vmem:[%s886 + $0x3c] sm:$0xf]
      %s903 = scalar_lea.vmem %s4, 1
      %v904 = vld [vmem:[%s903] sm:$0x1]
      %v906 = vperm.slane %v904, 0
      %v924 = vunpack.c.l.b16 %v887
      %v925 = vunpack.c.l.b16 %v888
      %v926 = vunpack.c.l.b16 %v889
      %v927 = vunpack.c.l.b16 %v890
      %v928 = vunpack.c.l.b16 %v891
      %v929 = vunpack.c.l.b16 %v892
      %v930 = vunpack.c.l.b16 %v893
      %v931 = vunpack.c.l.b16 %v894
      %v932 = vunpack.c.l.b16 %v895
      %v933 = vunpack.c.l.b16 %v896
      %v934 = vunpack.c.l.b16 %v897
      %v935 = vunpack.c.l.b16 %v898
      %v936 = vunpack.c.l.b16 %v899
      %v937 = vunpack.c.l.b16 %v900
      %v938 = vunpack.c.l.b16 %v901
      %v939 = vunpack.c.l.b16 %v902
      %v940 = vpack.c.b16 %v925, %v924
      %v941 = vpack.c.b16 %v927, %v926
      %v942 = vpack.c.b16 %v929, %v928
      %v943 = vpack.c.b16 %v931, %v930
      %v944 = vpack.c.b16 %v933, %v932
      %v945 = vpack.c.b16 %v935, %v934
      %v946 = vpack.c.b16 %v937, %v936
      %v947 = vpack.c.b16 %v939, %v938
      %956 = vmatpush.bf16.msra.mxu0 %v947
      %957 = vmatpush.bf16.msra.mxu0 %v946
      %958 = vmatpush.bf16.msra.mxu0 %v945
      %959 = vmatpush.bf16.msra.mxu0 %v944
      %960 = vmatpush.bf16.msra.mxu0 %v943
      %961 = vmatpush.bf16.msra.mxu0 %v942
      %962 = vmatpush.bf16.msra.mxu0 %v941
      %963 = vmatpush.bf16.msra.mxu0 %v940
      %964 = vmatmul.bf16.gmra.mxu0 %v546
      %v965 = vpop.f32.mrf.mxu0
      %v966 = vadd.f32 %v906, %v965
      %v967 = vpop.f32.mrf.mxu0
      %968 = vdwg.mxu0
      %s969 = scalar_lea.vmem %s2, 64
      %v970 = vld [vmem:[%s969] sm:$0xf]
      %v971 = vld [vmem:[%s969 + $0x4] sm:$0xf]
      %v972 = vld [vmem:[%s969 + $0x8] sm:$0xf]
      %v973 = vld [vmem:[%s969 + $0xc] sm:$0xf]
      %v974 = vld [vmem:[%s969 + $0x10] sm:$0xf]
      %v975 = vld [vmem:[%s969 + $0x14] sm:$0xf]
      %v976 = vld [vmem:[%s969 + $0x18] sm:$0xf]
      %v977 = vld [vmem:[%s969 + $0x1c] sm:$0xf]
      %v978 = vld [vmem:[%s969 + $0x20] sm:$0xf]
      %v979 = vld [vmem:[%s969 + $0x24] sm:$0xf]
      %v980 = vld [vmem:[%s969 + $0x28] sm:$0xf]
      %v981 = vld [vmem:[%s969 + $0x2c] sm:$0xf]
      %v982 = vld [vmem:[%s969 + $0x30] sm:$0xf]
      %v983 = vld [vmem:[%s969 + $0x34] sm:$0xf]
      %v984 = vld [vmem:[%s969 + $0x38] sm:$0xf]
      %v985 = vld [vmem:[%s969 + $0x3c] sm:$0xf]
      %s986 = scalar_lea.vmem %s5, 1
      %v987 = vld [vmem:[%s986] sm:$0x1]
      %v989 = vperm.slane %v987, 0
      %v1007 = vunpack.c.l.b16 %v970
      %v1008 = vunpack.c.l.b16 %v971
      %v1009 = vunpack.c.l.b16 %v972
      %v1010 = vunpack.c.l.b16 %v973
      %v1011 = vunpack.c.l.b16 %v974
      %v1012 = vunpack.c.l.b16 %v975
      %v1013 = vunpack.c.l.b16 %v976
      %v1014 = vunpack.c.l.b16 %v977
      %v1015 = vunpack.c.l.b16 %v978
      %v1016 = vunpack.c.l.b16 %v979
      %v1017 = vunpack.c.l.b16 %v980
      %v1018 = vunpack.c.l.b16 %v981
      %v1019 = vunpack.c.l.b16 %v982
      %v1020 = vunpack.c.l.b16 %v983
      %v1021 = vunpack.c.l.b16 %v984
      %v1022 = vunpack.c.l.b16 %v985
      %v1023 = vpack.c.b16 %v1008, %v1007
      %v1024 = vpack.c.b16 %v1010, %v1009
      %v1025 = vpack.c.b16 %v1012, %v1011
      %v1026 = vpack.c.b16 %v1014, %v1013
      %v1027 = vpack.c.b16 %v1016, %v1015
      %v1028 = vpack.c.b16 %v1018, %v1017
      %v1029 = vpack.c.b16 %v1020, %v1019
      %v1030 = vpack.c.b16 %v1022, %v1021
      %1039 = vmatpush.bf16.msra.mxu0 %v1030
      %1040 = vmatpush.bf16.msra.mxu0 %v1029
      %1041 = vmatpush.bf16.msra.mxu0 %v1028
      %1042 = vmatpush.bf16.msra.mxu0 %v1027
      %1043 = vmatpush.bf16.msra.mxu0 %v1026
      %1044 = vmatpush.bf16.msra.mxu0 %v1025
      %1045 = vmatpush.bf16.msra.mxu0 %v1024
      %1046 = vmatpush.bf16.msra.mxu0 %v1023
      %1047 = vmatmul.bf16.gmra.mxu0 %v546
      %v1048 = vpop.f32.mrf.mxu0
      %v1049 = vadd.f32 %v989, %v1048
      %v1050 = vpop.f32.mrf.mxu0
      %1051 = vdwg.mxu0
      %s1052 = scalar_lea.vmem %s3, 64
      %v1053 = vld [vmem:[%s1052] sm:$0xf]
      %v1054 = vld [vmem:[%s1052 + $0x4] sm:$0xf]
      %v1055 = vld [vmem:[%s1052 + $0x8] sm:$0xf]
      %v1056 = vld [vmem:[%s1052 + $0xc] sm:$0xf]
      %v1057 = vld [vmem:[%s1052 + $0x10] sm:$0xf]
      %v1058 = vld [vmem:[%s1052 + $0x14] sm:$0xf]
      %v1059 = vld [vmem:[%s1052 + $0x18] sm:$0xf]
      %v1060 = vld [vmem:[%s1052 + $0x1c] sm:$0xf]
      %v1061 = vld [vmem:[%s1052 + $0x20] sm:$0xf]
      %v1062 = vld [vmem:[%s1052 + $0x24] sm:$0xf]
      %v1063 = vld [vmem:[%s1052 + $0x28] sm:$0xf]
      %v1064 = vld [vmem:[%s1052 + $0x2c] sm:$0xf]
      %v1065 = vld [vmem:[%s1052 + $0x30] sm:$0xf]
      %v1066 = vld [vmem:[%s1052 + $0x34] sm:$0xf]
      %v1067 = vld [vmem:[%s1052 + $0x38] sm:$0xf]
      %v1068 = vld [vmem:[%s1052 + $0x3c] sm:$0xf]
      %s1069 = scalar_lea.vmem %s6, 1
      %v1070 = vld [vmem:[%s1069] sm:$0x1]
      %v1072 = vperm.slane %v1070, 0
      %v1090 = vunpack.c.l.b16 %v1053
      %v1091 = vunpack.c.l.b16 %v1054
      %v1092 = vunpack.c.l.b16 %v1055
      %v1093 = vunpack.c.l.b16 %v1056
      %v1094 = vunpack.c.l.b16 %v1057
      %v1095 = vunpack.c.l.b16 %v1058
      %v1096 = vunpack.c.l.b16 %v1059
      %v1097 = vunpack.c.l.b16 %v1060
      %v1098 = vunpack.c.l.b16 %v1061
      %v1099 = vunpack.c.l.b16 %v1062
      %v1100 = vunpack.c.l.b16 %v1063
      %v1101 = vunpack.c.l.b16 %v1064
      %v1102 = vunpack.c.l.b16 %v1065
      %v1103 = vunpack.c.l.b16 %v1066
      %v1104 = vunpack.c.l.b16 %v1067
      %v1105 = vunpack.c.l.b16 %v1068
      %v1106 = vpack.c.b16 %v1091, %v1090
      %v1107 = vpack.c.b16 %v1093, %v1092
      %v1108 = vpack.c.b16 %v1095, %v1094
      %v1109 = vpack.c.b16 %v1097, %v1096
      %v1110 = vpack.c.b16 %v1099, %v1098
      %v1111 = vpack.c.b16 %v1101, %v1100
      %v1112 = vpack.c.b16 %v1103, %v1102
      %v1113 = vpack.c.b16 %v1105, %v1104
      %1122 = vmatpush.bf16.msra.mxu0 %v1113
      %1123 = vmatpush.bf16.msra.mxu0 %v1112
      %1124 = vmatpush.bf16.msra.mxu0 %v1111
      %1125 = vmatpush.bf16.msra.mxu0 %v1110
      %1126 = vmatpush.bf16.msra.mxu0 %v1109
      %1127 = vmatpush.bf16.msra.mxu0 %v1108
      %1128 = vmatpush.bf16.msra.mxu0 %v1107
      %1129 = vmatpush.bf16.msra.mxu0 %v1106
      %1130 = vmatmul.bf16.gmra.mxu0 %v546
      %v1131 = vpop.f32.mrf.mxu0
      %v1132 = vadd.f32 %v1072, %v1131
      %v1133 = vpop.f32.mrf.mxu0
      %1134 = vdwg.mxu0
      %v1135 = vpack.c.bf16 %v966, %v966
      %v1136 = vpack.c.bf16 %v1049, %v1049
      %v1138 = vsel %vm797, %v1135, 0
      %v1141 = vsel %vm797, %v1136, 0
      %1143 = vmatpush.bf16.xpose.msra.mxu0 0
      %1144 = vmatpush.bf16.xpose.msra.mxu0 0
      %1145 = vmatpush.bf16.xpose.msra.mxu0 0
      %1146 = vmatpush.bf16.xpose.msra.mxu0 0
      %1147 = vmatpush.bf16.xpose.msra.mxu0 0
      %1148 = vmatpush.bf16.xpose.msra.mxu0 0
      %1149 = vmatpush.bf16.xpose.msra.mxu0 0
      %1150 = vmatpush.bf16.xpose.msra.mxu0 %v1141
      %1151 = vmatmul.bf16.gmra.mxu0 %v1138
      %v1152 = vpop.f32.mrf.mxu0
      %v1153 = vadd.f32 0.0, %v1152
      %v1154 = vpop.f32.mrf.mxu0
      %1155 = vdwg.mxu0
      %v1156 = vmul.f32 %v1153, 0.17677669
      %v1157 = vsel %vm818, %v1156, -inf
      %1158 = vmax.xlane.f32.xlu0 %v1157
      %v1159 = vpop.xlane.xlu0 %1158
      %v1160 = vsub.f32 %v1156, %v1159
      %v1161 = vmul.f32 %v1160, 1.442695
      %v1162 = vpow.pop %v1161
      %v1163 = vsel %vm818, %v1162, 0.0
      %1164 = vadd.xlane.f32.xlu0 %v1163
      %v1165 = vpop.xlane.xlu0 %1164
      %v1166 = vrcp.pop %v1165
      %v1167 = vmul.f32 %v1162, %v1166
      %v1168 = vpack.c.bf16 %v1167, %v1167
      %v1169 = vpack.c.bf16 %v1132, %v1132
      %v1171 = vsel %vm818, %v1168, 0
      %v1174 = vsel %vm835, %v1169, 0
      %1176 = vmatpush.bf16.msra.mxu0 0
      %1177 = vmatpush.bf16.msra.mxu0 0
      %1178 = vmatpush.bf16.msra.mxu0 0
      %1179 = vmatpush.bf16.msra.mxu0 0
      %1180 = vmatpush.bf16.msra.mxu0 0
      %1181 = vmatpush.bf16.msra.mxu0 0
      %1182 = vmatpush.bf16.msra.mxu0 0
      %1183 = vmatpush.bf16.msra.mxu0 %v1174
      %1184 = vmatmul.bf16.gmra.mxu0 %v1171
      %v1185 = vpop.f32.mrf.mxu0
      %v1186 = vadd.f32 0.0, %v1185
      %v1187 = vpop.f32.mrf.mxu0
      %1188 = vdwg.mxu0
      %s1189 = scalar_lea.vmem %s7, 16
      %v1190 = vld [vmem:[%s1189] sm:$0xf]
      %v1191 = vld [vmem:[%s1189 + $0x4] sm:$0xf]
      %v1192 = vld [vmem:[%s1189 + $0x8] sm:$0xf]
      %v1193 = vld [vmem:[%s1189 + $0xc] sm:$0xf]
      %v1194 = vpack.c.bf16 %v1186, %v1186
      %v1199 = vunpack.c.l.b16 %v1190
      %v1200 = vunpack.c.l.b16 %v1191
      %v1201 = vunpack.c.l.b16 %v1192
      %v1202 = vunpack.c.l.b16 %v1193
      %v1203 = vpack.c.b16 %v1200, %v1199
      %v1204 = vpack.c.b16 %v1202, %v1201
      %v1208 = vsel %vm797, %v1194, 0
      %1210 = vmatpush.bf16.msra.mxu0 0
      %1211 = vmatpush.bf16.msra.mxu0 0
      %1212 = vmatpush.bf16.msra.mxu0 0
      %1213 = vmatpush.bf16.msra.mxu0 0
      %1214 = vmatpush.bf16.msra.mxu0 0
      %1215 = vmatpush.bf16.msra.mxu0 0
      %1216 = vmatpush.bf16.msra.mxu0 %v1204
      %1217 = vmatpush.bf16.msra.mxu0 %v1203
      %1218 = vmatmul.bf16.gmra.mxu0 %v1208
      %v1219 = vpop.f32.mrf.mxu0
      %v1220 = vadd.f32 0.0, %v1219
      %v1221 = vpop.f32.mrf.mxu0
      %1222 = vdwg.mxu0
      %v1223 = vadd.f32 %v885, %v1220
      %s1224 = scalar_lea.vmem %s1, 128
      %v1225 = vld [vmem:[%s1224] sm:$0xf]
      %v1226 = vld [vmem:[%s1224 + $0x4] sm:$0xf]
      %v1227 = vld [vmem:[%s1224 + $0x8] sm:$0xf]
      %v1228 = vld [vmem:[%s1224 + $0xc] sm:$0xf]
      %v1229 = vld [vmem:[%s1224 + $0x10] sm:$0xf]
      %v1230 = vld [vmem:[%s1224 + $0x14] sm:$0xf]
      %v1231 = vld [vmem:[%s1224 + $0x18] sm:$0xf]
      %v1232 = vld [vmem:[%s1224 + $0x1c] sm:$0xf]
      %v1233 = vld [vmem:[%s1224 + $0x20] sm:$0xf]
      %v1234 = vld [vmem:[%s1224 + $0x24] sm:$0xf]
      %v1235 = vld [vmem:[%s1224 + $0x28] sm:$0xf]
      %v1236 = vld [vmem:[%s1224 + $0x2c] sm:$0xf]
      %v1237 = vld [vmem:[%s1224 + $0x30] sm:$0xf]
      %v1238 = vld [vmem:[%s1224 + $0x34] sm:$0xf]
      %v1239 = vld [vmem:[%s1224 + $0x38] sm:$0xf]
      %v1240 = vld [vmem:[%s1224 + $0x3c] sm:$0xf]
      %s1241 = scalar_lea.vmem %s4, 2
      %v1242 = vld [vmem:[%s1241] sm:$0x1]
      %v1244 = vperm.slane %v1242, 0
      %v1262 = vunpack.c.l.b16 %v1225
      %v1263 = vunpack.c.l.b16 %v1226
      %v1264 = vunpack.c.l.b16 %v1227
      %v1265 = vunpack.c.l.b16 %v1228
      %v1266 = vunpack.c.l.b16 %v1229
      %v1267 = vunpack.c.l.b16 %v1230
      %v1268 = vunpack.c.l.b16 %v1231
      %v1269 = vunpack.c.l.b16 %v1232
      %v1270 = vunpack.c.l.b16 %v1233
      %v1271 = vunpack.c.l.b16 %v1234
      %v1272 = vunpack.c.l.b16 %v1235
      %v1273 = vunpack.c.l.b16 %v1236
      %v1274 = vunpack.c.l.b16 %v1237
      %v1275 = vunpack.c.l.b16 %v1238
      %v1276 = vunpack.c.l.b16 %v1239
      %v1277 = vunpack.c.l.b16 %v1240
      %v1278 = vpack.c.b16 %v1263, %v1262
      %v1279 = vpack.c.b16 %v1265, %v1264
      %v1280 = vpack.c.b16 %v1267, %v1266
      %v1281 = vpack.c.b16 %v1269, %v1268
      %v1282 = vpack.c.b16 %v1271, %v1270
      %v1283 = vpack.c.b16 %v1273, %v1272
      %v1284 = vpack.c.b16 %v1275, %v1274
      %v1285 = vpack.c.b16 %v1277, %v1276
      %1294 = vmatpush.bf16.msra.mxu0 %v1285
      %1295 = vmatpush.bf16.msra.mxu0 %v1284
      %1296 = vmatpush.bf16.msra.mxu0 %v1283
      %1297 = vmatpush.bf16.msra.mxu0 %v1282
      %1298 = vmatpush.bf16.msra.mxu0 %v1281
      %1299 = vmatpush.bf16.msra.mxu0 %v1280
      %1300 = vmatpush.bf16.msra.mxu0 %v1279
      %1301 = vmatpush.bf16.msra.mxu0 %v1278
      %1302 = vmatmul.bf16.gmra.mxu0 %v546
      %v1303 = vpop.f32.mrf.mxu0
      %v1304 = vadd.f32 %v1244, %v1303
      %v1305 = vpop.f32.mrf.mxu0
      %1306 = vdwg.mxu0
      %s1307 = scalar_lea.vmem %s2, 128
      %v1308 = vld [vmem:[%s1307] sm:$0xf]
      %v1309 = vld [vmem:[%s1307 + $0x4] sm:$0xf]
      %v1310 = vld [vmem:[%s1307 + $0x8] sm:$0xf]
      %v1311 = vld [vmem:[%s1307 + $0xc] sm:$0xf]
      %v1312 = vld [vmem:[%s1307 + $0x10] sm:$0xf]
      %v1313 = vld [vmem:[%s1307 + $0x14] sm:$0xf]
      %v1314 = vld [vmem:[%s1307 + $0x18] sm:$0xf]
      %v1315 = vld [vmem:[%s1307 + $0x1c] sm:$0xf]
      %v1316 = vld [vmem:[%s1307 + $0x20] sm:$0xf]
      %v1317 = vld [vmem:[%s1307 + $0x24] sm:$0xf]
      %v1318 = vld [vmem:[%s1307 + $0x28] sm:$0xf]
      %v1319 = vld [vmem:[%s1307 + $0x2c] sm:$0xf]
      %v1320 = vld [vmem:[%s1307 + $0x30] sm:$0xf]
      %v1321 = vld [vmem:[%s1307 + $0x34] sm:$0xf]
      %v1322 = vld [vmem:[%s1307 + $0x38] sm:$0xf]
      %v1323 = vld [vmem:[%s1307 + $0x3c] sm:$0xf]
      %s1324 = scalar_lea.vmem %s5, 2
      %v1325 = vld [vmem:[%s1324] sm:$0x1]
      %v1327 = vperm.slane %v1325, 0
      %v1345 = vunpack.c.l.b16 %v1308
      %v1346 = vunpack.c.l.b16 %v1309
      %v1347 = vunpack.c.l.b16 %v1310
      %v1348 = vunpack.c.l.b16 %v1311
      %v1349 = vunpack.c.l.b16 %v1312
      %v1350 = vunpack.c.l.b16 %v1313
      %v1351 = vunpack.c.l.b16 %v1314
      %v1352 = vunpack.c.l.b16 %v1315
      %v1353 = vunpack.c.l.b16 %v1316
      %v1354 = vunpack.c.l.b16 %v1317
      %v1355 = vunpack.c.l.b16 %v1318
      %v1356 = vunpack.c.l.b16 %v1319
      %v1357 = vunpack.c.l.b16 %v1320
      %v1358 = vunpack.c.l.b16 %v1321
      %v1359 = vunpack.c.l.b16 %v1322
      %v1360 = vunpack.c.l.b16 %v1323
      %v1361 = vpack.c.b16 %v1346, %v1345
      %v1362 = vpack.c.b16 %v1348, %v1347
      %v1363 = vpack.c.b16 %v1350, %v1349
      %v1364 = vpack.c.b16 %v1352, %v1351
      %v1365 = vpack.c.b16 %v1354, %v1353
      %v1366 = vpack.c.b16 %v1356, %v1355
      %v1367 = vpack.c.b16 %v1358, %v1357
      %v1368 = vpack.c.b16 %v1360, %v1359
      %1377 = vmatpush.bf16.msra.mxu0 %v1368
      %1378 = vmatpush.bf16.msra.mxu0 %v1367
      %1379 = vmatpush.bf16.msra.mxu0 %v1366
      %1380 = vmatpush.bf16.msra.mxu0 %v1365
      %1381 = vmatpush.bf16.msra.mxu0 %v1364
      %1382 = vmatpush.bf16.msra.mxu0 %v1363
      %1383 = vmatpush.bf16.msra.mxu0 %v1362
      %1384 = vmatpush.bf16.msra.mxu0 %v1361
      %1385 = vmatmul.bf16.gmra.mxu0 %v546
      %v1386 = vpop.f32.mrf.mxu0
      %v1387 = vadd.f32 %v1327, %v1386
      %v1388 = vpop.f32.mrf.mxu0
      %1389 = vdwg.mxu0
      %s1390 = scalar_lea.vmem %s3, 128
      %v1391 = vld [vmem:[%s1390] sm:$0xf]
      %v1392 = vld [vmem:[%s1390 + $0x4] sm:$0xf]
      %v1393 = vld [vmem:[%s1390 + $0x8] sm:$0xf]
      %v1394 = vld [vmem:[%s1390 + $0xc] sm:$0xf]
      %v1395 = vld [vmem:[%s1390 + $0x10] sm:$0xf]
      %v1396 = vld [vmem:[%s1390 + $0x14] sm:$0xf]
      %v1397 = vld [vmem:[%s1390 + $0x18] sm:$0xf]
      %v1398 = vld [vmem:[%s1390 + $0x1c] sm:$0xf]
      %v1399 = vld [vmem:[%s1390 + $0x20] sm:$0xf]
      %v1400 = vld [vmem:[%s1390 + $0x24] sm:$0xf]
      %v1401 = vld [vmem:[%s1390 + $0x28] sm:$0xf]
      %v1402 = vld [vmem:[%s1390 + $0x2c] sm:$0xf]
      %v1403 = vld [vmem:[%s1390 + $0x30] sm:$0xf]
      %v1404 = vld [vmem:[%s1390 + $0x34] sm:$0xf]
      %v1405 = vld [vmem:[%s1390 + $0x38] sm:$0xf]
      %v1406 = vld [vmem:[%s1390 + $0x3c] sm:$0xf]
      %s1407 = scalar_lea.vmem %s6, 2
      %v1408 = vld [vmem:[%s1407] sm:$0x1]
      %v1410 = vperm.slane %v1408, 0
      %v1428 = vunpack.c.l.b16 %v1391
      %v1429 = vunpack.c.l.b16 %v1392
      %v1430 = vunpack.c.l.b16 %v1393
      %v1431 = vunpack.c.l.b16 %v1394
      %v1432 = vunpack.c.l.b16 %v1395
      %v1433 = vunpack.c.l.b16 %v1396
      %v1434 = vunpack.c.l.b16 %v1397
      %v1435 = vunpack.c.l.b16 %v1398
      %v1436 = vunpack.c.l.b16 %v1399
      %v1437 = vunpack.c.l.b16 %v1400
      %v1438 = vunpack.c.l.b16 %v1401
      %v1439 = vunpack.c.l.b16 %v1402
      %v1440 = vunpack.c.l.b16 %v1403
      %v1441 = vunpack.c.l.b16 %v1404
      %v1442 = vunpack.c.l.b16 %v1405
      %v1443 = vunpack.c.l.b16 %v1406
      %v1444 = vpack.c.b16 %v1429, %v1428
      %v1445 = vpack.c.b16 %v1431, %v1430
      %v1446 = vpack.c.b16 %v1433, %v1432
      %v1447 = vpack.c.b16 %v1435, %v1434
      %v1448 = vpack.c.b16 %v1437, %v1436
      %v1449 = vpack.c.b16 %v1439, %v1438
      %v1450 = vpack.c.b16 %v1441, %v1440
      %v1451 = vpack.c.b16 %v1443, %v1442
      %1460 = vmatpush.bf16.msra.mxu0 %v1451
      %1461 = vmatpush.bf16.msra.mxu0 %v1450
      %1462 = vmatpush.bf16.msra.mxu0 %v1449
      %1463 = vmatpush.bf16.msra.mxu0 %v1448
      %1464 = vmatpush.bf16.msra.mxu0 %v1447
      %1465 = vmatpush.bf16.msra.mxu0 %v1446
      %1466 = vmatpush.bf16.msra.mxu0 %v1445
      %1467 = vmatpush.bf16.msra.mxu0 %v1444
      %1468 = vmatmul.bf16.gmra.mxu0 %v546
      %v1469 = vpop.f32.mrf.mxu0
      %v1470 = vadd.f32 %v1410, %v1469
      %v1471 = vpop.f32.mrf.mxu0
      %1472 = vdwg.mxu0
      %v1473 = vpack.c.bf16 %v1304, %v1304
      %v1474 = vpack.c.bf16 %v1387, %v1387
      %v1476 = vsel %vm797, %v1473, 0
      %v1479 = vsel %vm797, %v1474, 0
      %1481 = vmatpush.bf16.xpose.msra.mxu0 0
      %1482 = vmatpush.bf16.xpose.msra.mxu0 0
      %1483 = vmatpush.bf16.xpose.msra.mxu0 0
      %1484 = vmatpush.bf16.xpose.msra.mxu0 0
      %1485 = vmatpush.bf16.xpose.msra.mxu0 0
      %1486 = vmatpush.bf16.xpose.msra.mxu0 0
      %1487 = vmatpush.bf16.xpose.msra.mxu0 0
      %1488 = vmatpush.bf16.xpose.msra.mxu0 %v1479
      %1489 = vmatmul.bf16.gmra.mxu0 %v1476
      %v1490 = vpop.f32.mrf.mxu0
      %v1491 = vadd.f32 0.0, %v1490
      %v1492 = vpop.f32.mrf.mxu0
      %1493 = vdwg.mxu0
      %v1494 = vmul.f32 %v1491, 0.17677669
      %v1495 = vsel %vm818, %v1494, -inf
      %1496 = vmax.xlane.f32.xlu0 %v1495
      %v1497 = vpop.xlane.xlu0 %1496
      %v1498 = vsub.f32 %v1494, %v1497
      %v1499 = vmul.f32 %v1498, 1.442695
      %v1500 = vpow.pop %v1499
      %v1501 = vsel %vm818, %v1500, 0.0
      %1502 = vadd.xlane.f32.xlu0 %v1501
      %v1503 = vpop.xlane.xlu0 %1502
      %v1504 = vrcp.pop %v1503
      %v1505 = vmul.f32 %v1500, %v1504
      %v1506 = vpack.c.bf16 %v1505, %v1505
      %v1507 = vpack.c.bf16 %v1470, %v1470
      %v1509 = vsel %vm818, %v1506, 0
      %v1512 = vsel %vm835, %v1507, 0
      %1514 = vmatpush.bf16.msra.mxu0 0
      %1515 = vmatpush.bf16.msra.mxu0 0
      %1516 = vmatpush.bf16.msra.mxu0 0
      %1517 = vmatpush.bf16.msra.mxu0 0
      %1518 = vmatpush.bf16.msra.mxu0 0
      %1519 = vmatpush.bf16.msra.mxu0 0
      %1520 = vmatpush.bf16.msra.mxu0 0
      %1521 = vmatpush.bf16.msra.mxu0 %v1512
      %1522 = vmatmul.bf16.gmra.mxu0 %v1509
      %v1523 = vpop.f32.mrf.mxu0
      %v1524 = vadd.f32 0.0, %v1523
      %v1525 = vpop.f32.mrf.mxu0
      %1526 = vdwg.mxu0
      %s1527 = scalar_lea.vmem %s7, 32
      %v1528 = vld [vmem:[%s1527] sm:$0xf]
      %v1529 = vld [vmem:[%s1527 + $0x4] sm:$0xf]
      %v1530 = vld [vmem:[%s1527 + $0x8] sm:$0xf]
      %v1531 = vld [vmem:[%s1527 + $0xc] sm:$0xf]
      %v1532 = vpack.c.bf16 %v1524, %v1524
      %v1537 = vunpack.c.l.b16 %v1528
      %v1538 = vunpack.c.l.b16 %v1529
      %v1539 = vunpack.c.l.b16 %v1530
      %v1540 = vunpack.c.l.b16 %v1531
      %v1541 = vpack.c.b16 %v1538, %v1537
      %v1542 = vpack.c.b16 %v1540, %v1539
      %v1546 = vsel %vm797, %v1532, 0
      %1548 = vmatpush.bf16.msra.mxu0 0
      %1549 = vmatpush.bf16.msra.mxu0 0
      %1550 = vmatpush.bf16.msra.mxu0 0
      %1551 = vmatpush.bf16.msra.mxu0 0
      %1552 = vmatpush.bf16.msra.mxu0 0
      %1553 = vmatpush.bf16.msra.mxu0 0
      %1554 = vmatpush.bf16.msra.mxu0 %v1542
      %1555 = vmatpush.bf16.msra.mxu0 %v1541
      %1556 = vmatmul.bf16.gmra.mxu0 %v1546
      %v1557 = vpop.f32.mrf.mxu0
      %v1558 = vadd.f32 0.0, %v1557
      %v1559 = vpop.f32.mrf.mxu0
      %1560 = vdwg.mxu0
      %v1561 = vadd.f32 %v1223, %v1558
      %s1562 = scalar_lea.vmem %s1, 192
      %v1563 = vld [vmem:[%s1562] sm:$0xf]
      %v1564 = vld [vmem:[%s1562 + $0x4] sm:$0xf]
      %v1565 = vld [vmem:[%s1562 + $0x8] sm:$0xf]
      %v1566 = vld [vmem:[%s1562 + $0xc] sm:$0xf]
      %v1567 = vld [vmem:[%s1562 + $0x10] sm:$0xf]
      %v1568 = vld [vmem:[%s1562 + $0x14] sm:$0xf]
      %v1569 = vld [vmem:[%s1562 + $0x18] sm:$0xf]
      %v1570 = vld [vmem:[%s1562 + $0x1c] sm:$0xf]
      %v1571 = vld [vmem:[%s1562 + $0x20] sm:$0xf]
      %v1572 = vld [vmem:[%s1562 + $0x24] sm:$0xf]
      %v1573 = vld [vmem:[%s1562 + $0x28] sm:$0xf]
      %v1574 = vld [vmem:[%s1562 + $0x2c] sm:$0xf]
      %v1575 = vld [vmem:[%s1562 + $0x30] sm:$0xf]
      %v1576 = vld [vmem:[%s1562 + $0x34] sm:$0xf]
      %v1577 = vld [vmem:[%s1562 + $0x38] sm:$0xf]
      %v1578 = vld [vmem:[%s1562 + $0x3c] sm:$0xf]
      %s1579 = scalar_lea.vmem %s4, 3
      %v1580 = vld [vmem:[%s1579] sm:$0x1]
      %v1582 = vperm.slane %v1580, 0
      %v1600 = vunpack.c.l.b16 %v1563
      %v1601 = vunpack.c.l.b16 %v1564
      %v1602 = vunpack.c.l.b16 %v1565
      %v1603 = vunpack.c.l.b16 %v1566
      %v1604 = vunpack.c.l.b16 %v1567
      %v1605 = vunpack.c.l.b16 %v1568
      %v1606 = vunpack.c.l.b16 %v1569
      %v1607 = vunpack.c.l.b16 %v1570
      %v1608 = vunpack.c.l.b16 %v1571
      %v1609 = vunpack.c.l.b16 %v1572
      %v1610 = vunpack.c.l.b16 %v1573
      %v1611 = vunpack.c.l.b16 %v1574
      %v1612 = vunpack.c.l.b16 %v1575
      %v1613 = vunpack.c.l.b16 %v1576
      %v1614 = vunpack.c.l.b16 %v1577
      %v1615 = vunpack.c.l.b16 %v1578
      %v1616 = vpack.c.b16 %v1601, %v1600
      %v1617 = vpack.c.b16 %v1603, %v1602
      %v1618 = vpack.c.b16 %v1605, %v1604
      %v1619 = vpack.c.b16 %v1607, %v1606
      %v1620 = vpack.c.b16 %v1609, %v1608
      %v1621 = vpack.c.b16 %v1611, %v1610
      %v1622 = vpack.c.b16 %v1613, %v1612
      %v1623 = vpack.c.b16 %v1615, %v1614
      %1632 = vmatpush.bf16.msra.mxu0 %v1623
      %1633 = vmatpush.bf16.msra.mxu0 %v1622
      %1634 = vmatpush.bf16.msra.mxu0 %v1621
      %1635 = vmatpush.bf16.msra.mxu0 %v1620
      %1636 = vmatpush.bf16.msra.mxu0 %v1619
      %1637 = vmatpush.bf16.msra.mxu0 %v1618
      %1638 = vmatpush.bf16.msra.mxu0 %v1617
      %1639 = vmatpush.bf16.msra.mxu0 %v1616
      %1640 = vmatmul.bf16.gmra.mxu0 %v546
      %v1641 = vpop.f32.mrf.mxu0
      %v1642 = vadd.f32 %v1582, %v1641
      %v1643 = vpop.f32.mrf.mxu0
      %1644 = vdwg.mxu0
      %s1645 = scalar_lea.vmem %s2, 192
      %v1646 = vld [vmem:[%s1645] sm:$0xf]
      %v1647 = vld [vmem:[%s1645 + $0x4] sm:$0xf]
      %v1648 = vld [vmem:[%s1645 + $0x8] sm:$0xf]
      %v1649 = vld [vmem:[%s1645 + $0xc] sm:$0xf]
      %v1650 = vld [vmem:[%s1645 + $0x10] sm:$0xf]
      %v1651 = vld [vmem:[%s1645 + $0x14] sm:$0xf]
      %v1652 = vld [vmem:[%s1645 + $0x18] sm:$0xf]
      %v1653 = vld [vmem:[%s1645 + $0x1c] sm:$0xf]
      %v1654 = vld [vmem:[%s1645 + $0x20] sm:$0xf]
      %v1655 = vld [vmem:[%s1645 + $0x24] sm:$0xf]
      %v1656 = vld [vmem:[%s1645 + $0x28] sm:$0xf]
      %v1657 = vld [vmem:[%s1645 + $0x2c] sm:$0xf]
      %v1658 = vld [vmem:[%s1645 + $0x30] sm:$0xf]
      %v1659 = vld [vmem:[%s1645 + $0x34] sm:$0xf]
      %v1660 = vld [vmem:[%s1645 + $0x38] sm:$0xf]
      %v1661 = vld [vmem:[%s1645 + $0x3c] sm:$0xf]
      %s1662 = scalar_lea.vmem %s5, 3
      %v1663 = vld [vmem:[%s1662] sm:$0x1]
      %v1665 = vperm.slane %v1663, 0
      %v1683 = vunpack.c.l.b16 %v1646
      %v1684 = vunpack.c.l.b16 %v1647
      %v1685 = vunpack.c.l.b16 %v1648
      %v1686 = vunpack.c.l.b16 %v1649
      %v1687 = vunpack.c.l.b16 %v1650
      %v1688 = vunpack.c.l.b16 %v1651
      %v1689 = vunpack.c.l.b16 %v1652
      %v1690 = vunpack.c.l.b16 %v1653
      %v1691 = vunpack.c.l.b16 %v1654
      %v1692 = vunpack.c.l.b16 %v1655
      %v1693 = vunpack.c.l.b16 %v1656
      %v1694 = vunpack.c.l.b16 %v1657
      %v1695 = vunpack.c.l.b16 %v1658
      %v1696 = vunpack.c.l.b16 %v1659
      %v1697 = vunpack.c.l.b16 %v1660
      %v1698 = vunpack.c.l.b16 %v1661
      %v1699 = vpack.c.b16 %v1684, %v1683
      %v1700 = vpack.c.b16 %v1686, %v1685
      %v1701 = vpack.c.b16 %v1688, %v1687
      %v1702 = vpack.c.b16 %v1690, %v1689
      %v1703 = vpack.c.b16 %v1692, %v1691
      %v1704 = vpack.c.b16 %v1694, %v1693
      %v1705 = vpack.c.b16 %v1696, %v1695
      %v1706 = vpack.c.b16 %v1698, %v1697
      %1715 = vmatpush.bf16.msra.mxu0 %v1706
      %1716 = vmatpush.bf16.msra.mxu0 %v1705
      %1717 = vmatpush.bf16.msra.mxu0 %v1704
      %1718 = vmatpush.bf16.msra.mxu0 %v1703
      %1719 = vmatpush.bf16.msra.mxu0 %v1702
      %1720 = vmatpush.bf16.msra.mxu0 %v1701
      %1721 = vmatpush.bf16.msra.mxu0 %v1700
      %1722 = vmatpush.bf16.msra.mxu0 %v1699
      %1723 = vmatmul.bf16.gmra.mxu0 %v546
      %v1724 = vpop.f32.mrf.mxu0
      %v1725 = vadd.f32 %v1665, %v1724
      %v1726 = vpop.f32.mrf.mxu0
      %1727 = vdwg.mxu0
      %s1728 = scalar_lea.vmem %s3, 192
      %v1729 = vld [vmem:[%s1728] sm:$0xf]
      %v1730 = vld [vmem:[%s1728 + $0x4] sm:$0xf]
      %v1731 = vld [vmem:[%s1728 + $0x8] sm:$0xf]
      %v1732 = vld [vmem:[%s1728 + $0xc] sm:$0xf]
      %v1733 = vld [vmem:[%s1728 + $0x10] sm:$0xf]
      %v1734 = vld [vmem:[%s1728 + $0x14] sm:$0xf]
      %v1735 = vld [vmem:[%s1728 + $0x18] sm:$0xf]
      %v1736 = vld [vmem:[%s1728 + $0x1c] sm:$0xf]
      %v1737 = vld [vmem:[%s1728 + $0x20] sm:$0xf]
      %v1738 = vld [vmem:[%s1728 + $0x24] sm:$0xf]
      %v1739 = vld [vmem:[%s1728 + $0x28] sm:$0xf]
      %v1740 = vld [vmem:[%s1728 + $0x2c] sm:$0xf]
      %v1741 = vld [vmem:[%s1728 + $0x30] sm:$0xf]
      %v1742 = vld [vmem:[%s1728 + $0x34] sm:$0xf]
      %v1743 = vld [vmem:[%s1728 + $0x38] sm:$0xf]
      %v1744 = vld [vmem:[%s1728 + $0x3c] sm:$0xf]
      %s1745 = scalar_lea.vmem %s6, 3
      %v1746 = vld [vmem:[%s1745] sm:$0x1]
      %v1748 = vperm.slane %v1746, 0
      %v1766 = vunpack.c.l.b16 %v1729
      %v1767 = vunpack.c.l.b16 %v1730
      %v1768 = vunpack.c.l.b16 %v1731
      %v1769 = vunpack.c.l.b16 %v1732
      %v1770 = vunpack.c.l.b16 %v1733
      %v1771 = vunpack.c.l.b16 %v1734
      %v1772 = vunpack.c.l.b16 %v1735
      %v1773 = vunpack.c.l.b16 %v1736
      %v1774 = vunpack.c.l.b16 %v1737
      %v1775 = vunpack.c.l.b16 %v1738
      %v1776 = vunpack.c.l.b16 %v1739
      %v1777 = vunpack.c.l.b16 %v1740
      %v1778 = vunpack.c.l.b16 %v1741
      %v1779 = vunpack.c.l.b16 %v1742
      %v1780 = vunpack.c.l.b16 %v1743
      %v1781 = vunpack.c.l.b16 %v1744
      %v1782 = vpack.c.b16 %v1767, %v1766
      %v1783 = vpack.c.b16 %v1769, %v1768
      %v1784 = vpack.c.b16 %v1771, %v1770
      %v1785 = vpack.c.b16 %v1773, %v1772
      %v1786 = vpack.c.b16 %v1775, %v1774
      %v1787 = vpack.c.b16 %v1777, %v1776
      %v1788 = vpack.c.b16 %v1779, %v1778
      %v1789 = vpack.c.b16 %v1781, %v1780
      %1798 = vmatpush.bf16.msra.mxu0 %v1789
      %1799 = vmatpush.bf16.msra.mxu0 %v1788
      %1800 = vmatpush.bf16.msra.mxu0 %v1787
      %1801 = vmatpush.bf16.msra.mxu0 %v1786
      %1802 = vmatpush.bf16.msra.mxu0 %v1785
      %1803 = vmatpush.bf16.msra.mxu0 %v1784
      %1804 = vmatpush.bf16.msra.mxu0 %v1783
      %1805 = vmatpush.bf16.msra.mxu0 %v1782
      %1806 = vmatmul.bf16.gmra.mxu0 %v546
      %v1807 = vpop.f32.mrf.mxu0
      %v1808 = vadd.f32 %v1748, %v1807
      %v1809 = vpop.f32.mrf.mxu0
      %1810 = vdwg.mxu0
      %v1811 = vpack.c.bf16 %v1642, %v1642
      %v1812 = vpack.c.bf16 %v1725, %v1725
      %v1814 = vsel %vm797, %v1811, 0
      %v1817 = vsel %vm797, %v1812, 0
      %1819 = vmatpush.bf16.xpose.msra.mxu0 0
      %1820 = vmatpush.bf16.xpose.msra.mxu0 0
      %1821 = vmatpush.bf16.xpose.msra.mxu0 0
      %1822 = vmatpush.bf16.xpose.msra.mxu0 0
      %1823 = vmatpush.bf16.xpose.msra.mxu0 0
      %1824 = vmatpush.bf16.xpose.msra.mxu0 0
      %1825 = vmatpush.bf16.xpose.msra.mxu0 0
      %1826 = vmatpush.bf16.xpose.msra.mxu0 %v1817
      %1827 = vmatmul.bf16.gmra.mxu0 %v1814
      %v1828 = vpop.f32.mrf.mxu0
      %v1829 = vadd.f32 0.0, %v1828
      %v1830 = vpop.f32.mrf.mxu0
      %1831 = vdwg.mxu0
      %v1832 = vmul.f32 %v1829, 0.17677669
      %v1833 = vsel %vm818, %v1832, -inf
      %1834 = vmax.xlane.f32.xlu0 %v1833
      %v1835 = vpop.xlane.xlu0 %1834
      %v1836 = vsub.f32 %v1832, %v1835
      %v1837 = vmul.f32 %v1836, 1.442695
      %v1838 = vpow.pop %v1837
      %v1839 = vsel %vm818, %v1838, 0.0
      %1840 = vadd.xlane.f32.xlu0 %v1839
      %v1841 = vpop.xlane.xlu0 %1840
      %v1842 = vrcp.pop %v1841
      %v1843 = vmul.f32 %v1838, %v1842
      %v1844 = vpack.c.bf16 %v1843, %v1843
      %v1845 = vpack.c.bf16 %v1808, %v1808
      %v1847 = vsel %vm818, %v1844, 0
      %v1850 = vsel %vm835, %v1845, 0
      %1852 = vmatpush.bf16.msra.mxu0 0
      %1853 = vmatpush.bf16.msra.mxu0 0
      %1854 = vmatpush.bf16.msra.mxu0 0
      %1855 = vmatpush.bf16.msra.mxu0 0
      %1856 = vmatpush.bf16.msra.mxu0 0
      %1857 = vmatpush.bf16.msra.mxu0 0
      %1858 = vmatpush.bf16.msra.mxu0 0
      %1859 = vmatpush.bf16.msra.mxu0 %v1850
      %1860 = vmatmul.bf16.gmra.mxu0 %v1847
      %v1861 = vpop.f32.mrf.mxu0
      %v1862 = vadd.f32 0.0, %v1861
      %v1863 = vpop.f32.mrf.mxu0
      %1864 = vdwg.mxu0
      %s1865 = scalar_lea.vmem %s7, 48
      %v1866 = vld [vmem:[%s1865] sm:$0xf]
      %v1867 = vld [vmem:[%s1865 + $0x4] sm:$0xf]
      %v1868 = vld [vmem:[%s1865 + $0x8] sm:$0xf]
      %v1869 = vld [vmem:[%s1865 + $0xc] sm:$0xf]
      %v1870 = vpack.c.bf16 %v1862, %v1862
      %v1875 = vunpack.c.l.b16 %v1866
      %v1876 = vunpack.c.l.b16 %v1867
      %v1877 = vunpack.c.l.b16 %v1868
      %v1878 = vunpack.c.l.b16 %v1869
      %v1879 = vpack.c.b16 %v1876, %v1875
      %v1880 = vpack.c.b16 %v1878, %v1877
      %v1884 = vsel %vm797, %v1870, 0
      %1886 = vmatpush.bf16.msra.mxu0 0
      %1887 = vmatpush.bf16.msra.mxu0 0
      %1888 = vmatpush.bf16.msra.mxu0 0
      %1889 = vmatpush.bf16.msra.mxu0 0
      %1890 = vmatpush.bf16.msra.mxu0 0
      %1891 = vmatpush.bf16.msra.mxu0 0
      %1892 = vmatpush.bf16.msra.mxu0 %v1880
      %1893 = vmatpush.bf16.msra.mxu0 %v1879
      %1894 = vmatmul.bf16.gmra.mxu0 %v1884
      %v1895 = vpop.f32.mrf.mxu0
      %v1896 = vadd.f32 0.0, %v1895
      %v1897 = vpop.f32.mrf.mxu0
      %1898 = vdwg.mxu0
      %v1899 = vadd.f32 %v1561, %v1896
      %v1900 = vadd.f32 %v545, %v1899
      %v1901 = vld [vmem:[%s9] sm:$0x1]
      %v1902 = vld [vmem:[%s10] sm:$0x1]
      %1903 = vadd.xlane.f32.xlu0 %v1900
      %v1904 = vpop.xlane.xlu0 %1903
      %v1905 = vrcp.pop 128.0
      %v1906 = vmul.f32 128.0, %v1905
      %v1907 = vsub.f32 1.0, %v1906
      %v1908 = vmul.f32 %v1905, %v1907
      %v1909 = vadd.f32 %v1905, %v1908
      %vm1910 = vweird.f32 %v1905
      %v1911 = vsel %vm1910, %v1905, %v1909
      %v1912 = vmul.f32 %v1904, %v1911
      %v1913 = vsub.f32 %v1900, %v1912
      %v1914 = vmul.f32 %v1913, %v1913
      %1915 = vadd.xlane.f32.xlu0 %v1914
      %v1916 = vpop.xlane.xlu0 %1915
      %v1917 = vmul.f32 %v1916, %v1911
      %v1918 = vadd.f32 %v1917, 1e-05
      %v1919 = vrsqrt.pop %v1918
      %v1920 = vmul.f32 %v1919, %v1918
      %v1921 = vmul.f32 %v1920, %v1919
      %v1922 = vmul.f32 0.5, %v1921
      %v1923 = vsub.f32 1.5, %v1922
      %v1924 = vmul.f32 %v1919, %v1923
      %vm1925 = vweird.f32 %v1918
      %vm1926 = vweird.f32 %v1919
      %vm1927 = vmor %vm1925, %vm1926
      %v1928 = vsel %vm1927, %v1919, %v1924
      %v1929 = vmul.f32 %v1913, %v1928
      %v1931 = vperm.slane %v1901, 0
      %v1933 = vmul.f32 %v1929, %v1931
      %v1935 = vperm.slane %v1902, 0
      %v1937 = vadd.f32 %v1933, %v1935
      %v1938 = vld [vmem:[%s11] sm:$0xf]
      %v1939 = vld [vmem:[%s11 + $0x4] sm:$0xf]
      %v1940 = vld [vmem:[%s11 + $0x8] sm:$0xf]
      %v1941 = vld [vmem:[%s11 + $0xc] sm:$0xf]
      %v1942 = vld [vmem:[%s11 + $0x10] sm:$0xf]
      %v1943 = vld [vmem:[%s11 + $0x14] sm:$0xf]
      %v1944 = vld [vmem:[%s11 + $0x18] sm:$0xf]
      %v1945 = vld [vmem:[%s11 + $0x1c] sm:$0xf]
      %v1946 = vld [vmem:[%s11 + $0x20] sm:$0xf]
      %v1947 = vld [vmem:[%s11 + $0x24] sm:$0xf]
      %v1948 = vld [vmem:[%s11 + $0x28] sm:$0xf]
      %v1949 = vld [vmem:[%s11 + $0x2c] sm:$0xf]
      %v1950 = vld [vmem:[%s11 + $0x30] sm:$0xf]
      %v1951 = vld [vmem:[%s11 + $0x34] sm:$0xf]
      %v1952 = vld [vmem:[%s11 + $0x38] sm:$0xf]
      %v1953 = vld [vmem:[%s11 + $0x3c] sm:$0xf]
      %v1954 = vpack.c.bf16 %v1937, %v1937
      %v1955 = vld [vmem:[%s12] sm:$0x1]
      %v1957 = vperm.slane %v1955, 0
      %v1975 = vunpack.c.l.b16 %v1938
      %v1976 = vunpack.c.l.b16 %v1939
      %v1977 = vunpack.c.l.b16 %v1940
      %v1978 = vunpack.c.l.b16 %v1941
      %v1979 = vunpack.c.l.b16 %v1942
      %v1980 = vunpack.c.l.b16 %v1943
      %v1981 = vunpack.c.l.b16 %v1944
      %v1982 = vunpack.c.l.b16 %v1945
      %v1983 = vunpack.c.l.b16 %v1946
      %v1984 = vunpack.c.l.b16 %v1947
      %v1985 = vunpack.c.l.b16 %v1948
      %v1986 = vunpack.c.l.b16 %v1949
      %v1987 = vunpack.c.l.b16 %v1950
      %v1988 = vunpack.c.l.b16 %v1951
      %v1989 = vunpack.c.l.b16 %v1952
      %v1990 = vunpack.c.l.b16 %v1953
      %v1991 = vpack.c.b16 %v1976, %v1975
      %v1992 = vpack.c.b16 %v1978, %v1977
      %v1993 = vpack.c.b16 %v1980, %v1979
      %v1994 = vpack.c.b16 %v1982, %v1981
      %v1995 = vpack.c.b16 %v1984, %v1983
      %v1996 = vpack.c.b16 %v1986, %v1985
      %v1997 = vpack.c.b16 %v1988, %v1987
      %v1998 = vpack.c.b16 %v1990, %v1989
      %2007 = vmatpush.bf16.msra.mxu0 %v1998
      %2008 = vmatpush.bf16.msra.mxu0 %v1997
      %2009 = vmatpush.bf16.msra.mxu0 %v1996
      %2010 = vmatpush.bf16.msra.mxu0 %v1995
      %2011 = vmatpush.bf16.msra.mxu0 %v1994
      %2012 = vmatpush.bf16.msra.mxu0 %v1993
      %2013 = vmatpush.bf16.msra.mxu0 %v1992
      %2014 = vmatpush.bf16.msra.mxu0 %v1991
      %2015 = vmatmul.bf16.gmra.mxu0 %v1954
      %v2016 = vpop.f32.mrf.mxu0
      %v2017 = vadd.f32 %v1957, %v2016
      %v2018 = vpop.f32.mrf.mxu0
      %2019 = vdwg.mxu0
      %v2020 = vmul.f32 %v2017, 0.5
      %v2021 = vmul.f32 %v2017, 0.70710677
      %v2022 = vmul.f32 %v2021, %v2021
      %v2023 = vmin.f32 16.0, %v2022
      %v2024 = vmul.f32 %v2023, 2.1237322e-06
      %v2025 = vadd.f32 %v2024, 0.00028619796
      %v2026 = vmul.f32 %v2023, %v2025
      %v2027 = vadd.f32 %v2026, 0.0036580483
      %v2028 = vmul.f32 %v2023, %v2027
      %v2029 = vadd.f32 %v2028, 0.05243302
      %v2030 = vmul.f32 %v2023, %v2029
      %v2031 = vadd.f32 %v2030, 0.18741608
      %v2032 = vmul.f32 %v2023, %v2031
      %v2033 = vadd.f32 %v2032, 1.1283791
      %v2034 = vmul.f32 %v2021, %v2033
      %v2035 = vmul.f32 %v2023, 3.8918573e-05
      %v2036 = vadd.f32 %v2035, 0.001143296
      %v2037 = vmul.f32 %v2023, %v2036
      %v2038 = vadd.f32 %v2037, 0.014752088
      %v2039 = vmul.f32 %v2023, %v2038
      %v2040 = vadd.f32 %v2039, 0.112945676
      %v2041 = vmul.f32 %v2023, %v2040
      %v2042 = vadd.f32 %v2041, 0.4994258
      %v2043 = vmul.f32 %v2023, %v2042
      %v2044 = vadd.f32 %v2043, 1.0
      %v2045 = vrcp.pop %v2044
      %v2046 = vmul.f32 %v2044, %v2045
      %v2047 = vsub.f32 1.0, %v2046
      %v2048 = vmul.f32 %v2045, %v2047
      %v2049 = vadd.f32 %v2045, %v2048
      %vm2050 = vweird.f32 %v2044
      %vm2051 = vweird.f32 %v2045
      %vm2052 = vmor %vm2050, %vm2051
      %v2053 = vsel %vm2052, %v2045, %v2049
      %v2054 = vand.u32 2147483647, %v2044
      %vm2055 = vcmp.eq.f32.partialorder %v2054, 8.507059e+37
      %v2056 = vand.u32 %v2044, 2147483648
      %v2057 = vor.u32 1.1754944e-38, %v2056
      %v2058 = vsel %vm2055, %v2057, %v2053
      %v2059 = vmul.f32 %v2034, %v2058
      %v2060 = vmin.f32 %v2059, 1.0
      %v2061 = vmax.f32 %v2060, -1.0
      %v2062 = vadd.f32 %v2061, 1.0
      %v2063 = vmul.f32 %v2020, %v2062
      %v2064 = vld [vmem:[%s13] sm:$0xf]
      %v2065 = vld [vmem:[%s13 + $0x4] sm:$0xf]
      %v2066 = vld [vmem:[%s13 + $0x8] sm:$0xf]
      %v2067 = vld [vmem:[%s13 + $0xc] sm:$0xf]
      %v2068 = vld [vmem:[%s13 + $0x10] sm:$0xf]
      %v2069 = vld [vmem:[%s13 + $0x14] sm:$0xf]
      %v2070 = vld [vmem:[%s13 + $0x18] sm:$0xf]
      %v2071 = vld [vmem:[%s13 + $0x1c] sm:$0xf]
      %v2072 = vpack.c.bf16 %v2063, %v2063
      %v2073 = vld [vmem:[%s14] sm:$0x1]
      %v2075 = vperm.slane %v2073, 0
      %v2085 = vunpack.c.l.b16 %v2064
      %v2086 = vunpack.c.l.b16 %v2065
      %v2087 = vunpack.c.l.b16 %v2066
      %v2088 = vunpack.c.l.b16 %v2067
      %v2089 = vunpack.c.l.b16 %v2068
      %v2090 = vunpack.c.l.b16 %v2069
      %v2091 = vunpack.c.l.b16 %v2070
      %v2092 = vunpack.c.l.b16 %v2071
      %v2093 = vpack.c.b16 %v2086, %v2085
      %v2094 = vpack.c.b16 %v2088, %v2087
      %v2095 = vpack.c.b16 %v2090, %v2089
      %v2096 = vpack.c.b16 %v2092, %v2091
      %vm2101 = vcmask 523264
      %v2103 = vsel %vm2101, %v2072, 0
      %2105 = vmatpush.bf16.msra.mxu0 0
      %2106 = vmatpush.bf16.msra.mxu0 0
      %2107 = vmatpush.bf16.msra.mxu0 0
      %2108 = vmatpush.bf16.msra.mxu0 0
      %2109 = vmatpush.bf16.msra.mxu0 %v2096
      %2110 = vmatpush.bf16.msra.mxu0 %v2095
      %2111 = vmatpush.bf16.msra.mxu0 %v2094
      %2112 = vmatpush.bf16.msra.mxu0 %v2093
      %2113 = vmatmul.bf16.gmra.mxu0 %v2103
      %v2114 = vpop.f32.mrf.mxu0
      %v2115 = vadd.f32 %v2075, %v2114
      %v2116 = vpop.f32.mrf.mxu0
      %2117 = vdwg.mxu0
      %v2118 = vadd.f32 %v1937, %v2115
      %v2119 = vld [vmem:[%s15] sm:$0x1]
      %v2120 = vld [vmem:[%s16] sm:$0x1]
      %2121 = vadd.xlane.f32.xlu0 %v2118
      %v2122 = vpop.xlane.xlu0 %2121
      %v2123 = vmul.f32 %v2122, %v1911
      %v2124 = vsub.f32 %v2118, %v2123
      %v2125 = vmul.f32 %v2124, %v2124
      %2126 = vadd.xlane.f32.xlu0 %v2125
      %v2127 = vpop.xlane.xlu0 %2126
      %v2128 = vmul.f32 %v2127, %v1911
      %v2129 = vadd.f32 %v2128, 1e-05
      %v2130 = vrsqrt.pop %v2129
      %v2131 = vmul.f32 %v2130, %v2129
      %v2132 = vmul.f32 %v2131, %v2130
      %v2133 = vmul.f32 0.5, %v2132
      %v2134 = vsub.f32 1.5, %v2133
      %v2135 = vmul.f32 %v2130, %v2134
      %vm2136 = vweird.f32 %v2129
      %vm2137 = vweird.f32 %v2130
      %vm2138 = vmor %vm2136, %vm2137
      %v2139 = vsel %vm2138, %v2130, %v2135
      %v2140 = vmul.f32 %v2124, %v2139
      %v2142 = vperm.slane %v2119, 0
      %v2144 = vmul.f32 %v2140, %v2142
      %v2146 = vperm.slane %v2120, 0
      %v2148 = vadd.f32 %v2144, %v2146
      %2149 = vst [vmem:[%s543] sm:$0xff] %v2148
      %p2150 = scmp.lt.s32.totalorder %s28, 1
      %s2151 = scalar_select %p2150, %s28, 1
      %s2152 = smul.addr %s2151, 8
      %s2153 = scalar_lea.vmem %s17, %s2152
      // Predicated region
      $region89: #{funky_forward.7} parent=87 // pred_check
        %p2154 = pneg %p408
      $region90: #{funky_forward.7} parent=87 // pred_check_branch
        %2156 = sbr.rel (%p2154) target = $region92
      $region91: #{funky_forward.7} parent=87 // pred_region
        _
      $region92: #{funky_forward.7} parent=87 // pred_fallthru
        _
    $region88: #{funky_forward.7} parent=5 // pred_fallthru
      _
    %p2157 = scmp.le.s32.totalorder 2, %s23
    // Predicated region
    $region93: #{funky_forward.7} parent=5 // pred_check
      %p2158 = pneg %p2157
    $region94: #{funky_forward.7} parent=5 // pred_check_branch
      %2160 = sbr.rel (%p2158) target = $region96
    $region95: #{funky_forward.7} parent=5 // pred_region
      %s2161 = ssub.s32 %s23, 2
      // Predicated region
      $region97: #{funky_forward.7} parent=95 // pred_check
        %p2162 = pneg %p414
      $region98: #{funky_forward.7} parent=95 // pred_check_branch
        %2164 = sbr.rel (%p2162) target = $region100
      $region99: #{funky_forward.7} parent=95 // pred_region
        %p2165 = scmp.lt.s32.totalorder %s29, 1
        %s2166 = scalar_select %p2165, %s29, 1
        %s2167 = smul.addr %s2166, 8
        %s2168 = scalar_lea.vmem %s17, %s2167
      $region100: #{funky_forward.7} parent=95 // pred_fallthru
        _
    $region96: #{funky_forward.7} parent=5 // pred_fallthru
      _
  $region6: #{funky_forward.7} parent=0 // loop_footer
    %s27 = sadd.s32 1, %s23
  $region7: #{funky_forward.7} parent=0 // loop_footer_branch
    %22 = sbr.rel target = $region3
  $region8: #{funky_forward.7} parent=0 // loop_exit
    _

</llo_original>
